<compile_context>
chip_gen: v5e
topology: v5e:2x2
jax: 0.10.0
libtpu: 0.0.40
codegen_flags: <defaults>
</compile_context>

<pallas_src>
import functools

import numpy as np
import jax
import jax.numpy as jnp
from jax.experimental import pallas as pl
from jax.experimental.pallas import tpu as pltpu


_BRANCHES = ((1, 0), (2, 0), (3, 1), (4, 2))   # (dilation, padding) for d1..d4
_BLK = 16                                      # 8-aligned row slot per branch (>= max L = 9)
_NEG = -1e30                                   # additive mask for padded key rows


def _branch_out_size(H, dil, pad):
    return (H + 2 * pad - (2 * dil + 1)) // 2 + 1


# ----------------------------- fused Pallas kernel -----------------------------

def _fused_kernel(x_ref, pk_ref, pv_ref, qw_ref, qb_ref, w_ref, bk_ref, bv_ref,
                  neg_ref, pjw_ref, pjb_ref, o_ref, *, num_heads, scale, num_branches):
    N = x_ref.shape[1]
    C = x_ref.shape[2]
    hd = C // num_heads
    blk = pk_ref.shape[1] // num_branches      # 16 rows per branch slot

    # ---- q projection (fused) ----
    x = x_ref[0]                                                       # (N, C)
    q = jnp.dot(x, qw_ref[...], preferred_element_type=jnp.float32) + qb_ref[...]

    # ---- dilated depthwise + pointwise branches (folded into one matmul each) ----
    k_blocks = []
    v_blocks = []
    for i in range(num_branches):
        w_i = w_ref[i]                                                 # (18C, C)
        pk_i = pk_ref[0, i * blk:(i + 1) * blk, :]                     # (16, 18C) aligned
        pv_i = pv_ref[0, i * blk:(i + 1) * blk, :]
        k_blocks.append(jnp.dot(pk_i, w_i, preferred_element_type=jnp.float32))
        v_blocks.append(jnp.dot(pv_i, w_i, preferred_element_type=jnp.float32))
    k_all = jnp.concatenate(k_blocks, axis=0) + bk_ref[...]            # (Mp, C)
    v_all = jnp.concatenate(v_blocks, axis=0) + bv_ref[...]            # (Mp, C)

    neg = neg_ref[...]                                                 # (1, Mp)

    # ---- multi-head attention (all heads) + fused output projection ----
    # NOTE: relative_position_bias is dead in the reference forward; mask=None path only.
    acc = jnp.zeros((N, C), jnp.float32)
    for h in range(num_heads):
        qh = q[:, h * hd:(h + 1) * hd] * scale                         # (N, hd)
        kh = k_all[:, h * hd:(h + 1) * hd]                             # (Mp, hd)
        vh = v_all[:, h * hd:(h + 1) * hd]
        s = jax.lax.dot_general(qh, kh, (((1,), (1,)), ((), ())),
                                preferred_element_type=jnp.float32)    # (N, Mp)
        s = s + neg
        s = s - jnp.max(s, axis=-1, keepdims=True)
        p = jnp.exp(s)
        p = p * pl.reciprocal(jnp.sum(p, axis=-1, keepdims=True), approx=True)
        oh = jnp.dot(p, vh, preferred_element_type=jnp.float32)        # (N, hd)
        acc = acc + jnp.dot(oh, pjw_ref[h * hd:(h + 1) * hd, :],
                            preferred_element_type=jnp.float32)        # (N, C)
    o_ref[0] = (acc + pjb_ref[...]).astype(o_ref.dtype)


# ----------------------------- glue: operand preparation -----------------------------

def _prepare_kv_operands(x_img, params):
    """im2col for the 4 dilated depthwise convs, with the module's quirky
    (spatial, channel-parity) scramble pre-applied to the rows, plus the folded
    depthwise+pointwise weights.  Pure data layout / weight prep (no activations FLOPs)."""
    B, H, _, C = x_img.shape
    pk_parts, pv_parts, w_parts, bk_parts, bv_parts = [], [], [], [], []
    neg = np.full((1, len(_BRANCHES) * _BLK), _NEG, np.float32)

    for i, (dil, pad) in enumerate(_BRANCHES):
        Ho = _branch_out_size(H, dil, pad)
        L = Ho * Ho
        xp = jnp.pad(x_img, ((0, 0), (pad, pad), (pad, pad), (0, 0)))

        # im2col (tap-major columns) for the 3x3 dilated stride-2 conv
        taps = []
        for kh in range(3):
            for kw in range(3):
                sl = xp[:, kh * dil: kh * dil + 2 * (Ho - 1) + 1: 2,
                        kw * dil: kw * dil + 2 * (Ho - 1) + 1: 2, :]
                taps.append(sl.reshape(B, L, C))
        T = jnp.concatenate(taps, axis=-1)                             # (B, L, 9C)

        # fold depthwise weights into the pointwise conv -> (9C, 2C) matmul weight
        dw = params[f"d{i+1}_w"].reshape(9, C)
        pw = params[f"p{i+1}_w"]                                       # (C, 2C)
        Wf = (dw[:, :, None] * pw[None, :, :]).reshape(9 * C, 2 * C)
        bf = params[f"d{i+1}_b"].reshape(C) @ pw + params[f"p{i+1}_b"].reshape(2 * C)
        w_even, w_odd = Wf[:, 0::2], Wf[:, 1::2]                       # (9C, C) each
        b_even, b_odd = bf[0::2], bf[1::2]
        w_parts.append(jnp.concatenate([w_even, w_odd], axis=0))       # (18C, C)

        # Quirky reshape (B,2C,L)->(B,C,2L)->(B,L,2,nh,hd):
        #   pair l:  k <- (channel parity (2l)//L,   position (2l)%L)
        #            v <- (channel parity (2l+1)//L, position (2l+1)%L)
        pk_idx = np.array([(2 * l) % L for l in range(L)])
        ek = np.array([(2 * l) // L for l in range(L)], np.float32)[None, :, None]
        pv_idx = np.array([(2 * l + 1) % L for l in range(L)])
        ev = np.array([(2 * l + 1) // L for l in range(L)], np.float32)[None, :, None]
        Tk = jnp.take(T, pk_idx, axis=1)
        Tv = jnp.take(T, pv_idx, axis=1)
        # parity selection baked into the (zero-masked) contraction halves
        PK = jnp.concatenate([Tk * (1.0 - ek), Tk * ek], axis=-1)      # (B, L, 18C)
        PV = jnp.concatenate([Tv * (1.0 - ev), Tv * ev], axis=-1)
        pk_parts.append(jnp.pad(PK, ((0, 0), (0, _BLK - L), (0, 0))))
        pv_parts.append(jnp.pad(PV, ((0, 0), (0, _BLK - L), (0, 0))))

        bK = (1.0 - ek[0]) * b_even[None, :] + ek[0] * b_odd[None, :]  # (L, C)
        bV = (1.0 - ev[0]) * b_even[None, :] + ev[0] * b_odd[None, :]
        bk_parts.append(jnp.pad(bK, ((0, _BLK - L), (0, 0))))
        bv_parts.append(jnp.pad(bV, ((0, _BLK - L), (0, 0))))

        neg[0, i * _BLK: i * _BLK + L] = 0.0

    PK = jnp.concatenate(pk_parts, axis=1)                             # (B, Mp, 18C)
    PV = jnp.concatenate(pv_parts, axis=1)
    Wc = jnp.stack(w_parts, axis=0)                                    # (4, 18C, C)
    bK = jnp.concatenate(bk_parts, axis=0)                             # (Mp, C)
    bV = jnp.concatenate(bv_parts, axis=0)
    return PK, PV, Wc, bK, bV, jnp.asarray(neg)


@functools.partial(jax.jit, static_argnums=(2,))
def dilated_window_attention(x, params, num_heads):
    B, N, C = x.shape
    H = int(N ** 0.5)
    hd = C // num_heads
    scale = hd ** (-0.5)
    x_img = x.reshape(B, H, H, C)                                      # NHWC

    PK, PV, Wc, bK, bV, neg = _prepare_kv_operands(x_img, params)
    Mp = PK.shape[1]
    C18 = PK.shape[2]
    nb = len(_BRANCHES)

    kernel = functools.partial(_fused_kernel, num_heads=num_heads, scale=scale,
                               num_branches=nb)
    out = pl.pallas_call(
        kernel,
        out_shape=jax.ShapeDtypeStruct((B, N, C), jnp.float32),
        grid=(B,),
        in_specs=[
            pl.BlockSpec((1, N, C), lambda b: (b, 0, 0)),              # x
            pl.BlockSpec((1, Mp, C18), lambda b: (b, 0, 0)),           # PK (im2col, K-ordered)
            pl.BlockSpec((1, Mp, C18), lambda b: (b, 0, 0)),           # PV (im2col, V-ordered)
            pl.BlockSpec((C, C), lambda b: (0, 0)),                    # q_w
            pl.BlockSpec((1, C), lambda b: (0, 0)),                    # q_b
            pl.BlockSpec((nb, C18, C), lambda b: (0, 0, 0)),           # folded conv weights
            pl.BlockSpec((Mp, C), lambda b: (0, 0)),                   # K bias rows
            pl.BlockSpec((Mp, C), lambda b: (0, 0)),                   # V bias rows
            pl.BlockSpec((1, Mp), lambda b: (0, 0)),                   # additive key mask
            pl.BlockSpec((C, C), lambda b: (0, 0)),                    # proj_w
            pl.BlockSpec((1, C), lambda b: (0, 0)),                    # proj_b
        ],
        out_specs=pl.BlockSpec((1, N, C), lambda b: (b, 0, 0)),
        compiler_params=pltpu.CompilerParams(
            dimension_semantics=("parallel",)),
    )(x, PK, PV,
      params["q_w"], params["q_b"].reshape(1, C),
      Wc, bK, bV, neg,
      params["proj_w"], params["proj_b"].reshape(1, C))
    return out


# ----------------------------- parameters -----------------------------

def init_params(key, dim, num_heads, window_size):
    keys = jax.random.split(key, 21)
    p = {}
    p["q_w"] = jax.random.normal(keys[0], (dim, dim), jnp.float32) * 0.02
    p["q_b"] = jax.random.normal(keys[1], (dim,), jnp.float32) * 0.02
    for i in range(4):
        p[f"d{i+1}_w"] = jax.random.normal(keys[2 + i], (9, 1, dim), jnp.float32) * 0.1
        p[f"d{i+1}_b"] = jax.random.normal(keys[6 + i], (1, dim), jnp.float32) * 0.02
        p[f"p{i+1}_w"] = jax.random.normal(keys[10 + i], (dim, 2 * dim), jnp.float32) * 0.02
        p[f"p{i+1}_b"] = jax.random.normal(keys[14 + i], (1, 2 * dim), jnp.float32) * 0.02
    p["proj_w"] = jax.random.normal(keys[18], (dim, dim), jnp.float32) * 0.02
    p["proj_b"] = jax.random.normal(keys[19], (dim,), jnp.float32) * 0.02
    # parameter exists in the module but is dead in the forward pass
    p["rel_pos_bias_table"] = jax.random.normal(
        keys[20],
        ((2 * window_size[0] - 1) * (2 * window_size[1] - 1), num_heads),
        jnp.float32) * 0.02
    return p


# ----------------------------- pure-JAX reference -----------------------------

def _ref_forward(x, params, num_heads):
    B, N, C = x.shape
    H = W = int(N ** 0.5)
    hd = C // num_heads
    scale = hd ** (-0.5)
    q = (x.reshape(B * N, C) @ params["q_w"] + params["q_b"]).reshape(B, N, num_heads, hd)
    q = jnp.transpose(q, (0, 2, 1, 3)) * scale
    x_nchw = jnp.transpose(x, (0, 2, 1)).reshape(B, C, H, W)
    ks, vs = [], []
    for i, (dil, pad) in enumerate(_BRANCHES):
        w = params[f"d{i+1}_w"].reshape(3, 3, C)
        w_oihw = jnp.transpose(w, (2, 0, 1)).reshape(C, 1, 3, 3)
        d = jax.lax.conv_general_dilated(
            x_nchw, w_oihw, window_strides=(2, 2),
            padding=((pad, pad), (pad, pad)), rhs_dilation=(dil, dil),
            feature_group_count=C, dimension_numbers=("NCHW", "OIHW", "NCHW"))
        d = d + params[f"d{i+1}_b"].reshape(1, C, 1, 1)
        _, _, Ho, Wo = d.shape
        L = Ho * Wo
        d_flat = d.reshape(B, C, L)
        pconv = (jnp.einsum("bcl,co->bol", d_flat, params[f"p{i+1}_w"])
                 + params[f"p{i+1}_b"].reshape(1, 2 * C, 1))           # (B, 2C, L)
        r = pconv.reshape(B, C, 2 * L)
        r = jnp.transpose(r, (0, 2, 1)).reshape(B, L, 2, num_heads, hd)
        r = jnp.transpose(r, (2, 0, 3, 1, 4))
        ks.append(r[0])
        vs.append(r[1])
    k = jnp.concatenate(ks, axis=2)
    v = jnp.concatenate(vs, axis=2)
    attn = jnp.einsum("bhnd,bhmd->bhnm", q, k)
    attn = jax.nn.softmax(attn, axis=-1)
    out = jnp.einsum("bhnm,bhmd->bhnd", attn, v)
    out = jnp.transpose(out, (0, 2, 1, 3)).reshape(B, N, C)
    out = out.reshape(B * N, C) @ params["proj_w"] + params["proj_b"]
    return out.reshape(B, N, C)


# ----------------------------- main -----------------------------

if __name__ == "__main__":
    key = jax.random.PRNGKey(0)
    B, dim, num_heads = 2, 32, 4
    window_size = (8, 8)
    N = window_size[0] * window_size[1]

    kx, kp = jax.random.split(key)
    x = jax.random.normal(kx, (B, N, dim), jnp.float32)
    params = init_params(kp, dim, num_heads, window_size)

    out = dilated_window_attention(x, params, num_heads)
    out = jax.block_until_ready(out)

    ref = _ref_forward(x, params, num_heads)
    np.testing.assert_allclose(np.asarray(out), np.asarray(ref), atol=1e-4, rtol=1e-4)

    print("KERNEL_OK")
</pallas_src>

<mosaic_0001>
module attributes {stable_mosaic.version = 11 : i64} {
  func.func @_fused_kernel(%arg0: i32, %arg1: memref<1x64x32xf32, #tpu.memory_space<vmem>>, %arg2: memref<1x64x576xf32, #tpu.memory_space<vmem>>, %arg3: memref<1x64x576xf32, #tpu.memory_space<vmem>>, %arg4: memref<32x32xf32, #tpu.memory_space<vmem>>, %arg5: memref<1x32xf32, #tpu.memory_space<vmem>>, %arg6: memref<4x576x32xf32, #tpu.memory_space<vmem>>, %arg7: memref<64x32xf32, #tpu.memory_space<vmem>>, %arg8: memref<64x32xf32, #tpu.memory_space<vmem>>, %arg9: memref<1x64xf32, #tpu.memory_space<vmem>>, %arg10: memref<32x32xf32, #tpu.memory_space<vmem>>, %arg11: memref<1x32xf32, #tpu.memory_space<vmem>>, %arg12: memref<1x64x32xf32, #tpu.memory_space<vmem>>) attributes {dimension_semantics = [#tpu.dimension_semantics<parallel>], iteration_bounds = array<i64: 2>, scalar_prefetch = 0 : i64, scratch_operands = 0 : i64, tpu.core_type = #tpu.core_type<tc>, window_params = [{transform_indices = @transform_0, window_bounds = array<i64: 1, 64, 32>}, {transform_indices = @transform_1, window_bounds = array<i64: 1, 64, 576>}, {transform_indices = @transform_2, window_bounds = array<i64: 1, 64, 576>}, {pipeline_mode = #tpu.pipeline_mode<synchronous>, transform_indices = @transform_3, window_bounds = array<i64: 32, 32>}, {pipeline_mode = #tpu.pipeline_mode<synchronous>, transform_indices = @transform_4, window_bounds = array<i64: 1, 32>}, {pipeline_mode = #tpu.pipeline_mode<synchronous>, transform_indices = @transform_5, window_bounds = array<i64: 4, 576, 32>}, {pipeline_mode = #tpu.pipeline_mode<synchronous>, transform_indices = @transform_6, window_bounds = array<i64: 64, 32>}, {pipeline_mode = #tpu.pipeline_mode<synchronous>, transform_indices = @transform_7, window_bounds = array<i64: 64, 32>}, {pipeline_mode = #tpu.pipeline_mode<synchronous>, transform_indices = @transform_8, window_bounds = array<i64: 1, 64>}, {pipeline_mode = #tpu.pipeline_mode<synchronous>, transform_indices = @transform_9, window_bounds = array<i64: 32, 32>}, {pipeline_mode = #tpu.pipeline_mode<synchronous>, transform_indices = @transform_10, window_bounds = array<i64: 1, 32>}, {transform_indices = @transform_11, window_bounds = array<i64: 1, 64, 32>}]} {
    %c0 = arith.constant 0 : index
    %c0_0 = arith.constant 0 : index
    %c0_1 = arith.constant 0 : index
    %0 = vector.load %arg1[%c0, %c0_0, %c0_1] : memref<1x64x32xf32, #tpu.memory_space<vmem>>, vector<1x64x32xf32>
    %1 = vector.shape_cast %0 : vector<1x64x32xf32> to vector<64x32xf32>
    %c0_2 = arith.constant 0 : index
    %c0_3 = arith.constant 0 : index
    %2 = vector.load %arg4[%c0_2, %c0_3] : memref<32x32xf32, #tpu.memory_space<vmem>>, vector<32x32xf32>
    %cst = arith.constant dense<0.000000e+00> : vector<64x32xf32>
    %3 = tpu.matmul %1, %2, %cst {dimension_numbers = #tpu.dot_dimension_numbers<[1], [0], [0], [1], [0, 0, 1, 1], [], []>} : vector<64x32xf32>, vector<32x32xf32>, vector<64x32xf32> -> vector<64x32xf32>
    %c0_4 = arith.constant 0 : index
    %c0_5 = arith.constant 0 : index
    %4 = vector.load %arg5[%c0_4, %c0_5] : memref<1x32xf32, #tpu.memory_space<vmem>>, vector<1x32xf32>
    %5 = vector.broadcast %4 : vector<1x32xf32> to vector<64x32xf32>
    %6 = arith.addf %3, %5 : vector<64x32xf32>
    %c0_6 = arith.constant 0 : index
    %c0_7 = arith.constant 0 : index
    %c0_8 = arith.constant 0 : index
    %7 = vector.load %arg6[%c0_6, %c0_7, %c0_8] : memref<4x576x32xf32, #tpu.memory_space<vmem>>, vector<1x576x32xf32>
    %8 = vector.shape_cast %7 : vector<1x576x32xf32> to vector<576x32xf32>
    %c0_9 = arith.constant 0 : index
    %c0_10 = arith.constant 0 : index
    %c0_11 = arith.constant 0 : index
    %9 = vector.load %arg2[%c0_9, %c0_10, %c0_11] : memref<1x64x576xf32, #tpu.memory_space<vmem>>, vector<1x16x576xf32>
    %10 = vector.shape_cast %9 : vector<1x16x576xf32> to vector<16x576xf32>
    %c0_12 = arith.constant 0 : index
    %c0_13 = arith.constant 0 : index
    %c0_14 = arith.constant 0 : index
    %11 = vector.load %arg3[%c0_12, %c0_13, %c0_14] : memref<1x64x576xf32, #tpu.memory_space<vmem>>, vector<1x16x576xf32>
    %12 = vector.shape_cast %11 : vector<1x16x576xf32> to vector<16x576xf32>
    %cst_15 = arith.constant dense<0.000000e+00> : vector<16x32xf32>
    %13 = tpu.matmul %10, %8, %cst_15 {dimension_numbers = #tpu.dot_dimension_numbers<[1], [0], [0], [1], [0, 0, 1, 1], [], []>} : vector<16x576xf32>, vector<576x32xf32>, vector<16x32xf32> -> vector<16x32xf32>
    %cst_16 = arith.constant dense<0.000000e+00> : vector<16x32xf32>
    %14 = tpu.matmul %12, %8, %cst_16 {dimension_numbers = #tpu.dot_dimension_numbers<[1], [0], [0], [1], [0, 0, 1, 1], [], []>} : vector<16x576xf32>, vector<576x32xf32>, vector<16x32xf32> -> vector<16x32xf32>
    %c1 = arith.constant 1 : index
    %c0_17 = arith.constant 0 : index
    %c0_18 = arith.constant 0 : index
    %15 = vector.load %arg6[%c1, %c0_17, %c0_18] : memref<4x576x32xf32, #tpu.memory_space<vmem>>, vector<1x576x32xf32>
    %16 = vector.shape_cast %15 : vector<1x576x32xf32> to vector<576x32xf32>
    %c0_19 = arith.constant 0 : index
    %c16 = arith.constant 16 : index
    %c0_20 = arith.constant 0 : index
    %17 = vector.load %arg2[%c0_19, %c16, %c0_20] : memref<1x64x576xf32, #tpu.memory_space<vmem>>, vector<1x16x576xf32>
    %18 = vector.shape_cast %17 : vector<1x16x576xf32> to vector<16x576xf32>
    %c0_21 = arith.constant 0 : index
    %c16_22 = arith.constant 16 : index
    %c0_23 = arith.constant 0 : index
    %19 = vector.load %arg3[%c0_21, %c16_22, %c0_23] : memref<1x64x576xf32, #tpu.memory_space<vmem>>, vector<1x16x576xf32>
    %20 = vector.shape_cast %19 : vector<1x16x576xf32> to vector<16x576xf32>
    %cst_24 = arith.constant dense<0.000000e+00> : vector<16x32xf32>
    %21 = tpu.matmul %18, %16, %cst_24 {dimension_numbers = #tpu.dot_dimension_numbers<[1], [0], [0], [1], [0, 0, 1, 1], [], []>} : vector<16x576xf32>, vector<576x32xf32>, vector<16x32xf32> -> vector<16x32xf32>
    %cst_25 = arith.constant dense<0.000000e+00> : vector<16x32xf32>
    %22 = tpu.matmul %20, %16, %cst_25 {dimension_numbers = #tpu.dot_dimension_numbers<[1], [0], [0], [1], [0, 0, 1, 1], [], []>} : vector<16x576xf32>, vector<576x32xf32>, vector<16x32xf32> -> vector<16x32xf32>
    %c2 = arith.constant 2 : index
    %c0_26 = arith.constant 0 : index
    %c0_27 = arith.constant 0 : index
    %23 = vector.load %arg6[%c2, %c0_26, %c0_27] : memref<4x576x32xf32, #tpu.memory_space<vmem>>, vector<1x576x32xf32>
    %24 = vector.shape_cast %23 : vector<1x576x32xf32> to vector<576x32xf32>
    %c0_28 = arith.constant 0 : index
    %c32 = arith.constant 32 : index
    %c0_29 = arith.constant 0 : index
    %25 = vector.load %arg2[%c0_28, %c32, %c0_29] : memref<1x64x576xf32, #tpu.memory_space<vmem>>, vector<1x16x576xf32>
    %26 = vector.shape_cast %25 : vector<1x16x576xf32> to vector<16x576xf32>
    %c0_30 = arith.constant 0 : index
    %c32_31 = arith.constant 32 : index
    %c0_32 = arith.constant 0 : index
    %27 = vector.load %arg3[%c0_30, %c32_31, %c0_32] : memref<1x64x576xf32, #tpu.memory_space<vmem>>, vector<1x16x576xf32>
    %28 = vector.shape_cast %27 : vector<1x16x576xf32> to vector<16x576xf32>
    %cst_33 = arith.constant dense<0.000000e+00> : vector<16x32xf32>
    %29 = tpu.matmul %26, %24, %cst_33 {dimension_numbers = #tpu.dot_dimension_numbers<[1], [0], [0], [1], [0, 0, 1, 1], [], []>} : vector<16x576xf32>, vector<576x32xf32>, vector<16x32xf32> -> vector<16x32xf32>
    %cst_34 = arith.constant dense<0.000000e+00> : vector<16x32xf32>
    %30 = tpu.matmul %28, %24, %cst_34 {dimension_numbers = #tpu.dot_dimension_numbers<[1], [0], [0], [1], [0, 0, 1, 1], [], []>} : vector<16x576xf32>, vector<576x32xf32>, vector<16x32xf32> -> vector<16x32xf32>
    %c3 = arith.constant 3 : index
    %c0_35 = arith.constant 0 : index
    %c0_36 = arith.constant 0 : index
    %31 = vector.load %arg6[%c3, %c0_35, %c0_36] : memref<4x576x32xf32, #tpu.memory_space<vmem>>, vector<1x576x32xf32>
    %32 = vector.shape_cast %31 : vector<1x576x32xf32> to vector<576x32xf32>
    %c0_37 = arith.constant 0 : index
    %c48 = arith.constant 48 : index
    %c0_38 = arith.constant 0 : index
    %33 = vector.load %arg2[%c0_37, %c48, %c0_38] : memref<1x64x576xf32, #tpu.memory_space<vmem>>, vector<1x16x576xf32>
    %34 = vector.shape_cast %33 : vector<1x16x576xf32> to vector<16x576xf32>
    %c0_39 = arith.constant 0 : index
    %c48_40 = arith.constant 48 : index
    %c0_41 = arith.constant 0 : index
    %35 = vector.load %arg3[%c0_39, %c48_40, %c0_41] : memref<1x64x576xf32, #tpu.memory_space<vmem>>, vector<1x16x576xf32>
    %36 = vector.shape_cast %35 : vector<1x16x576xf32> to vector<16x576xf32>
    %cst_42 = arith.constant dense<0.000000e+00> : vector<16x32xf32>
    %37 = tpu.matmul %34, %32, %cst_42 {dimension_numbers = #tpu.dot_dimension_numbers<[1], [0], [0], [1], [0, 0, 1, 1], [], []>} : vector<16x576xf32>, vector<576x32xf32>, vector<16x32xf32> -> vector<16x32xf32>
    %cst_43 = arith.constant dense<0.000000e+00> : vector<16x32xf32>
    %38 = tpu.matmul %36, %32, %cst_43 {dimension_numbers = #tpu.dot_dimension_numbers<[1], [0], [0], [1], [0, 0, 1, 1], [], []>} : vector<16x576xf32>, vector<576x32xf32>, vector<16x32xf32> -> vector<16x32xf32>
    %39 = tpu.concatenate %13, %21, %29, %37 in 0 : vector<16x32xf32>, vector<16x32xf32>, vector<16x32xf32>, vector<16x32xf32> -> vector<64x32xf32>
    %c0_44 = arith.constant 0 : index
    %c0_45 = arith.constant 0 : index
    %40 = vector.load %arg7[%c0_44, %c0_45] : memref<64x32xf32, #tpu.memory_space<vmem>>, vector<64x32xf32>
    %41 = arith.addf %39, %40 : vector<64x32xf32>
    %42 = tpu.concatenate %14, %22, %30, %38 in 0 : vector<16x32xf32>, vector<16x32xf32>, vector<16x32xf32>, vector<16x32xf32> -> vector<64x32xf32>
    %c0_46 = arith.constant 0 : index
    %c0_47 = arith.constant 0 : index
    %43 = vector.load %arg8[%c0_46, %c0_47] : memref<64x32xf32, #tpu.memory_space<vmem>>, vector<64x32xf32>
    %44 = arith.addf %42, %43 : vector<64x32xf32>
    %c0_48 = arith.constant 0 : index
    %c0_49 = arith.constant 0 : index
    %45 = vector.load %arg9[%c0_48, %c0_49] : memref<1x64xf32, #tpu.memory_space<vmem>>, vector<1x64xf32>
    %cst_50 = arith.constant 0.000000e+00 : f32
    %46 = vector.broadcast %cst_50 : f32 to vector<64x32xf32>
    %47 = vector.extract_strided_slice %6 {offsets = [0, 0], sizes = [64, 8], strides = [1, 1]} : vector<64x32xf32> to vector<64x8xf32>
    %cst_51 = arith.constant 0.353553385 : f32
    %48 = vector.broadcast %cst_51 : f32 to vector<64x8xf32>
    %49 = arith.mulf %47, %48 : vector<64x8xf32>
    %50 = vector.extract_strided_slice %41 {offsets = [0, 0], sizes = [64, 8], strides = [1, 1]} : vector<64x32xf32> to vector<64x8xf32>
    %51 = vector.extract_strided_slice %44 {offsets = [0, 0], sizes = [64, 8], strides = [1, 1]} : vector<64x32xf32> to vector<64x8xf32>
    %cst_52 = arith.constant dense<0.000000e+00> : vector<64x64xf32>
    %52 = tpu.matmul %49, %50, %cst_52 {dimension_numbers = #tpu.dot_dimension_numbers<[1], [1], [0], [0], [0, 0, 1, 0], [], []>} : vector<64x8xf32>, vector<64x8xf32>, vector<64x64xf32> -> vector<64x64xf32>
    %53 = vector.broadcast %45 : vector<1x64xf32> to vector<64x64xf32>
    %54 = arith.addf %52, %53 : vector<64x64xf32>
    %cst_53 = arith.constant dense<0xFF800000> : vector<64xf32>
    %55 = vector.multi_reduction <maximumf>, %54, %cst_53 [1] : vector<64x64xf32> to vector<64xf32>
    %56 = vector.shape_cast %55 : vector<64xf32> to vector<64x1xf32>
    %57 = vector.broadcast %56 : vector<64x1xf32> to vector<64x64xf32>
    %58 = arith.subf %54, %57 : vector<64x64xf32>
    %59 = math.exp %58 : vector<64x64xf32>
    %cst_54 = arith.constant dense<0.000000e+00> : vector<64xf32>
    %60 = vector.multi_reduction <add>, %59, %cst_54 [1] : vector<64x64xf32> to vector<64xf32>
    %61 = vector.shape_cast %60 : vector<64xf32> to vector<64x1xf32>
    %62 = tpu.reciprocal %61 {approx = true} : vector<64x1xf32> -> vector<64x1xf32>
    %63 = vector.broadcast %62 : vector<64x1xf32> to vector<64x64xf32>
    %64 = arith.mulf %59, %63 : vector<64x64xf32>
    %cst_55 = arith.constant dense<0.000000e+00> : vector<64x8xf32>
    %65 = tpu.matmul %64, %51, %cst_55 {dimension_numbers = #tpu.dot_dimension_numbers<[1], [0], [0], [1], [0, 0, 1, 1], [], []>} : vector<64x64xf32>, vector<64x8xf32>, vector<64x8xf32> -> vector<64x8xf32>
    %c0_56 = arith.constant 0 : index
    %c0_57 = arith.constant 0 : index
    %66 = vector.load %arg10[%c0_56, %c0_57] : memref<32x32xf32, #tpu.memory_space<vmem>>, vector<8x32xf32>
    %cst_58 = arith.constant dense<0.000000e+00> : vector<64x32xf32>
    %67 = tpu.matmul %65, %66, %cst_58 {dimension_numbers = #tpu.dot_dimension_numbers<[1], [0], [0], [1], [0, 0, 1, 1], [], []>} : vector<64x8xf32>, vector<8x32xf32>, vector<64x32xf32> -> vector<64x32xf32>
    %68 = arith.addf %46, %67 : vector<64x32xf32>
    %69 = vector.extract_strided_slice %6 {offsets = [0, 8], sizes = [64, 8], strides = [1, 1]} : vector<64x32xf32> to vector<64x8xf32>
    %cst_59 = arith.constant 0.353553385 : f32
    %70 = vector.broadcast %cst_59 : f32 to vector<64x8xf32>
    %71 = arith.mulf %69, %70 : vector<64x8xf32>
    %72 = vector.extract_strided_slice %41 {offsets = [0, 8], sizes = [64, 8], strides = [1, 1]} : vector<64x32xf32> to vector<64x8xf32>
    %73 = vector.extract_strided_slice %44 {offsets = [0, 8], sizes = [64, 8], strides = [1, 1]} : vector<64x32xf32> to vector<64x8xf32>
    %cst_60 = arith.constant dense<0.000000e+00> : vector<64x64xf32>
    %74 = tpu.matmul %71, %72, %cst_60 {dimension_numbers = #tpu.dot_dimension_numbers<[1], [1], [0], [0], [0, 0, 1, 0], [], []>} : vector<64x8xf32>, vector<64x8xf32>, vector<64x64xf32> -> vector<64x64xf32>
    %75 = vector.broadcast %45 : vector<1x64xf32> to vector<64x64xf32>
    %76 = arith.addf %74, %75 : vector<64x64xf32>
    %cst_61 = arith.constant dense<0xFF800000> : vector<64xf32>
    %77 = vector.multi_reduction <maximumf>, %76, %cst_61 [1] : vector<64x64xf32> to vector<64xf32>
    %78 = vector.shape_cast %77 : vector<64xf32> to vector<64x1xf32>
    %79 = vector.broadcast %78 : vector<64x1xf32> to vector<64x64xf32>
    %80 = arith.subf %76, %79 : vector<64x64xf32>
    %81 = math.exp %80 : vector<64x64xf32>
    %cst_62 = arith.constant dense<0.000000e+00> : vector<64xf32>
    %82 = vector.multi_reduction <add>, %81, %cst_62 [1] : vector<64x64xf32> to vector<64xf32>
    %83 = vector.shape_cast %82 : vector<64xf32> to vector<64x1xf32>
    %84 = tpu.reciprocal %83 {approx = true} : vector<64x1xf32> -> vector<64x1xf32>
    %85 = vector.broadcast %84 : vector<64x1xf32> to vector<64x64xf32>
    %86 = arith.mulf %81, %85 : vector<64x64xf32>
    %cst_63 = arith.constant dense<0.000000e+00> : vector<64x8xf32>
    %87 = tpu.matmul %86, %73, %cst_63 {dimension_numbers = #tpu.dot_dimension_numbers<[1], [0], [0], [1], [0, 0, 1, 1], [], []>} : vector<64x64xf32>, vector<64x8xf32>, vector<64x8xf32> -> vector<64x8xf32>
    %c8 = arith.constant 8 : index
    %c0_64 = arith.constant 0 : index
    %88 = vector.load %arg10[%c8, %c0_64] : memref<32x32xf32, #tpu.memory_space<vmem>>, vector<8x32xf32>
    %cst_65 = arith.constant dense<0.000000e+00> : vector<64x32xf32>
    %89 = tpu.matmul %87, %88, %cst_65 {dimension_numbers = #tpu.dot_dimension_numbers<[1], [0], [0], [1], [0, 0, 1, 1], [], []>} : vector<64x8xf32>, vector<8x32xf32>, vector<64x32xf32> -> vector<64x32xf32>
    %90 = arith.addf %68, %89 : vector<64x32xf32>
    %91 = vector.extract_strided_slice %6 {offsets = [0, 16], sizes = [64, 8], strides = [1, 1]} : vector<64x32xf32> to vector<64x8xf32>
    %cst_66 = arith.constant 0.353553385 : f32
    %92 = vector.broadcast %cst_66 : f32 to vector<64x8xf32>
    %93 = arith.mulf %91, %92 : vector<64x8xf32>
    %94 = vector.extract_strided_slice %41 {offsets = [0, 16], sizes = [64, 8], strides = [1, 1]} : vector<64x32xf32> to vector<64x8xf32>
    %95 = vector.extract_strided_slice %44 {offsets = [0, 16], sizes = [64, 8], strides = [1, 1]} : vector<64x32xf32> to vector<64x8xf32>
    %cst_67 = arith.constant dense<0.000000e+00> : vector<64x64xf32>
    %96 = tpu.matmul %93, %94, %cst_67 {dimension_numbers = #tpu.dot_dimension_numbers<[1], [1], [0], [0], [0, 0, 1, 0], [], []>} : vector<64x8xf32>, vector<64x8xf32>, vector<64x64xf32> -> vector<64x64xf32>
    %97 = vector.broadcast %45 : vector<1x64xf32> to vector<64x64xf32>
    %98 = arith.addf %96, %97 : vector<64x64xf32>
    %cst_68 = arith.constant dense<0xFF800000> : vector<64xf32>
    %99 = vector.multi_reduction <maximumf>, %98, %cst_68 [1] : vector<64x64xf32> to vector<64xf32>
    %100 = vector.shape_cast %99 : vector<64xf32> to vector<64x1xf32>
    %101 = vector.broadcast %100 : vector<64x1xf32> to vector<64x64xf32>
    %102 = arith.subf %98, %101 : vector<64x64xf32>
    %103 = math.exp %102 : vector<64x64xf32>
    %cst_69 = arith.constant dense<0.000000e+00> : vector<64xf32>
    %104 = vector.multi_reduction <add>, %103, %cst_69 [1] : vector<64x64xf32> to vector<64xf32>
    %105 = vector.shape_cast %104 : vector<64xf32> to vector<64x1xf32>
    %106 = tpu.reciprocal %105 {approx = true} : vector<64x1xf32> -> vector<64x1xf32>
    %107 = vector.broadcast %106 : vector<64x1xf32> to vector<64x64xf32>
    %108 = arith.mulf %103, %107 : vector<64x64xf32>
    %cst_70 = arith.constant dense<0.000000e+00> : vector<64x8xf32>
    %109 = tpu.matmul %108, %95, %cst_70 {dimension_numbers = #tpu.dot_dimension_numbers<[1], [0], [0], [1], [0, 0, 1, 1], [], []>} : vector<64x64xf32>, vector<64x8xf32>, vector<64x8xf32> -> vector<64x8xf32>
    %c16_71 = arith.constant 16 : index
    %c0_72 = arith.constant 0 : index
    %110 = vector.load %arg10[%c16_71, %c0_72] : memref<32x32xf32, #tpu.memory_space<vmem>>, vector<8x32xf32>
    %cst_73 = arith.constant dense<0.000000e+00> : vector<64x32xf32>
    %111 = tpu.matmul %109, %110, %cst_73 {dimension_numbers = #tpu.dot_dimension_numbers<[1], [0], [0], [1], [0, 0, 1, 1], [], []>} : vector<64x8xf32>, vector<8x32xf32>, vector<64x32xf32> -> vector<64x32xf32>
    %112 = arith.addf %90, %111 : vector<64x32xf32>
    %113 = vector.extract_strided_slice %6 {offsets = [0, 24], sizes = [64, 8], strides = [1, 1]} : vector<64x32xf32> to vector<64x8xf32>
    %cst_74 = arith.constant 0.353553385 : f32
    %114 = vector.broadcast %cst_74 : f32 to vector<64x8xf32>
    %115 = arith.mulf %113, %114 : vector<64x8xf32>
    %116 = vector.extract_strided_slice %41 {offsets = [0, 24], sizes = [64, 8], strides = [1, 1]} : vector<64x32xf32> to vector<64x8xf32>
    %117 = vector.extract_strided_slice %44 {offsets = [0, 24], sizes = [64, 8], strides = [1, 1]} : vector<64x32xf32> to vector<64x8xf32>
    %cst_75 = arith.constant dense<0.000000e+00> : vector<64x64xf32>
    %118 = tpu.matmul %115, %116, %cst_75 {dimension_numbers = #tpu.dot_dimension_numbers<[1], [1], [0], [0], [0, 0, 1, 0], [], []>} : vector<64x8xf32>, vector<64x8xf32>, vector<64x64xf32> -> vector<64x64xf32>
    %119 = vector.broadcast %45 : vector<1x64xf32> to vector<64x64xf32>
    %120 = arith.addf %118, %119 : vector<64x64xf32>
    %cst_76 = arith.constant dense<0xFF800000> : vector<64xf32>
    %121 = vector.multi_reduction <maximumf>, %120, %cst_76 [1] : vector<64x64xf32> to vector<64xf32>
    %122 = vector.shape_cast %121 : vector<64xf32> to vector<64x1xf32>
    %123 = vector.broadcast %122 : vector<64x1xf32> to vector<64x64xf32>
    %124 = arith.subf %120, %123 : vector<64x64xf32>
    %125 = math.exp %124 : vector<64x64xf32>
    %cst_77 = arith.constant dense<0.000000e+00> : vector<64xf32>
    %126 = vector.multi_reduction <add>, %125, %cst_77 [1] : vector<64x64xf32> to vector<64xf32>
    %127 = vector.shape_cast %126 : vector<64xf32> to vector<64x1xf32>
    %128 = tpu.reciprocal %127 {approx = true} : vector<64x1xf32> -> vector<64x1xf32>
    %129 = vector.broadcast %128 : vector<64x1xf32> to vector<64x64xf32>
    %130 = arith.mulf %125, %129 : vector<64x64xf32>
    %cst_78 = arith.constant dense<0.000000e+00> : vector<64x8xf32>
    %131 = tpu.matmul %130, %117, %cst_78 {dimension_numbers = #tpu.dot_dimension_numbers<[1], [0], [0], [1], [0, 0, 1, 1], [], []>} : vector<64x64xf32>, vector<64x8xf32>, vector<64x8xf32> -> vector<64x8xf32>
    %c24 = arith.constant 24 : index
    %c0_79 = arith.constant 0 : index
    %132 = vector.load %arg10[%c24, %c0_79] : memref<32x32xf32, #tpu.memory_space<vmem>>, vector<8x32xf32>
    %cst_80 = arith.constant dense<0.000000e+00> : vector<64x32xf32>
    %133 = tpu.matmul %131, %132, %cst_80 {dimension_numbers = #tpu.dot_dimension_numbers<[1], [0], [0], [1], [0, 0, 1, 1], [], []>} : vector<64x8xf32>, vector<8x32xf32>, vector<64x32xf32> -> vector<64x32xf32>
    %134 = arith.addf %112, %133 : vector<64x32xf32>
    %c0_81 = arith.constant 0 : index
    %c0_82 = arith.constant 0 : index
    %135 = vector.load %arg11[%c0_81, %c0_82] : memref<1x32xf32, #tpu.memory_space<vmem>>, vector<1x32xf32>
    %136 = vector.broadcast %135 : vector<1x32xf32> to vector<64x32xf32>
    %137 = arith.addf %134, %136 : vector<64x32xf32>
    %c0_83 = arith.constant 0 : index
    %c0_84 = arith.constant 0 : index
    %c0_85 = arith.constant 0 : index
    %138 = vector.load %arg12[%c0_83, %c0_84, %c0_85] : memref<1x64x32xf32, #tpu.memory_space<vmem>>, vector<1x64x32xf32>
    %139 = vector.shape_cast %138 : vector<1x64x32xf32> to vector<64x32xf32>
    %140 = vector.shape_cast %137 : vector<64x32xf32> to vector<1x64x32xf32>
    tpu.vector_store %arg12[%c0_83, %c0_84, %c0_85], %140 {strides = array<i32>} : memref<1x64x32xf32, #tpu.memory_space<vmem>>, vector<1x64x32xf32>,
    return
  }
  func.func @transform_0(%arg0: i32) -> (i32, i32, i32) {
    %c0_i32 = arith.constant 0 : i32
    %c0_i32_0 = arith.constant 0 : i32
    %c0_i32_1 = arith.constant 0 : i32
    return %arg0, %c0_i32, %c0_i32_0 : i32, i32, i32
  }
  func.func @transform_1(%arg0: i32) -> (i32, i32, i32) {
    %c0_i32 = arith.constant 0 : i32
    %c0_i32_0 = arith.constant 0 : i32
    %c0_i32_1 = arith.constant 0 : i32
    return %arg0, %c0_i32, %c0_i32_0 : i32, i32, i32
  }
  func.func @transform_2(%arg0: i32) -> (i32, i32, i32) {
    %c0_i32 = arith.constant 0 : i32
    %c0_i32_0 = arith.constant 0 : i32
    %c0_i32_1 = arith.constant 0 : i32
    return %arg0, %c0_i32, %c0_i32_0 : i32, i32, i32
  }
  func.func @transform_3(%arg0: i32) -> (i32, i32) {
    %c0_i32 = arith.constant 0 : i32
    %c0_i32_0 = arith.constant 0 : i32
    %c0_i32_1 = arith.constant 0 : i32
    return %c0_i32, %c0_i32_0 : i32, i32
  }
  func.func @transform_4(%arg0: i32) -> (i32, i32) {
    %c0_i32 = arith.constant 0 : i32
    %c0_i32_0 = arith.constant 0 : i32
    %c0_i32_1 = arith.constant 0 : i32
    return %c0_i32, %c0_i32_0 : i32, i32
  }
  func.func @transform_5(%arg0: i32) -> (i32, i32, i32) {
    %c0_i32 = arith.constant 0 : i32
    %c0_i32_0 = arith.constant 0 : i32
    %c0_i32_1 = arith.constant 0 : i32
    %c0_i32_2 = arith.constant 0 : i32
    return %c0_i32, %c0_i32_0, %c0_i32_1 : i32, i32, i32
  }
  func.func @transform_6(%arg0: i32) -> (i32, i32) {
    %c0_i32 = arith.constant 0 : i32
    %c0_i32_0 = arith.constant 0 : i32
    %c0_i32_1 = arith.constant 0 : i32
    return %c0_i32, %c0_i32_0 : i32, i32
  }
  func.func @transform_7(%arg0: i32) -> (i32, i32) {
    %c0_i32 = arith.constant 0 : i32
    %c0_i32_0 = arith.constant 0 : i32
    %c0_i32_1 = arith.constant 0 : i32
    return %c0_i32, %c0_i32_0 : i32, i32
  }
  func.func @transform_8(%arg0: i32) -> (i32, i32) {
    %c0_i32 = arith.constant 0 : i32
    %c0_i32_0 = arith.constant 0 : i32
    %c0_i32_1 = arith.constant 0 : i32
    return %c0_i32, %c0_i32_0 : i32, i32
  }
  func.func @transform_9(%arg0: i32) -> (i32, i32) {
    %c0_i32 = arith.constant 0 : i32
    %c0_i32_0 = arith.constant 0 : i32
    %c0_i32_1 = arith.constant 0 : i32
    return %c0_i32, %c0_i32_0 : i32, i32
  }
  func.func @transform_10(%arg0: i32) -> (i32, i32) {
    %c0_i32 = arith.constant 0 : i32
    %c0_i32_0 = arith.constant 0 : i32
    %c0_i32_1 = arith.constant 0 : i32
    return %c0_i32, %c0_i32_0 : i32, i32
  }
  func.func @transform_11(%arg0: i32) -> (i32, i32, i32) {
    %c0_i32 = arith.constant 0 : i32
    %c0_i32_0 = arith.constant 0 : i32
    %c0_i32_1 = arith.constant 0 : i32
    return %arg0, %c0_i32, %c0_i32_0 : i32, i32, i32
  }
}

</mosaic_0001>

<llo_original>
// kernel: dilated_window_attention.1
$region0: #{dilated_window_attention.1}
  #allocation0 [shape = 'u32[]', space=smem, size = 0x4, offset = 0x4, fixed_abs, tag = 'smem constant byte address 0x4 - core index']
  #allocation1 [shape = 'u32[72,128]{1,0:T(1,128)}', space=vmem, size = 0x9000, scoped, tag = 'internal scratch']
  %s0 = inlined_call_operand.vmem [shape: f32[2,64,32], index: 0, kind: input, shape index: {}]
  %s1 = inlined_call_operand.vmem [shape: f32[2,64,576], index: 1, kind: input, shape index: {}]
  %s2 = inlined_call_operand.vmem [shape: f32[2,64,576], index: 2, kind: input, shape index: {}]
  %s3 = inlined_call_operand.vmem [shape: f32[32,32], index: 3, kind: input, shape index: {}]
  %s4 = inlined_call_operand.vmem [shape: f32[1,32], index: 4, kind: input, shape index: {}]
  %s5 = inlined_call_operand.vmem [shape: f32[4,576,32], index: 5, kind: input, shape index: {}]
  %s6 = inlined_call_operand.vmem [shape: f32[64,32], index: 6, kind: input, shape index: {}]
  %s7 = inlined_call_operand.vmem [shape: f32[64,32], index: 7, kind: input, shape index: {}]
  %s8 = inlined_call_operand.vmem [shape: f32[1,64], index: 8, kind: input, shape index: {}]
  %s9 = inlined_call_operand.vmem [shape: f32[32,32], index: 9, kind: input, shape index: {}]
  %s10 = inlined_call_operand.vmem [shape: f32[1,32], index: 10, kind: input, shape index: {}]
  %s11 = inlined_call_operand.vmem [shape: f32[2,64,32], index: 11, kind: output, shape index: {}]
  %s12 = sld [smem:[#allocation0]]
  $region77: #{dilated_window_attention.1} parent=0
    _
  %s14 = ssub.s32 1, %s12
  %s15 = scalar_select 0, %s14, %s12
  loop: start=0, step=1, limit=4
  $region2: #{dilated_window_attention.1} parent=0 // loop_pre_header
    _
  $region3: #{dilated_window_attention.1} parent=0 // loop_header
    %s17 = sphi 0, %s21
    %p18 = scmp.ge.s32.totalorder %s17, 4
    %s27 = sphi 0, %s29
    %s30 = sphi 0, %s27
    %s31 = sphi 0, %s30
    %s47 = sphi 0, %s31
    %s53 = sphi 0, %s55
    %s56 = sphi 0, %s53
    %s57 = sphi 0, %s56
    %s73 = sphi 0, %s57
    %s79 = sphi 0, %s81
    %s82 = sphi 0, %s79
    %s83 = sphi 0, %s82
    %s99 = sphi 0, %s83
    %s103 = sphi 0, %s103
    %s105 = sphi 0, %s103
    %s106 = sphi 0, %s105
    %s120 = sphi 0, %s106
    %s124 = sphi 0, %s124
    %s126 = sphi 0, %s124
    %s127 = sphi 0, %s126
    %s141 = sphi 0, %s127
    %s145 = sphi 0, %s145
    %s147 = sphi 0, %s145
    %s148 = sphi 0, %s147
    %s162 = sphi 0, %s148
    %s166 = sphi 0, %s166
    %s168 = sphi 0, %s166
    %s169 = sphi 0, %s168
    %s183 = sphi 0, %s169
    %s187 = sphi 0, %s187
    %s189 = sphi 0, %s187
    %s190 = sphi 0, %s189
    %s204 = sphi 0, %s190
    %s208 = sphi 0, %s208
    %s210 = sphi 0, %s208
    %s211 = sphi 0, %s210
    %s225 = sphi 0, %s211
    %s229 = sphi 0, %s229
    %s231 = sphi 0, %s229
    %s232 = sphi 0, %s231
    %s246 = sphi 0, %s232
    %s250 = sphi 0, %s250
    %s252 = sphi 0, %s250
    %s253 = sphi 0, %s252
    %s267 = sphi 0, %s253
    %s273 = sphi 0, %s275
    %s276 = sphi 0, %s273
    %s277 = sphi 0, %s276
    %s293 = sphi 0, %s277
  $region4: #{dilated_window_attention.1} parent=0 // loop_header_branch
    %20 = sbr.rel (%p18) target = $region8
  $region5: #{dilated_window_attention.1} parent=0 // loop_body
    %s22 = ssub.s32 %s17, 1
    %s23 = ssub.s32 %s17, 2
    %s24 = sadd.s32 %s17, 1
    %s25 = ssub.s32 %s17, %s24
    %p26 = scmp.eq.s32.totalorder %s25, 0
    %s28 = sadd.s32 %s27, 1
    %s29 = scalar_select %p26, %s27, %s28
    %p32 = pneg %p26
    %p33 = scmp.eq.s32.totalorder %s17, 1
    %p34 = por %p32, %p33
    %p35 = scmp.ne.s32.totalorder %s27, %s30
    %p36 = scmp.eq.s32.totalorder %s17, 0
    %p37 = por %p35, %p36
    %p38 = scmp.ne.s32.totalorder %s27, %s30
    %p39 = scmp.eq.s32.totalorder %s22, 1
    %p40 = por %p38, %p39
    %p41 = scmp.ne.s32.totalorder %s30, %s31
    %p42 = scmp.eq.s32.totalorder %s22, 0
    %p43 = por %p41, %p42
    %p44 = scmp.ne.s32.totalorder %s30, %s31
    %p45 = scmp.eq.s32.totalorder %s23, 1
    %p46 = por %p44, %p45
    %p48 = scmp.ne.s32.totalorder %s31, %s47
    %p49 = scmp.eq.s32.totalorder %s23, 0
    %p50 = por %p48, %p49
    %s51 = ssub.s32 %s17, %s24
    %p52 = scmp.eq.s32.totalorder %s51, 0
    %s54 = sadd.s32 %s53, 1
    %s55 = scalar_select %p52, %s53, %s54
    %p58 = pneg %p52
    %p59 = scmp.eq.s32.totalorder %s17, 1
    %p60 = por %p58, %p59
    %p61 = scmp.ne.s32.totalorder %s53, %s56
    %p62 = scmp.eq.s32.totalorder %s17, 0
    %p63 = por %p61, %p62
    %p64 = scmp.ne.s32.totalorder %s53, %s56
    %p65 = scmp.eq.s32.totalorder %s22, 1
    %p66 = por %p64, %p65
    %p67 = scmp.ne.s32.totalorder %s56, %s57
    %p68 = scmp.eq.s32.totalorder %s22, 0
    %p69 = por %p67, %p68
    %p70 = scmp.ne.s32.totalorder %s56, %s57
    %p71 = scmp.eq.s32.totalorder %s23, 1
    %p72 = por %p70, %p71
    %p74 = scmp.ne.s32.totalorder %s57, %s73
    %p75 = scmp.eq.s32.totalorder %s23, 0
    %p76 = por %p74, %p75
    %s77 = ssub.s32 %s17, %s24
    %p78 = scmp.eq.s32.totalorder %s77, 0
    %s80 = sadd.s32 %s79, 1
    %s81 = scalar_select %p78, %s79, %s80
    %p84 = pneg %p78
    %p85 = scmp.eq.s32.totalorder %s17, 1
    %p86 = por %p84, %p85
    %p87 = scmp.ne.s32.totalorder %s79, %s82
    %p88 = scmp.eq.s32.totalorder %s17, 0
    %p89 = por %p87, %p88
    %p90 = scmp.ne.s32.totalorder %s79, %s82
    %p91 = scmp.eq.s32.totalorder %s22, 1
    %p92 = por %p90, %p91
    %p93 = scmp.ne.s32.totalorder %s82, %s83
    %p94 = scmp.eq.s32.totalorder %s22, 0
    %p95 = por %p93, %p94
    %p96 = scmp.ne.s32.totalorder %s82, %s83
    %p97 = scmp.eq.s32.totalorder %s23, 1
    %p98 = por %p96, %p97
    %p100 = scmp.ne.s32.totalorder %s83, %s99
    %p101 = scmp.eq.s32.totalorder %s23, 0
    %p102 = por %p100, %p101
    %s104 = sadd.s32 %s103, 1
    %p107 = scmp.eq.s32.totalorder %s17, 1
    %p108 = scmp.ne.s32.totalorder %s103, %s105
    %p109 = scmp.eq.s32.totalorder %s17, 0
    %p110 = por %p108, %p109
    %p111 = scmp.ne.s32.totalorder %s103, %s105
    %p112 = scmp.eq.s32.totalorder %s22, 1
    %p113 = por %p111, %p112
    %p114 = scmp.ne.s32.totalorder %s105, %s106
    %p115 = scmp.eq.s32.totalorder %s22, 0
    %p116 = por %p114, %p115
    %p117 = scmp.ne.s32.totalorder %s105, %s106
    %p118 = scmp.eq.s32.totalorder %s23, 1
    %p119 = por %p117, %p118
    %p121 = scmp.ne.s32.totalorder %s106, %s120
    %p122 = scmp.eq.s32.totalorder %s23, 0
    %p123 = por %p121, %p122
    %s125 = sadd.s32 %s124, 1
    %p128 = scmp.eq.s32.totalorder %s17, 1
    %p129 = scmp.ne.s32.totalorder %s124, %s126
    %p130 = scmp.eq.s32.totalorder %s17, 0
    %p131 = por %p129, %p130
    %p132 = scmp.ne.s32.totalorder %s124, %s126
    %p133 = scmp.eq.s32.totalorder %s22, 1
    %p134 = por %p132, %p133
    %p135 = scmp.ne.s32.totalorder %s126, %s127
    %p136 = scmp.eq.s32.totalorder %s22, 0
    %p137 = por %p135, %p136
    %p138 = scmp.ne.s32.totalorder %s126, %s127
    %p139 = scmp.eq.s32.totalorder %s23, 1
    %p140 = por %p138, %p139
    %p142 = scmp.ne.s32.totalorder %s127, %s141
    %p143 = scmp.eq.s32.totalorder %s23, 0
    %p144 = por %p142, %p143
    %s146 = sadd.s32 %s145, 1
    %p149 = scmp.eq.s32.totalorder %s17, 1
    %p150 = scmp.ne.s32.totalorder %s145, %s147
    %p151 = scmp.eq.s32.totalorder %s17, 0
    %p152 = por %p150, %p151
    %p153 = scmp.ne.s32.totalorder %s145, %s147
    %p154 = scmp.eq.s32.totalorder %s22, 1
    %p155 = por %p153, %p154
    %p156 = scmp.ne.s32.totalorder %s147, %s148
    %p157 = scmp.eq.s32.totalorder %s22, 0
    %p158 = por %p156, %p157
    %p159 = scmp.ne.s32.totalorder %s147, %s148
    %p160 = scmp.eq.s32.totalorder %s23, 1
    %p161 = por %p159, %p160
    %p163 = scmp.ne.s32.totalorder %s148, %s162
    %p164 = scmp.eq.s32.totalorder %s23, 0
    %p165 = por %p163, %p164
    %s167 = sadd.s32 %s166, 1
    %p170 = scmp.eq.s32.totalorder %s17, 1
    %p171 = scmp.ne.s32.totalorder %s166, %s168
    %p172 = scmp.eq.s32.totalorder %s17, 0
    %p173 = por %p171, %p172
    %p174 = scmp.ne.s32.totalorder %s166, %s168
    %p175 = scmp.eq.s32.totalorder %s22, 1
    %p176 = por %p174, %p175
    %p177 = scmp.ne.s32.totalorder %s168, %s169
    %p178 = scmp.eq.s32.totalorder %s22, 0
    %p179 = por %p177, %p178
    %p180 = scmp.ne.s32.totalorder %s168, %s169
    %p181 = scmp.eq.s32.totalorder %s23, 1
    %p182 = por %p180, %p181
    %p184 = scmp.ne.s32.totalorder %s169, %s183
    %p185 = scmp.eq.s32.totalorder %s23, 0
    %p186 = por %p184, %p185
    %s188 = sadd.s32 %s187, 1
    %p191 = scmp.eq.s32.totalorder %s17, 1
    %p192 = scmp.ne.s32.totalorder %s187, %s189
    %p193 = scmp.eq.s32.totalorder %s17, 0
    %p194 = por %p192, %p193
    %p195 = scmp.ne.s32.totalorder %s187, %s189
    %p196 = scmp.eq.s32.totalorder %s22, 1
    %p197 = por %p195, %p196
    %p198 = scmp.ne.s32.totalorder %s189, %s190
    %p199 = scmp.eq.s32.totalorder %s22, 0
    %p200 = por %p198, %p199
    %p201 = scmp.ne.s32.totalorder %s189, %s190
    %p202 = scmp.eq.s32.totalorder %s23, 1
    %p203 = por %p201, %p202
    %p205 = scmp.ne.s32.totalorder %s190, %s204
    %p206 = scmp.eq.s32.totalorder %s23, 0
    %p207 = por %p205, %p206
    %s209 = sadd.s32 %s208, 1
    %p212 = scmp.eq.s32.totalorder %s17, 1
    %p213 = scmp.ne.s32.totalorder %s208, %s210
    %p214 = scmp.eq.s32.totalorder %s17, 0
    %p215 = por %p213, %p214
    %p216 = scmp.ne.s32.totalorder %s208, %s210
    %p217 = scmp.eq.s32.totalorder %s22, 1
    %p218 = por %p216, %p217
    %p219 = scmp.ne.s32.totalorder %s210, %s211
    %p220 = scmp.eq.s32.totalorder %s22, 0
    %p221 = por %p219, %p220
    %p222 = scmp.ne.s32.totalorder %s210, %s211
    %p223 = scmp.eq.s32.totalorder %s23, 1
    %p224 = por %p222, %p223
    %p226 = scmp.ne.s32.totalorder %s211, %s225
    %p227 = scmp.eq.s32.totalorder %s23, 0
    %p228 = por %p226, %p227
    %s230 = sadd.s32 %s229, 1
    %p233 = scmp.eq.s32.totalorder %s17, 1
    %p234 = scmp.ne.s32.totalorder %s229, %s231
    %p235 = scmp.eq.s32.totalorder %s17, 0
    %p236 = por %p234, %p235
    %p237 = scmp.ne.s32.totalorder %s229, %s231
    %p238 = scmp.eq.s32.totalorder %s22, 1
    %p239 = por %p237, %p238
    %p240 = scmp.ne.s32.totalorder %s231, %s232
    %p241 = scmp.eq.s32.totalorder %s22, 0
    %p242 = por %p240, %p241
    %p243 = scmp.ne.s32.totalorder %s231, %s232
    %p244 = scmp.eq.s32.totalorder %s23, 1
    %p245 = por %p243, %p244
    %p247 = scmp.ne.s32.totalorder %s232, %s246
    %p248 = scmp.eq.s32.totalorder %s23, 0
    %p249 = por %p247, %p248
    %s251 = sadd.s32 %s250, 1
    %p254 = scmp.eq.s32.totalorder %s17, 1
    %p255 = scmp.ne.s32.totalorder %s250, %s252
    %p256 = scmp.eq.s32.totalorder %s17, 0
    %p257 = por %p255, %p256
    %p258 = scmp.ne.s32.totalorder %s250, %s252
    %p259 = scmp.eq.s32.totalorder %s22, 1
    %p260 = por %p258, %p259
    %p261 = scmp.ne.s32.totalorder %s252, %s253
    %p262 = scmp.eq.s32.totalorder %s22, 0
    %p263 = por %p261, %p262
    %p264 = scmp.ne.s32.totalorder %s252, %s253
    %p265 = scmp.eq.s32.totalorder %s23, 1
    %p266 = por %p264, %p265
    %p268 = scmp.ne.s32.totalorder %s253, %s267
    %p269 = scmp.eq.s32.totalorder %s23, 0
    %p270 = por %p268, %p269
    %s271 = ssub.s32 %s17, %s24
    %p272 = scmp.eq.s32.totalorder %s271, 0
    %s274 = sadd.s32 %s273, 1
    %s275 = scalar_select %p272, %s273, %s274
    %p278 = pneg %p272
    %p279 = scmp.eq.s32.totalorder %s17, 1
    %p280 = por %p278, %p279
    %p281 = scmp.ne.s32.totalorder %s273, %s276
    %p282 = scmp.eq.s32.totalorder %s17, 0
    %p283 = por %p281, %p282
    %p284 = scmp.ne.s32.totalorder %s273, %s276
    %p285 = scmp.eq.s32.totalorder %s22, 1
    %p286 = por %p284, %p285
    %p287 = scmp.ne.s32.totalorder %s276, %s277
    %p288 = scmp.eq.s32.totalorder %s22, 0
    %p289 = por %p287, %p288
    %p290 = scmp.ne.s32.totalorder %s276, %s277
    %p291 = scmp.eq.s32.totalorder %s23, 1
    %p292 = por %p290, %p291
    %p294 = scmp.ne.s32.totalorder %s277, %s293
    %p295 = scmp.eq.s32.totalorder %s23, 0
    %p296 = por %p294, %p295
    %p297 = scmp.le.s32.totalorder 1, %s17
    %p298 = scmp.lt.s32.totalorder %s17, 3
    %p299 = pnand %p297, %p298
    %p300 = pneg %p299
    // Predicated region
    $region9: #{dilated_window_attention.1} parent=5 // pred_check
      _
    $region10: #{dilated_window_attention.1} parent=5 // pred_check_branch
      %302 = sbr.rel (%p299) target = $region12
    $region11: #{dilated_window_attention.1} parent=5 // pred_region
      %s303 = ssub.s32 %s17, 1
      // Predicated region
      $region13: #{dilated_window_attention.1} parent=11 // pred_check
        %p304 = pneg %p116
      $region14: #{dilated_window_attention.1} parent=11 // pred_check_branch
        %306 = sbr.rel (%p304) target = $region16
      $region15: #{dilated_window_attention.1} parent=11 // pred_region
        _
      $region16: #{dilated_window_attention.1} parent=11 // pred_fallthru
        _
      // Predicated region
      $region17: #{dilated_window_attention.1} parent=11 // pred_check
        %p307 = pneg %p137
      $region18: #{dilated_window_attention.1} parent=11 // pred_check_branch
        %309 = sbr.rel (%p307) target = $region20
      $region19: #{dilated_window_attention.1} parent=11 // pred_region
        _
      $region20: #{dilated_window_attention.1} parent=11 // pred_fallthru
        _
      // Predicated region
      $region21: #{dilated_window_attention.1} parent=11 // pred_check
        %p310 = pneg %p158
      $region22: #{dilated_window_attention.1} parent=11 // pred_check_branch
        %312 = sbr.rel (%p310) target = $region24
      $region23: #{dilated_window_attention.1} parent=11 // pred_region
        _
      $region24: #{dilated_window_attention.1} parent=11 // pred_fallthru
        _
      // Predicated region
      $region25: #{dilated_window_attention.1} parent=11 // pred_check
        %p313 = pneg %p179
      $region26: #{dilated_window_attention.1} parent=11 // pred_check_branch
        %315 = sbr.rel (%p313) target = $region28
      $region27: #{dilated_window_attention.1} parent=11 // pred_region
        _
      $region28: #{dilated_window_attention.1} parent=11 // pred_fallthru
        _
      // Predicated region
      $region29: #{dilated_window_attention.1} parent=11 // pred_check
        %p316 = pneg %p200
      $region30: #{dilated_window_attention.1} parent=11 // pred_check_branch
        %318 = sbr.rel (%p316) target = $region32
      $region31: #{dilated_window_attention.1} parent=11 // pred_region
        _
      $region32: #{dilated_window_attention.1} parent=11 // pred_fallthru
        _
      // Predicated region
      $region33: #{dilated_window_attention.1} parent=11 // pred_check
        %p319 = pneg %p221
      $region34: #{dilated_window_attention.1} parent=11 // pred_check_branch
        %321 = sbr.rel (%p319) target = $region36
      $region35: #{dilated_window_attention.1} parent=11 // pred_region
        _
      $region36: #{dilated_window_attention.1} parent=11 // pred_fallthru
        _
      // Predicated region
      $region37: #{dilated_window_attention.1} parent=11 // pred_check
        %p322 = pneg %p242
      $region38: #{dilated_window_attention.1} parent=11 // pred_check_branch
        %324 = sbr.rel (%p322) target = $region40
      $region39: #{dilated_window_attention.1} parent=11 // pred_region
        _
      $region40: #{dilated_window_attention.1} parent=11 // pred_fallthru
        _
      // Predicated region
      $region41: #{dilated_window_attention.1} parent=11 // pred_check
        %p325 = pneg %p263
      $region42: #{dilated_window_attention.1} parent=11 // pred_check_branch
        %327 = sbr.rel (%p325) target = $region44
      $region43: #{dilated_window_attention.1} parent=11 // pred_region
        _
      $region44: #{dilated_window_attention.1} parent=11 // pred_fallthru
        _
    $region12: #{dilated_window_attention.1} parent=5 // pred_fallthru
      _
    %p328 = scmp.lt.s32.totalorder %s17, 2
    // Predicated region
    $region45: #{dilated_window_attention.1} parent=5 // pred_check
      %p329 = pneg %p328
    $region46: #{dilated_window_attention.1} parent=5 // pred_check_branch
      %331 = sbr.rel (%p329) target = $region48
    $region47: #{dilated_window_attention.1} parent=5 // pred_region
      // Predicated region
      $region49: #{dilated_window_attention.1} parent=47 // pred_check
        %p332 = pneg %p37
      $region50: #{dilated_window_attention.1} parent=47 // pred_check_branch
        %334 = sbr.rel (%p332) target = $region52
      $region51: #{dilated_window_attention.1} parent=47 // pred_region
        %p335 = scmp.lt.s32.totalorder %s17, 1
        %s336 = scalar_select %p335, %s17, 1
        %s337 = smul.addr %s336, 8
        %s338 = smul.addr %s337, 8
        %s339 = scalar_lea.vmem %s0, %s338
      $region52: #{dilated_window_attention.1} parent=47 // pred_fallthru
        _
      // Predicated region
      $region53: #{dilated_window_attention.1} parent=47 // pred_check
        %p340 = pneg %p63
      $region54: #{dilated_window_attention.1} parent=47 // pred_check_branch
        %342 = sbr.rel (%p340) target = $region56
      $region55: #{dilated_window_attention.1} parent=47 // pred_region
        %p343 = scmp.lt.s32.totalorder %s17, 1
        %s344 = scalar_select %p343, %s17, 1
        %s345 = smul.addr %s344, 40
        %s346 = smul.addr %s345, 8
        %s347 = scalar_lea.vmem %s1, %s346
      $region56: #{dilated_window_attention.1} parent=47 // pred_fallthru
        _
      // Predicated region
      $region57: #{dilated_window_attention.1} parent=47 // pred_check
        %p348 = pneg %p89
      $region58: #{dilated_window_attention.1} parent=47 // pred_check_branch
        %350 = sbr.rel (%p348) target = $region60
      $region59: #{dilated_window_attention.1} parent=47 // pred_region
        %p351 = scmp.lt.s32.totalorder %s17, 1
        %s352 = scalar_select %p351, %s17, 1
        %s353 = smul.addr %s352, 40
        %s354 = smul.addr %s353, 8
        %s355 = scalar_lea.vmem %s2, %s354
      $region60: #{dilated_window_attention.1} parent=47 // pred_fallthru
        _
    $region48: #{dilated_window_attention.1} parent=5 // pred_fallthru
      _
    %p356 = scmp.le.s32.totalorder 1, %s17
    %p357 = scmp.lt.s32.totalorder %s17, 3
    %p358 = pnand %p356, %p357
    %p359 = pneg %p358
    // Predicated region
    $region61: #{dilated_window_attention.1} parent=5 // pred_check
      _
    $region62: #{dilated_window_attention.1} parent=5 // pred_check_branch
      %361 = sbr.rel (%p358) target = $region64
    $region63: #{dilated_window_attention.1} parent=5 // pred_region
      %s362 = ssub.s32 %s17, 1
      %p363 = scmp.lt.s32.totalorder %s22, 1
      %s364 = scalar_select %p363, %s22, 1
      %s365 = smul.addr %s364, 8
      %s366 = smul.addr %s365, 8
      %s367 = scalar_lea.vmem %s0, %s366
      %p368 = pneg %p43
      %p369 = pneg %p40
      %p370 = scmp.lt.s32.totalorder %s22, 1
      %s371 = scalar_select %p370, %s22, 1
      %s372 = smul.addr %s371, 40
      %s373 = smul.addr %s372, 8
      %s374 = scalar_lea.vmem %s1, %s373
      %p375 = pneg %p69
      %p376 = pneg %p66
      %p377 = scmp.lt.s32.totalorder %s22, 1
      %s378 = scalar_select %p377, %s22, 1
      %s379 = smul.addr %s378, 40
      %s380 = smul.addr %s379, 8
      %s381 = scalar_lea.vmem %s2, %s380
      %p382 = pneg %p95
      %p383 = pneg %p92
      %p384 = pneg %p116
      %p385 = pneg %p113
      %p386 = pneg %p137
      %p387 = pneg %p134
      %p388 = pneg %p158
      %p389 = pneg %p155
      %p390 = pneg %p179
      %p391 = pneg %p176
      %p392 = pneg %p200
      %p393 = pneg %p197
      %p394 = pneg %p221
      %p395 = pneg %p218
      %p396 = pneg %p242
      %p397 = pneg %p239
      %p398 = pneg %p263
      %p399 = pneg %p260
      %p400 = pneg %p289
      %p401 = pneg %p286
      %p402 = scmp.lt.s32.totalorder %s22, 1
      %s403 = scalar_select %p402, %s22, 1
      %s404 = smul.addr %s403, 8
      %s405 = smul.addr %s404, 8
      %s406 = scalar_lea.vmem %s11, %s405
      %p407 = scmp.lt.s32.totalorder %s22, 1
      %s408 = scalar_select %p407, %s22, 1
      %s409 = smul.addr %s408, 8
      %s410 = smul.addr %s409, 8
      %s411 = scalar_lea.vmem %s0, %s410
      %p412 = scmp.lt.s32.totalorder %s22, 1
      %s413 = scalar_select %p412, %s22, 1
      %s414 = smul.addr %s413, 40
      %s415 = smul.addr %s414, 8
      %s416 = scalar_lea.vmem %s1, %s415
      %p417 = scmp.lt.s32.totalorder %s22, 1
      %s418 = scalar_select %p417, %s22, 1
      %s419 = smul.addr %s418, 40
      %s420 = smul.addr %s419, 8
      %s421 = scalar_lea.vmem %s2, %s420
      %p422 = scmp.lt.s32.totalorder %s22, 1
      %s423 = scalar_select %p422, %s22, 1
      %s424 = smul.addr %s423, 8
      %s425 = smul.addr %s424, 8
      %s426 = scalar_lea.vmem %s11, %s425
      %v427 = vld [vmem:[%s411] sm:$0xff]
      %v428 = vld [vmem:[%s411 + $0x8] sm:$0xff]
      %v429 = vld [vmem:[%s411 + $0x10] sm:$0xff]
      %v430 = vld [vmem:[%s411 + $0x18] sm:$0xff]
      %v431 = vld [vmem:[%s411 + $0x20] sm:$0xff]
      %v432 = vld [vmem:[%s411 + $0x28] sm:$0xff]
      %v433 = vld [vmem:[%s411 + $0x30] sm:$0xff]
      %v434 = vld [vmem:[%s411 + $0x38] sm:$0xff]
      %v435 = vld [vmem:[%s3] sm:$0xff]
      %v436 = vld [vmem:[%s3 + $0x8] sm:$0xff]
      %v437 = vld [vmem:[%s3 + $0x10] sm:$0xff]
      %v438 = vld [vmem:[%s3 + $0x18] sm:$0xff]
      %v439 = vld [vmem:[%s4] sm:$0x1]
      %v441 = vperm.slane %v439, 0
      %vm443 = vcmask 261120
      %v445 = vsel %vm443, %v427, 0
      %v448 = vsel %vm443, %v428, 0
      %v451 = vsel %vm443, %v429, 0
      %v454 = vsel %vm443, %v430, 0
      %v457 = vsel %vm443, %v431, 0
      %v460 = vsel %vm443, %v432, 0
      %v463 = vsel %vm443, %v433, 0
      %v466 = vsel %vm443, %v434, 0
      %468 = vmatpush.msra.mxu0 0.0
      %469 = vmatpush.msra.mxu0 0.0
      %470 = vmatpush.msra.mxu0 0.0
      %471 = vmatpush.msra.mxu0 0.0
      %472 = vmatpush.msra.mxu0 0.0
      %473 = vmatpush.msra.mxu0 0.0
      %474 = vmatpush.msra.mxu0 0.0
      %475 = vmatpush.msra.mxu0 0.0
      %476 = vmatpush.msra.mxu0 0.0
      %477 = vmatpush.msra.mxu0 0.0
      %478 = vmatpush.msra.mxu0 0.0
      %479 = vmatpush.msra.mxu0 0.0
      %480 = vmatpush.msra.mxu0 %v438
      %481 = vmatpush.msra.mxu0 %v437
      %482 = vmatpush.msra.mxu0 %v436
      %483 = vmatpush.msra.mxu0 %v435
      %484 = vmatmul.f32.gmra.mxu0 %v445
      %v485 = vpop.f32.mrf.mxu0
      %v486 = vadd.f32 %v441, %v485
      %487 = vmatmul.f32.gmra.mxu0 %v448
      %v488 = vpop.f32.mrf.mxu0
      %v489 = vadd.f32 %v441, %v488
      %490 = vmatmul.f32.gmra.mxu0 %v451
      %v491 = vpop.f32.mrf.mxu0
      %v492 = vadd.f32 %v441, %v491
      %493 = vmatmul.f32.gmra.mxu0 %v454
      %v494 = vpop.f32.mrf.mxu0
      %v495 = vadd.f32 %v441, %v494
      %496 = vmatmul.f32.gmra.mxu0 %v457
      %v497 = vpop.f32.mrf.mxu0
      %v498 = vadd.f32 %v441, %v497
      %499 = vmatmul.f32.gmra.mxu0 %v460
      %v500 = vpop.f32.mrf.mxu0
      %v501 = vadd.f32 %v441, %v500
      %502 = vmatmul.f32.gmra.mxu0 %v463
      %v503 = vpop.f32.mrf.mxu0
      %v504 = vadd.f32 %v441, %v503
      %505 = vmatmul.f32.gmra.mxu0 %v466
      %v506 = vpop.f32.mrf.mxu0
      %v507 = vadd.f32 %v441, %v506
      %508 = vdwg.mxu0
      %v509 = vld [vmem:[%s5] sm:$0xff]
      %v510 = vld [vmem:[%s5 + $0x8] sm:$0xff]
      %v511 = vld [vmem:[%s5 + $0x10] sm:$0xff]
      %v512 = vld [vmem:[%s5 + $0x18] sm:$0xff]
      %v513 = vld [vmem:[%s5 + $0x20] sm:$0xff]
      %v514 = vld [vmem:[%s5 + $0x28] sm:$0xff]
      %v515 = vld [vmem:[%s5 + $0x30] sm:$0xff]
      %v516 = vld [vmem:[%s5 + $0x38] sm:$0xff]
      %v517 = vld [vmem:[%s5 + $0x40] sm:$0xff]
      %v518 = vld [vmem:[%s5 + $0x48] sm:$0xff]
      %v519 = vld [vmem:[%s5 + $0x50] sm:$0xff]
      %v520 = vld [vmem:[%s5 + $0x58] sm:$0xff]
      %v521 = vld [vmem:[%s5 + $0x60] sm:$0xff]
      %v522 = vld [vmem:[%s5 + $0x68] sm:$0xff]
      %v523 = vld [vmem:[%s5 + $0x70] sm:$0xff]
      %v524 = vld [vmem:[%s5 + $0x78] sm:$0xff]
      %v525 = vld [vmem:[%s5 + $0x80] sm:$0xff]
      %v526 = vld [vmem:[%s5 + $0x88] sm:$0xff]
      %v527 = vld [vmem:[%s5 + $0x90] sm:$0xff]
      %v528 = vld [vmem:[%s5 + $0x98] sm:$0xff]
      %v529 = vld [vmem:[%s5 + $0xa0] sm:$0xff]
      %v530 = vld [vmem:[%s5 + $0xa8] sm:$0xff]
      %v531 = vld [vmem:[%s5 + $0xb0] sm:$0xff]
      %v532 = vld [vmem:[%s5 + $0xb8] sm:$0xff]
      %v533 = vld [vmem:[%s5 + $0xc0] sm:$0xff]
      %v534 = vld [vmem:[%s5 + $0xc8] sm:$0xff]
      %v535 = vld [vmem:[%s5 + $0xd0] sm:$0xff]
      %v536 = vld [vmem:[%s5 + $0xd8] sm:$0xff]
      %v537 = vld [vmem:[%s5 + $0xe0] sm:$0xff]
      %v538 = vld [vmem:[%s5 + $0xe8] sm:$0xff]
      %v539 = vld [vmem:[%s5 + $0xf0] sm:$0xff]
      %v540 = vld [vmem:[%s5 + $0xf8] sm:$0xff]
      %v541 = vld [vmem:[%s5 + $0x100] sm:$0xff]
      %v542 = vld [vmem:[%s5 + $0x108] sm:$0xff]
      %v543 = vld [vmem:[%s5 + $0x110] sm:$0xff]
      %v544 = vld [vmem:[%s5 + $0x118] sm:$0xff]
      %v545 = vld [vmem:[%s5 + $0x120] sm:$0xff]
      %v546 = vld [vmem:[%s5 + $0x128] sm:$0xff]
      %v547 = vld [vmem:[%s5 + $0x130] sm:$0xff]
      %v548 = vld [vmem:[%s5 + $0x138] sm:$0xff]
      %v549 = vld [vmem:[%s5 + $0x140] sm:$0xff]
      %v550 = vld [vmem:[%s5 + $0x148] sm:$0xff]
      %v551 = vld [vmem:[%s5 + $0x150] sm:$0xff]
      %v552 = vld [vmem:[%s5 + $0x158] sm:$0xff]
      %v553 = vld [vmem:[%s5 + $0x160] sm:$0xff]
      %v554 = vld [vmem:[%s5 + $0x168] sm:$0xff]
      %v555 = vld [vmem:[%s5 + $0x170] sm:$0xff]
      %v556 = vld [vmem:[%s5 + $0x178] sm:$0xff]
      %v557 = vld [vmem:[%s5 + $0x180] sm:$0xff]
      %v558 = vld [vmem:[%s5 + $0x188] sm:$0xff]
      %v559 = vld [vmem:[%s5 + $0x190] sm:$0xff]
      %v560 = vld [vmem:[%s5 + $0x198] sm:$0xff]
      %v561 = vld [vmem:[%s5 + $0x1a0] sm:$0xff]
      %v562 = vld [vmem:[%s5 + $0x1a8] sm:$0xff]
      %v563 = vld [vmem:[%s5 + $0x1b0] sm:$0xff]
      %v564 = vld [vmem:[%s5 + $0x1b8] sm:$0xff]
      %v565 = vld [vmem:[%s5 + $0x1c0] sm:$0xff]
      %v566 = vld [vmem:[%s5 + $0x1c8] sm:$0xff]
      %v567 = vld [vmem:[%s5 + $0x1d0] sm:$0xff]
      %v568 = vld [vmem:[%s5 + $0x1d8] sm:$0xff]
      %v569 = vld [vmem:[%s5 + $0x1e0] sm:$0xff]
      %v570 = vld [vmem:[%s5 + $0x1e8] sm:$0xff]
      %v571 = vld [vmem:[%s5 + $0x1f0] sm:$0xff]
      %v572 = vld [vmem:[%s5 + $0x1f8] sm:$0xff]
      %v573 = vld [vmem:[%s5 + $0x200] sm:$0xff]
      %v574 = vld [vmem:[%s5 + $0x208] sm:$0xff]
      %v575 = vld [vmem:[%s5 + $0x210] sm:$0xff]
      %v576 = vld [vmem:[%s5 + $0x218] sm:$0xff]
      %v577 = vld [vmem:[%s5 + $0x220] sm:$0xff]
      %v578 = vld [vmem:[%s5 + $0x228] sm:$0xff]
      %v579 = vld [vmem:[%s5 + $0x230] sm:$0xff]
      %v580 = vld [vmem:[%s5 + $0x238] sm:$0xff]
      %v581 = vld [vmem:[%s416] sm:$0xff]
      %v582 = vld [vmem:[%s416 + $0x8] sm:$0xff]
      %v583 = vld [vmem:[%s416 + $0x10] sm:$0xff]
      %v584 = vld [vmem:[%s416 + $0x18] sm:$0xff]
      %v585 = vld [vmem:[%s416 + $0x20] sm:$0xff]
      %v586 = vld [vmem:[%s416 + $0x28] sm:$0xff]
      %v587 = vld [vmem:[%s416 + $0x30] sm:$0xff]
      %v588 = vld [vmem:[%s416 + $0x38] sm:$0xff]
      %v589 = vld [vmem:[%s416 + $0x40] sm:$0xff]
      %v590 = vld [vmem:[%s416 + $0x48] sm:$0xff]
      %v591 = vld [vmem:[%s421] sm:$0xff]
      %v592 = vld [vmem:[%s421 + $0x8] sm:$0xff]
      %v593 = vld [vmem:[%s421 + $0x10] sm:$0xff]
      %v594 = vld [vmem:[%s421 + $0x18] sm:$0xff]
      %v595 = vld [vmem:[%s421 + $0x20] sm:$0xff]
      %v596 = vld [vmem:[%s421 + $0x28] sm:$0xff]
      %v597 = vld [vmem:[%s421 + $0x30] sm:$0xff]
      %v598 = vld [vmem:[%s421 + $0x38] sm:$0xff]
      %v599 = vld [vmem:[%s421 + $0x40] sm:$0xff]
      %v600 = vld [vmem:[%s421 + $0x48] sm:$0xff]
      %vm601 = vcmask 523264
      %v603 = vsel %vm601, %v585, 0
      %v606 = vsel %vm601, %v590, 0
      %608 = vmatpush.msra.mxu0 %v524
      %609 = vmatpush.msra.mxu0 %v523
      %610 = vmatpush.msra.mxu0 %v522
      %611 = vmatpush.msra.mxu0 %v521
      %612 = vmatpush.msra.mxu0 %v520
      %613 = vmatpush.msra.mxu0 %v519
      %614 = vmatpush.msra.mxu0 %v518
      %615 = vmatpush.msra.mxu0 %v517
      %616 = vmatpush.msra.mxu0 %v516
      %617 = vmatpush.msra.mxu0 %v515
      %618 = vmatpush.msra.mxu0 %v514
      %619 = vmatpush.msra.mxu0 %v513
      %620 = vmatpush.msra.mxu0 %v512
      %621 = vmatpush.msra.mxu0 %v511
      %622 = vmatpush.msra.mxu0 %v510
      %623 = vmatpush.msra.mxu0 %v509
      %624 = vmatmul.f32.gmra.mxu0 %v581
      %v625 = vpop.f32.mrf.mxu0
      %v626 = vadd.f32 0.0, %v625
      %627 = vmatmul.f32.gmra.mxu0 %v586
      %v628 = vpop.f32.mrf.mxu0
      %v629 = vadd.f32 0.0, %v628
      %630 = vdwg.mxu0
      %631 = vmatpush.msra.mxu0 %v540
      %632 = vmatpush.msra.mxu0 %v539
      %633 = vmatpush.msra.mxu0 %v538
      %634 = vmatpush.msra.mxu0 %v537
      %635 = vmatpush.msra.mxu0 %v536
      %636 = vmatpush.msra.mxu0 %v535
      %637 = vmatpush.msra.mxu0 %v534
      %638 = vmatpush.msra.mxu0 %v533
      %639 = vmatpush.msra.mxu0 %v532
      %640 = vmatpush.msra.mxu0 %v531
      %641 = vmatpush.msra.mxu0 %v530
      %642 = vmatpush.msra.mxu0 %v529
      %643 = vmatpush.msra.mxu0 %v528
      %644 = vmatpush.msra.mxu0 %v527
      %645 = vmatpush.msra.mxu0 %v526
      %646 = vmatpush.msra.mxu0 %v525
      %647 = vmatmul.f32.gmra.mxu0 %v582
      %v648 = vpop.f32.mrf.mxu0
      %v649 = vadd.f32 %v626, %v648
      %650 = vmatmul.f32.gmra.mxu0 %v587
      %v651 = vpop.f32.mrf.mxu0
      %v652 = vadd.f32 %v629, %v651
      %653 = vdwg.mxu0
      %654 = vmatpush.msra.mxu0 %v556
      %655 = vmatpush.msra.mxu0 %v555
      %656 = vmatpush.msra.mxu0 %v554
      %657 = vmatpush.msra.mxu0 %v553
      %658 = vmatpush.msra.mxu0 %v552
      %659 = vmatpush.msra.mxu0 %v551
      %660 = vmatpush.msra.mxu0 %v550
      %661 = vmatpush.msra.mxu0 %v549
      %662 = vmatpush.msra.mxu0 %v548
      %663 = vmatpush.msra.mxu0 %v547
      %664 = vmatpush.msra.mxu0 %v546
      %665 = vmatpush.msra.mxu0 %v545
      %666 = vmatpush.msra.mxu0 %v544
      %667 = vmatpush.msra.mxu0 %v543
      %668 = vmatpush.msra.mxu0 %v542
      %669 = vmatpush.msra.mxu0 %v541
      %670 = vmatmul.f32.gmra.mxu0 %v583
      %v671 = vpop.f32.mrf.mxu0
      %v672 = vadd.f32 %v649, %v671
      %673 = vmatmul.f32.gmra.mxu0 %v588
      %v674 = vpop.f32.mrf.mxu0
      %v675 = vadd.f32 %v652, %v674
      %676 = vdwg.mxu0
      %677 = vmatpush.msra.mxu0 %v572
      %678 = vmatpush.msra.mxu0 %v571
      %679 = vmatpush.msra.mxu0 %v570
      %680 = vmatpush.msra.mxu0 %v569
      %681 = vmatpush.msra.mxu0 %v568
      %682 = vmatpush.msra.mxu0 %v567
      %683 = vmatpush.msra.mxu0 %v566
      %684 = vmatpush.msra.mxu0 %v565
      %685 = vmatpush.msra.mxu0 %v564
      %686 = vmatpush.msra.mxu0 %v563
      %687 = vmatpush.msra.mxu0 %v562
      %688 = vmatpush.msra.mxu0 %v561
      %689 = vmatpush.msra.mxu0 %v560
      %690 = vmatpush.msra.mxu0 %v559
      %691 = vmatpush.msra.mxu0 %v558
      %692 = vmatpush.msra.mxu0 %v557
      %693 = vmatmul.f32.gmra.mxu0 %v584
      %v694 = vpop.f32.mrf.mxu0
      %v695 = vadd.f32 %v672, %v694
      %696 = vmatmul.f32.gmra.mxu0 %v589
      %v697 = vpop.f32.mrf.mxu0
      %v698 = vadd.f32 %v675, %v697
      %699 = vdwg.mxu0
      %700 = vmatpush.msra.mxu0 0.0
      %701 = vmatpush.msra.mxu0 0.0
      %702 = vmatpush.msra.mxu0 0.0
      %703 = vmatpush.msra.mxu0 0.0
      %704 = vmatpush.msra.mxu0 0.0
      %705 = vmatpush.msra.mxu0 0.0
      %706 = vmatpush.msra.mxu0 0.0
      %707 = vmatpush.msra.mxu0 0.0
      %708 = vmatpush.msra.mxu0 %v580
      %709 = vmatpush.msra.mxu0 %v579
      %710 = vmatpush.msra.mxu0 %v578
      %711 = vmatpush.msra.mxu0 %v577
      %712 = vmatpush.msra.mxu0 %v576
      %713 = vmatpush.msra.mxu0 %v575
      %714 = vmatpush.msra.mxu0 %v574
      %715 = vmatpush.msra.mxu0 %v573
      %716 = vmatmul.f32.gmra.mxu0 %v603
      %v717 = vpop.f32.mrf.mxu0
      %v718 = vadd.f32 %v695, %v717
      %719 = vmatmul.f32.gmra.mxu0 %v606
      %v720 = vpop.f32.mrf.mxu0
      %v721 = vadd.f32 %v698, %v720
      %722 = vdwg.mxu0
      %v724 = vsel %vm601, %v595, 0
      %v727 = vsel %vm601, %v600, 0
      %729 = vmatpush.msra.mxu0 %v524
      %730 = vmatpush.msra.mxu0 %v523
      %731 = vmatpush.msra.mxu0 %v522
      %732 = vmatpush.msra.mxu0 %v521
      %733 = vmatpush.msra.mxu0 %v520
      %734 = vmatpush.msra.mxu0 %v519
      %735 = vmatpush.msra.mxu0 %v518
      %736 = vmatpush.msra.mxu0 %v517
      %737 = vmatpush.msra.mxu0 %v516
      %738 = vmatpush.msra.mxu0 %v515
      %739 = vmatpush.msra.mxu0 %v514
      %740 = vmatpush.msra.mxu0 %v513
      %741 = vmatpush.msra.mxu0 %v512
      %742 = vmatpush.msra.mxu0 %v511
      %743 = vmatpush.msra.mxu0 %v510
      %744 = vmatpush.msra.mxu0 %v509
      %745 = vmatmul.f32.gmra.mxu0 %v591
      %v746 = vpop.f32.mrf.mxu0
      %v747 = vadd.f32 0.0, %v746
      %748 = vmatmul.f32.gmra.mxu0 %v596
      %v749 = vpop.f32.mrf.mxu0
      %v750 = vadd.f32 0.0, %v749
      %751 = vdwg.mxu0
      %752 = vmatpush.msra.mxu0 %v540
      %753 = vmatpush.msra.mxu0 %v539
      %754 = vmatpush.msra.mxu0 %v538
      %755 = vmatpush.msra.mxu0 %v537
      %756 = vmatpush.msra.mxu0 %v536
      %757 = vmatpush.msra.mxu0 %v535
      %758 = vmatpush.msra.mxu0 %v534
      %759 = vmatpush.msra.mxu0 %v533
      %760 = vmatpush.msra.mxu0 %v532
      %761 = vmatpush.msra.mxu0 %v531
      %762 = vmatpush.msra.mxu0 %v530
      %763 = vmatpush.msra.mxu0 %v529
      %764 = vmatpush.msra.mxu0 %v528
      %765 = vmatpush.msra.mxu0 %v527
      %766 = vmatpush.msra.mxu0 %v526
      %767 = vmatpush.msra.mxu0 %v525
      %768 = vmatmul.f32.gmra.mxu0 %v592
      %v769 = vpop.f32.mrf.mxu0
      %v770 = vadd.f32 %v747, %v769
      %771 = vmatmul.f32.gmra.mxu0 %v597
      %v772 = vpop.f32.mrf.mxu0
      %v773 = vadd.f32 %v750, %v772
      %774 = vdwg.mxu0
      %775 = vmatpush.msra.mxu0 %v556
      %776 = vmatpush.msra.mxu0 %v555
      %777 = vmatpush.msra.mxu0 %v554
      %778 = vmatpush.msra.mxu0 %v553
      %779 = vmatpush.msra.mxu0 %v552
      %780 = vmatpush.msra.mxu0 %v551
      %781 = vmatpush.msra.mxu0 %v550
      %782 = vmatpush.msra.mxu0 %v549
      %783 = vmatpush.msra.mxu0 %v548
      %784 = vmatpush.msra.mxu0 %v547
      %785 = vmatpush.msra.mxu0 %v546
      %786 = vmatpush.msra.mxu0 %v545
      %787 = vmatpush.msra.mxu0 %v544
      %788 = vmatpush.msra.mxu0 %v543
      %789 = vmatpush.msra.mxu0 %v542
      %790 = vmatpush.msra.mxu0 %v541
      %791 = vmatmul.f32.gmra.mxu0 %v593
      %v792 = vpop.f32.mrf.mxu0
      %v793 = vadd.f32 %v770, %v792
      %794 = vmatmul.f32.gmra.mxu0 %v598
      %v795 = vpop.f32.mrf.mxu0
      %v796 = vadd.f32 %v773, %v795
      %797 = vdwg.mxu0
      %798 = vmatpush.msra.mxu0 %v572
      %799 = vmatpush.msra.mxu0 %v571
      %800 = vmatpush.msra.mxu0 %v570
      %801 = vmatpush.msra.mxu0 %v569
      %802 = vmatpush.msra.mxu0 %v568
      %803 = vmatpush.msra.mxu0 %v567
      %804 = vmatpush.msra.mxu0 %v566
      %805 = vmatpush.msra.mxu0 %v565
      %806 = vmatpush.msra.mxu0 %v564
      %807 = vmatpush.msra.mxu0 %v563
      %808 = vmatpush.msra.mxu0 %v562
      %809 = vmatpush.msra.mxu0 %v561
      %810 = vmatpush.msra.mxu0 %v560
      %811 = vmatpush.msra.mxu0 %v559
      %812 = vmatpush.msra.mxu0 %v558
      %813 = vmatpush.msra.mxu0 %v557
      %814 = vmatmul.f32.gmra.mxu0 %v594
      %v815 = vpop.f32.mrf.mxu0
      %v816 = vadd.f32 %v793, %v815
      %817 = vmatmul.f32.gmra.mxu0 %v599
      %v818 = vpop.f32.mrf.mxu0
      %v819 = vadd.f32 %v796, %v818
      %820 = vdwg.mxu0
      %821 = vmatpush.msra.mxu0 0.0
      %822 = vmatpush.msra.mxu0 0.0
      %823 = vmatpush.msra.mxu0 0.0
      %824 = vmatpush.msra.mxu0 0.0
      %825 = vmatpush.msra.mxu0 0.0
      %826 = vmatpush.msra.mxu0 0.0
      %827 = vmatpush.msra.mxu0 0.0
      %828 = vmatpush.msra.mxu0 0.0
      %829 = vmatpush.msra.mxu0 %v580
      %830 = vmatpush.msra.mxu0 %v579
      %831 = vmatpush.msra.mxu0 %v578
      %832 = vmatpush.msra.mxu0 %v577
      %833 = vmatpush.msra.mxu0 %v576
      %834 = vmatpush.msra.mxu0 %v575
      %835 = vmatpush.msra.mxu0 %v574
      %836 = vmatpush.msra.mxu0 %v573
      %837 = vmatmul.f32.gmra.mxu0 %v724
      %v838 = vpop.f32.mrf.mxu0
      %v839 = vadd.f32 %v816, %v838
      %840 = vmatmul.f32.gmra.mxu0 %v727
      %v841 = vpop.f32.mrf.mxu0
      %v842 = vadd.f32 %v819, %v841
      %843 = vdwg.mxu0
      %s844 = scalar_lea.vmem %s5, 576
      %v845 = vld [vmem:[%s844] sm:$0xff]
      %v846 = vld [vmem:[%s844 + $0x8] sm:$0xff]
      %v847 = vld [vmem:[%s844 + $0x10] sm:$0xff]
      %v848 = vld [vmem:[%s844 + $0x18] sm:$0xff]
      %v849 = vld [vmem:[%s844 + $0x20] sm:$0xff]
      %v850 = vld [vmem:[%s844 + $0x28] sm:$0xff]
      %v851 = vld [vmem:[%s844 + $0x30] sm:$0xff]
      %v852 = vld [vmem:[%s844 + $0x38] sm:$0xff]
      %v853 = vld [vmem:[%s844 + $0x40] sm:$0xff]
      %v854 = vld [vmem:[%s844 + $0x48] sm:$0xff]
      %v855 = vld [vmem:[%s844 + $0x50] sm:$0xff]
      %v856 = vld [vmem:[%s844 + $0x58] sm:$0xff]
      %v857 = vld [vmem:[%s844 + $0x60] sm:$0xff]
      %v858 = vld [vmem:[%s844 + $0x68] sm:$0xff]
      %v859 = vld [vmem:[%s844 + $0x70] sm:$0xff]
      %v860 = vld [vmem:[%s844 + $0x78] sm:$0xff]
      %v861 = vld [vmem:[%s844 + $0x80] sm:$0xff]
      %v862 = vld [vmem:[%s844 + $0x88] sm:$0xff]
      %v863 = vld [vmem:[%s844 + $0x90] sm:$0xff]
      %v864 = vld [vmem:[%s844 + $0x98] sm:$0xff]
      %v865 = vld [vmem:[%s844 + $0xa0] sm:$0xff]
      %v866 = vld [vmem:[%s844 + $0xa8] sm:$0xff]
      %v867 = vld [vmem:[%s844 + $0xb0] sm:$0xff]
      %v868 = vld [vmem:[%s844 + $0xb8] sm:$0xff]
      %v869 = vld [vmem:[%s844 + $0xc0] sm:$0xff]
      %v870 = vld [vmem:[%s844 + $0xc8] sm:$0xff]
      %v871 = vld [vmem:[%s844 + $0xd0] sm:$0xff]
      %v872 = vld [vmem:[%s844 + $0xd8] sm:$0xff]
      %v873 = vld [vmem:[%s844 + $0xe0] sm:$0xff]
      %v874 = vld [vmem:[%s844 + $0xe8] sm:$0xff]
      %v875 = vld [vmem:[%s844 + $0xf0] sm:$0xff]
      %v876 = vld [vmem:[%s844 + $0xf8] sm:$0xff]
      %v877 = vld [vmem:[%s844 + $0x100] sm:$0xff]
      %v878 = vld [vmem:[%s844 + $0x108] sm:$0xff]
      %v879 = vld [vmem:[%s844 + $0x110] sm:$0xff]
      %v880 = vld [vmem:[%s844 + $0x118] sm:$0xff]
      %v881 = vld [vmem:[%s844 + $0x120] sm:$0xff]
      %v882 = vld [vmem:[%s844 + $0x128] sm:$0xff]
      %v883 = vld [vmem:[%s844 + $0x130] sm:$0xff]
      %v884 = vld [vmem:[%s844 + $0x138] sm:$0xff]
      %v885 = vld [vmem:[%s844 + $0x140] sm:$0xff]
      %v886 = vld [vmem:[%s844 + $0x148] sm:$0xff]
      %v887 = vld [vmem:[%s844 + $0x150] sm:$0xff]
      %v888 = vld [vmem:[%s844 + $0x158] sm:$0xff]
      %v889 = vld [vmem:[%s844 + $0x160] sm:$0xff]
      %v890 = vld [vmem:[%s844 + $0x168] sm:$0xff]
      %v891 = vld [vmem:[%s844 + $0x170] sm:$0xff]
      %v892 = vld [vmem:[%s844 + $0x178] sm:$0xff]
      %v893 = vld [vmem:[%s844 + $0x180] sm:$0xff]
      %v894 = vld [vmem:[%s844 + $0x188] sm:$0xff]
      %v895 = vld [vmem:[%s844 + $0x190] sm:$0xff]
      %v896 = vld [vmem:[%s844 + $0x198] sm:$0xff]
      %v897 = vld [vmem:[%s844 + $0x1a0] sm:$0xff]
      %v898 = vld [vmem:[%s844 + $0x1a8] sm:$0xff]
      %v899 = vld [vmem:[%s844 + $0x1b0] sm:$0xff]
      %v900 = vld [vmem:[%s844 + $0x1b8] sm:$0xff]
      %v901 = vld [vmem:[%s844 + $0x1c0] sm:$0xff]
      %v902 = vld [vmem:[%s844 + $0x1c8] sm:$0xff]
      %v903 = vld [vmem:[%s844 + $0x1d0] sm:$0xff]
      %v904 = vld [vmem:[%s844 + $0x1d8] sm:$0xff]
      %v905 = vld [vmem:[%s844 + $0x1e0] sm:$0xff]
      %v906 = vld [vmem:[%s844 + $0x1e8] sm:$0xff]
      %v907 = vld [vmem:[%s844 + $0x1f0] sm:$0xff]
      %v908 = vld [vmem:[%s844 + $0x1f8] sm:$0xff]
      %v909 = vld [vmem:[%s844 + $0x200] sm:$0xff]
      %v910 = vld [vmem:[%s844 + $0x208] sm:$0xff]
      %v911 = vld [vmem:[%s844 + $0x210] sm:$0xff]
      %v912 = vld [vmem:[%s844 + $0x218] sm:$0xff]
      %v913 = vld [vmem:[%s844 + $0x220] sm:$0xff]
      %v914 = vld [vmem:[%s844 + $0x228] sm:$0xff]
      %v915 = vld [vmem:[%s844 + $0x230] sm:$0xff]
      %v916 = vld [vmem:[%s844 + $0x238] sm:$0xff]
      %v917 = vld [vmem:[%s416 + $0x50] sm:$0xff]
      %v918 = vld [vmem:[%s416 + $0x58] sm:$0xff]
      %v919 = vld [vmem:[%s416 + $0x60] sm:$0xff]
      %v920 = vld [vmem:[%s416 + $0x68] sm:$0xff]
      %v921 = vld [vmem:[%s416 + $0x70] sm:$0xff]
      %v922 = vld [vmem:[%s416 + $0x78] sm:$0xff]
      %v923 = vld [vmem:[%s416 + $0x80] sm:$0xff]
      %v924 = vld [vmem:[%s416 + $0x88] sm:$0xff]
      %v925 = vld [vmem:[%s416 + $0x90] sm:$0xff]
      %v926 = vld [vmem:[%s416 + $0x98] sm:$0xff]
      %v927 = vld [vmem:[%s421 + $0x50] sm:$0xff]
      %v928 = vld [vmem:[%s421 + $0x58] sm:$0xff]
      %v929 = vld [vmem:[%s421 + $0x60] sm:$0xff]
      %v930 = vld [vmem:[%s421 + $0x68] sm:$0xff]
      %v931 = vld [vmem:[%s421 + $0x70] sm:$0xff]
      %v932 = vld [vmem:[%s421 + $0x78] sm:$0xff]
      %v933 = vld [vmem:[%s421 + $0x80] sm:$0xff]
      %v934 = vld [vmem:[%s421 + $0x88] sm:$0xff]
      %v935 = vld [vmem:[%s421 + $0x90] sm:$0xff]
      %v936 = vld [vmem:[%s421 + $0x98] sm:$0xff]
      %v938 = vsel %vm601, %v921, 0
      %v941 = vsel %vm601, %v926, 0
      %943 = vmatpush.msra.mxu0 %v860
      %944 = vmatpush.msra.mxu0 %v859
      %945 = vmatpush.msra.mxu0 %v858
      %946 = vmatpush.msra.mxu0 %v857
      %947 = vmatpush.msra.mxu0 %v856
      %948 = vmatpush.msra.mxu0 %v855
      %949 = vmatpush.msra.mxu0 %v854
      %950 = vmatpush.msra.mxu0 %v853
      %951 = vmatpush.msra.mxu0 %v852
      %952 = vmatpush.msra.mxu0 %v851
      %953 = vmatpush.msra.mxu0 %v850
      %954 = vmatpush.msra.mxu0 %v849
      %955 = vmatpush.msra.mxu0 %v848
      %956 = vmatpush.msra.mxu0 %v847
      %957 = vmatpush.msra.mxu0 %v846
      %958 = vmatpush.msra.mxu0 %v845
      %959 = vmatmul.f32.gmra.mxu0 %v917
      %v960 = vpop.f32.mrf.mxu0
      %v961 = vadd.f32 0.0, %v960
      %962 = vmatmul.f32.gmra.mxu0 %v922
      %v963 = vpop.f32.mrf.mxu0
      %v964 = vadd.f32 0.0, %v963
      %965 = vdwg.mxu0
      %966 = vmatpush.msra.mxu0 %v876
      %967 = vmatpush.msra.mxu0 %v875
      %968 = vmatpush.msra.mxu0 %v874
      %969 = vmatpush.msra.mxu0 %v873
      %970 = vmatpush.msra.mxu0 %v872
      %971 = vmatpush.msra.mxu0 %v871
      %972 = vmatpush.msra.mxu0 %v870
      %973 = vmatpush.msra.mxu0 %v869
      %974 = vmatpush.msra.mxu0 %v868
      %975 = vmatpush.msra.mxu0 %v867
      %976 = vmatpush.msra.mxu0 %v866
      %977 = vmatpush.msra.mxu0 %v865
      %978 = vmatpush.msra.mxu0 %v864
      %979 = vmatpush.msra.mxu0 %v863
      %980 = vmatpush.msra.mxu0 %v862
      %981 = vmatpush.msra.mxu0 %v861
      %982 = vmatmul.f32.gmra.mxu0 %v918
      %v983 = vpop.f32.mrf.mxu0
      %v984 = vadd.f32 %v961, %v983
      %985 = vmatmul.f32.gmra.mxu0 %v923
      %v986 = vpop.f32.mrf.mxu0
      %v987 = vadd.f32 %v964, %v986
      %988 = vdwg.mxu0
      %989 = vmatpush.msra.mxu0 %v892
      %990 = vmatpush.msra.mxu0 %v891
      %991 = vmatpush.msra.mxu0 %v890
      %992 = vmatpush.msra.mxu0 %v889
      %993 = vmatpush.msra.mxu0 %v888
      %994 = vmatpush.msra.mxu0 %v887
      %995 = vmatpush.msra.mxu0 %v886
      %996 = vmatpush.msra.mxu0 %v885
      %997 = vmatpush.msra.mxu0 %v884
      %998 = vmatpush.msra.mxu0 %v883
      %999 = vmatpush.msra.mxu0 %v882
      %1000 = vmatpush.msra.mxu0 %v881
      %1001 = vmatpush.msra.mxu0 %v880
      %1002 = vmatpush.msra.mxu0 %v879
      %1003 = vmatpush.msra.mxu0 %v878
      %1004 = vmatpush.msra.mxu0 %v877
      %1005 = vmatmul.f32.gmra.mxu0 %v919
      %v1006 = vpop.f32.mrf.mxu0
      %v1007 = vadd.f32 %v984, %v1006
      %1008 = vmatmul.f32.gmra.mxu0 %v924
      %v1009 = vpop.f32.mrf.mxu0
      %v1010 = vadd.f32 %v987, %v1009
      %1011 = vdwg.mxu0
      %1012 = vmatpush.msra.mxu0 %v908
      %1013 = vmatpush.msra.mxu0 %v907
      %1014 = vmatpush.msra.mxu0 %v906
      %1015 = vmatpush.msra.mxu0 %v905
      %1016 = vmatpush.msra.mxu0 %v904
      %1017 = vmatpush.msra.mxu0 %v903
      %1018 = vmatpush.msra.mxu0 %v902
      %1019 = vmatpush.msra.mxu0 %v901
      %1020 = vmatpush.msra.mxu0 %v900
      %1021 = vmatpush.msra.mxu0 %v899
      %1022 = vmatpush.msra.mxu0 %v898
      %1023 = vmatpush.msra.mxu0 %v897
      %1024 = vmatpush.msra.mxu0 %v896
      %1025 = vmatpush.msra.mxu0 %v895
      %1026 = vmatpush.msra.mxu0 %v894
      %1027 = vmatpush.msra.mxu0 %v893
      %1028 = vmatmul.f32.gmra.mxu0 %v920
      %v1029 = vpop.f32.mrf.mxu0
      %v1030 = vadd.f32 %v1007, %v1029
      %1031 = vmatmul.f32.gmra.mxu0 %v925
      %v1032 = vpop.f32.mrf.mxu0
      %v1033 = vadd.f32 %v1010, %v1032
      %1034 = vdwg.mxu0
      %1035 = vmatpush.msra.mxu0 0.0
      %1036 = vmatpush.msra.mxu0 0.0
      %1037 = vmatpush.msra.mxu0 0.0
      %1038 = vmatpush.msra.mxu0 0.0
      %1039 = vmatpush.msra.mxu0 0.0
      %1040 = vmatpush.msra.mxu0 0.0
      %1041 = vmatpush.msra.mxu0 0.0
      %1042 = vmatpush.msra.mxu0 0.0
      %1043 = vmatpush.msra.mxu0 %v916
      %1044 = vmatpush.msra.mxu0 %v915
      %1045 = vmatpush.msra.mxu0 %v914
      %1046 = vmatpush.msra.mxu0 %v913
      %1047 = vmatpush.msra.mxu0 %v912
      %1048 = vmatpush.msra.mxu0 %v911
      %1049 = vmatpush.msra.mxu0 %v910
      %1050 = vmatpush.msra.mxu0 %v909
      %1051 = vmatmul.f32.gmra.mxu0 %v938
      %v1052 = vpop.f32.mrf.mxu0
      %v1053 = vadd.f32 %v1030, %v1052
      %1054 = vmatmul.f32.gmra.mxu0 %v941
      %v1055 = vpop.f32.mrf.mxu0
      %v1056 = vadd.f32 %v1033, %v1055
      %1057 = vdwg.mxu0
      %v1059 = vsel %vm601, %v931, 0
      %v1062 = vsel %vm601, %v936, 0
      %1064 = vmatpush.msra.mxu0 %v860
      %1065 = vmatpush.msra.mxu0 %v859
      %1066 = vmatpush.msra.mxu0 %v858
      %1067 = vmatpush.msra.mxu0 %v857
      %1068 = vmatpush.msra.mxu0 %v856
      %1069 = vmatpush.msra.mxu0 %v855
      %1070 = vmatpush.msra.mxu0 %v854
      %1071 = vmatpush.msra.mxu0 %v853
      %1072 = vmatpush.msra.mxu0 %v852
      %1073 = vmatpush.msra.mxu0 %v851
      %1074 = vmatpush.msra.mxu0 %v850
      %1075 = vmatpush.msra.mxu0 %v849
      %1076 = vmatpush.msra.mxu0 %v848
      %1077 = vmatpush.msra.mxu0 %v847
      %1078 = vmatpush.msra.mxu0 %v846
      %1079 = vmatpush.msra.mxu0 %v845
      %1080 = vmatmul.f32.gmra.mxu0 %v927
      %v1081 = vpop.f32.mrf.mxu0
      %v1082 = vadd.f32 0.0, %v1081
      %1083 = vmatmul.f32.gmra.mxu0 %v932
      %v1084 = vpop.f32.mrf.mxu0
      %v1085 = vadd.f32 0.0, %v1084
      %1086 = vdwg.mxu0
      %1087 = vmatpush.msra.mxu0 %v876
      %1088 = vmatpush.msra.mxu0 %v875
      %1089 = vmatpush.msra.mxu0 %v874
      %1090 = vmatpush.msra.mxu0 %v873
      %1091 = vmatpush.msra.mxu0 %v872
      %1092 = vmatpush.msra.mxu0 %v871
      %1093 = vmatpush.msra.mxu0 %v870
      %1094 = vmatpush.msra.mxu0 %v869
      %1095 = vmatpush.msra.mxu0 %v868
      %1096 = vmatpush.msra.mxu0 %v867
      %1097 = vmatpush.msra.mxu0 %v866
      %1098 = vmatpush.msra.mxu0 %v865
      %1099 = vmatpush.msra.mxu0 %v864
      %1100 = vmatpush.msra.mxu0 %v863
      %1101 = vmatpush.msra.mxu0 %v862
      %1102 = vmatpush.msra.mxu0 %v861
      %1103 = vmatmul.f32.gmra.mxu0 %v928
      %v1104 = vpop.f32.mrf.mxu0
      %v1105 = vadd.f32 %v1082, %v1104
      %1106 = vmatmul.f32.gmra.mxu0 %v933
      %v1107 = vpop.f32.mrf.mxu0
      %v1108 = vadd.f32 %v1085, %v1107
      %1109 = vdwg.mxu0
      %1110 = vmatpush.msra.mxu0 %v892
      %1111 = vmatpush.msra.mxu0 %v891
      %1112 = vmatpush.msra.mxu0 %v890
      %1113 = vmatpush.msra.mxu0 %v889
      %1114 = vmatpush.msra.mxu0 %v888
      %1115 = vmatpush.msra.mxu0 %v887
      %1116 = vmatpush.msra.mxu0 %v886
      %1117 = vmatpush.msra.mxu0 %v885
      %1118 = vmatpush.msra.mxu0 %v884
      %1119 = vmatpush.msra.mxu0 %v883
      %1120 = vmatpush.msra.mxu0 %v882
      %1121 = vmatpush.msra.mxu0 %v881
      %1122 = vmatpush.msra.mxu0 %v880
      %1123 = vmatpush.msra.mxu0 %v879
      %1124 = vmatpush.msra.mxu0 %v878
      %1125 = vmatpush.msra.mxu0 %v877
      %1126 = vmatmul.f32.gmra.mxu0 %v929
      %v1127 = vpop.f32.mrf.mxu0
      %v1128 = vadd.f32 %v1105, %v1127
      %1129 = vmatmul.f32.gmra.mxu0 %v934
      %v1130 = vpop.f32.mrf.mxu0
      %v1131 = vadd.f32 %v1108, %v1130
      %1132 = vdwg.mxu0
      %1133 = vmatpush.msra.mxu0 %v908
      %1134 = vmatpush.msra.mxu0 %v907
      %1135 = vmatpush.msra.mxu0 %v906
      %1136 = vmatpush.msra.mxu0 %v905
      %1137 = vmatpush.msra.mxu0 %v904
      %1138 = vmatpush.msra.mxu0 %v903
      %1139 = vmatpush.msra.mxu0 %v902
      %1140 = vmatpush.msra.mxu0 %v901
      %1141 = vmatpush.msra.mxu0 %v900
      %1142 = vmatpush.msra.mxu0 %v899
      %1143 = vmatpush.msra.mxu0 %v898
      %1144 = vmatpush.msra.mxu0 %v897
      %1145 = vmatpush.msra.mxu0 %v896
      %1146 = vmatpush.msra.mxu0 %v895
      %1147 = vmatpush.msra.mxu0 %v894
      %1148 = vmatpush.msra.mxu0 %v893
      %1149 = vmatmul.f32.gmra.mxu0 %v930
      %v1150 = vpop.f32.mrf.mxu0
      %v1151 = vadd.f32 %v1128, %v1150
      %1152 = vmatmul.f32.gmra.mxu0 %v935
      %v1153 = vpop.f32.mrf.mxu0
      %v1154 = vadd.f32 %v1131, %v1153
      %1155 = vdwg.mxu0
      %1156 = vmatpush.msra.mxu0 0.0
      %1157 = vmatpush.msra.mxu0 0.0
      %1158 = vmatpush.msra.mxu0 0.0
      %1159 = vmatpush.msra.mxu0 0.0
      %1160 = vmatpush.msra.mxu0 0.0
      %1161 = vmatpush.msra.mxu0 0.0
      %1162 = vmatpush.msra.mxu0 0.0
      %1163 = vmatpush.msra.mxu0 0.0
      %1164 = vmatpush.msra.mxu0 %v916
      %1165 = vmatpush.msra.mxu0 %v915
      %1166 = vmatpush.msra.mxu0 %v914
      %1167 = vmatpush.msra.mxu0 %v913
      %1168 = vmatpush.msra.mxu0 %v912
      %1169 = vmatpush.msra.mxu0 %v911
      %1170 = vmatpush.msra.mxu0 %v910
      %1171 = vmatpush.msra.mxu0 %v909
      %1172 = vmatmul.f32.gmra.mxu0 %v1059
      %v1173 = vpop.f32.mrf.mxu0
      %v1174 = vadd.f32 %v1151, %v1173
      %1175 = vmatmul.f32.gmra.mxu0 %v1062
      %v1176 = vpop.f32.mrf.mxu0
      %v1177 = vadd.f32 %v1154, %v1176
      %1178 = vdwg.mxu0
      %s1179 = scalar_lea.vmem %s5, 1152
      %v1180 = vld [vmem:[%s1179] sm:$0xff]
      %v1181 = vld [vmem:[%s1179 + $0x8] sm:$0xff]
      %v1182 = vld [vmem:[%s1179 + $0x10] sm:$0xff]
      %v1183 = vld [vmem:[%s1179 + $0x18] sm:$0xff]
      %v1184 = vld [vmem:[%s1179 + $0x20] sm:$0xff]
      %v1185 = vld [vmem:[%s1179 + $0x28] sm:$0xff]
      %v1186 = vld [vmem:[%s1179 + $0x30] sm:$0xff]
      %v1187 = vld [vmem:[%s1179 + $0x38] sm:$0xff]
      %v1188 = vld [vmem:[%s1179 + $0x40] sm:$0xff]
      %v1189 = vld [vmem:[%s1179 + $0x48] sm:$0xff]
      %v1190 = vld [vmem:[%s1179 + $0x50] sm:$0xff]
      %v1191 = vld [vmem:[%s1179 + $0x58] sm:$0xff]
      %v1192 = vld [vmem:[%s1179 + $0x60] sm:$0xff]
      %v1193 = vld [vmem:[%s1179 + $0x68] sm:$0xff]
      %v1194 = vld [vmem:[%s1179 + $0x70] sm:$0xff]
      %v1195 = vld [vmem:[%s1179 + $0x78] sm:$0xff]
      %v1196 = vld [vmem:[%s1179 + $0x80] sm:$0xff]
      %v1197 = vld [vmem:[%s1179 + $0x88] sm:$0xff]
      %v1198 = vld [vmem:[%s1179 + $0x90] sm:$0xff]
      %v1199 = vld [vmem:[%s1179 + $0x98] sm:$0xff]
      %v1200 = vld [vmem:[%s1179 + $0xa0] sm:$0xff]
      %v1201 = vld [vmem:[%s1179 + $0xa8] sm:$0xff]
      %v1202 = vld [vmem:[%s1179 + $0xb0] sm:$0xff]
      %v1203 = vld [vmem:[%s1179 + $0xb8] sm:$0xff]
      %v1204 = vld [vmem:[%s1179 + $0xc0] sm:$0xff]
      %v1205 = vld [vmem:[%s1179 + $0xc8] sm:$0xff]
      %v1206 = vld [vmem:[%s1179 + $0xd0] sm:$0xff]
      %v1207 = vld [vmem:[%s1179 + $0xd8] sm:$0xff]
      %v1208 = vld [vmem:[%s1179 + $0xe0] sm:$0xff]
      %v1209 = vld [vmem:[%s1179 + $0xe8] sm:$0xff]
      %v1210 = vld [vmem:[%s1179 + $0xf0] sm:$0xff]
      %v1211 = vld [vmem:[%s1179 + $0xf8] sm:$0xff]
      %v1212 = vld [vmem:[%s1179 + $0x100] sm:$0xff]
      %v1213 = vld [vmem:[%s1179 + $0x108] sm:$0xff]
      %v1214 = vld [vmem:[%s1179 + $0x110] sm:$0xff]
      %v1215 = vld [vmem:[%s1179 + $0x118] sm:$0xff]
      %v1216 = vld [vmem:[%s1179 + $0x120] sm:$0xff]
      %v1217 = vld [vmem:[%s1179 + $0x128] sm:$0xff]
      %v1218 = vld [vmem:[%s1179 + $0x130] sm:$0xff]
      %v1219 = vld [vmem:[%s1179 + $0x138] sm:$0xff]
      %v1220 = vld [vmem:[%s1179 + $0x140] sm:$0xff]
      %v1221 = vld [vmem:[%s1179 + $0x148] sm:$0xff]
      %v1222 = vld [vmem:[%s1179 + $0x150] sm:$0xff]
      %v1223 = vld [vmem:[%s1179 + $0x158] sm:$0xff]
      %v1224 = vld [vmem:[%s1179 + $0x160] sm:$0xff]
      %v1225 = vld [vmem:[%s1179 + $0x168] sm:$0xff]
      %v1226 = vld [vmem:[%s1179 + $0x170] sm:$0xff]
      %v1227 = vld [vmem:[%s1179 + $0x178] sm:$0xff]
      %v1228 = vld [vmem:[%s1179 + $0x180] sm:$0xff]
      %v1229 = vld [vmem:[%s1179 + $0x188] sm:$0xff]
      %v1230 = vld [vmem:[%s1179 + $0x190] sm:$0xff]
      %v1231 = vld [vmem:[%s1179 + $0x198] sm:$0xff]
      %v1232 = vld [vmem:[%s1179 + $0x1a0] sm:$0xff]
      %v1233 = vld [vmem:[%s1179 + $0x1a8] sm:$0xff]
      %v1234 = vld [vmem:[%s1179 + $0x1b0] sm:$0xff]
      %v1235 = vld [vmem:[%s1179 + $0x1b8] sm:$0xff]
      %v1236 = vld [vmem:[%s1179 + $0x1c0] sm:$0xff]
      %v1237 = vld [vmem:[%s1179 + $0x1c8] sm:$0xff]
      %v1238 = vld [vmem:[%s1179 + $0x1d0] sm:$0xff]
      %v1239 = vld [vmem:[%s1179 + $0x1d8] sm:$0xff]
      %v1240 = vld [vmem:[%s1179 + $0x1e0] sm:$0xff]
      %v1241 = vld [vmem:[%s1179 + $0x1e8] sm:$0xff]
      %v1242 = vld [vmem:[%s1179 + $0x1f0] sm:$0xff]
      %v1243 = vld [vmem:[%s1179 + $0x1f8] sm:$0xff]
      %v1244 = vld [vmem:[%s1179 + $0x200] sm:$0xff]
      %v1245 = vld [vmem:[%s1179 + $0x208] sm:$0xff]
      %v1246 = vld [vmem:[%s1179 + $0x210] sm:$0xff]
      %v1247 = vld [vmem:[%s1179 + $0x218] sm:$0xff]
      %v1248 = vld [vmem:[%s1179 + $0x220] sm:$0xff]
      %v1249 = vld [vmem:[%s1179 + $0x228] sm:$0xff]
      %v1250 = vld [vmem:[%s1179 + $0x230] sm:$0xff]
      %v1251 = vld [vmem:[%s1179 + $0x238] sm:$0xff]
      %v1252 = vld [vmem:[%s416 + $0xa0] sm:$0xff]
      %v1253 = vld [vmem:[%s416 + $0xa8] sm:$0xff]
      %v1254 = vld [vmem:[%s416 + $0xb0] sm:$0xff]
      %v1255 = vld [vmem:[%s416 + $0xb8] sm:$0xff]
      %v1256 = vld [vmem:[%s416 + $0xc0] sm:$0xff]
      %v1257 = vld [vmem:[%s416 + $0xc8] sm:$0xff]
      %v1258 = vld [vmem:[%s416 + $0xd0] sm:$0xff]
      %v1259 = vld [vmem:[%s416 + $0xd8] sm:$0xff]
      %v1260 = vld [vmem:[%s416 + $0xe0] sm:$0xff]
      %v1261 = vld [vmem:[%s416 + $0xe8] sm:$0xff]
      %v1262 = vld [vmem:[%s421 + $0xa0] sm:$0xff]
      %v1263 = vld [vmem:[%s421 + $0xa8] sm:$0xff]
      %v1264 = vld [vmem:[%s421 + $0xb0] sm:$0xff]
      %v1265 = vld [vmem:[%s421 + $0xb8] sm:$0xff]
      %v1266 = vld [vmem:[%s421 + $0xc0] sm:$0xff]
      %v1267 = vld [vmem:[%s421 + $0xc8] sm:$0xff]
      %v1268 = vld [vmem:[%s421 + $0xd0] sm:$0xff]
      %v1269 = vld [vmem:[%s421 + $0xd8] sm:$0xff]
      %v1270 = vld [vmem:[%s421 + $0xe0] sm:$0xff]
      %v1271 = vld [vmem:[%s421 + $0xe8] sm:$0xff]
      %v1273 = vsel %vm601, %v1256, 0
      %v1276 = vsel %vm601, %v1261, 0
      %1278 = vmatpush.msra.mxu0 %v1195
      %1279 = vmatpush.msra.mxu0 %v1194
      %1280 = vmatpush.msra.mxu0 %v1193
      %1281 = vmatpush.msra.mxu0 %v1192
      %1282 = vmatpush.msra.mxu0 %v1191
      %1283 = vmatpush.msra.mxu0 %v1190
      %1284 = vmatpush.msra.mxu0 %v1189
      %1285 = vmatpush.msra.mxu0 %v1188
      %1286 = vmatpush.msra.mxu0 %v1187
      %1287 = vmatpush.msra.mxu0 %v1186
      %1288 = vmatpush.msra.mxu0 %v1185
      %1289 = vmatpush.msra.mxu0 %v1184
      %1290 = vmatpush.msra.mxu0 %v1183
      %1291 = vmatpush.msra.mxu0 %v1182
      %1292 = vmatpush.msra.mxu0 %v1181
      %1293 = vmatpush.msra.mxu0 %v1180
      %1294 = vmatmul.f32.gmra.mxu0 %v1252
      %v1295 = vpop.f32.mrf.mxu0
      %v1296 = vadd.f32 0.0, %v1295
      %1297 = vmatmul.f32.gmra.mxu0 %v1257
      %v1298 = vpop.f32.mrf.mxu0
      %v1299 = vadd.f32 0.0, %v1298
      %1300 = vdwg.mxu0
      %1301 = vmatpush.msra.mxu0 %v1211
      %1302 = vmatpush.msra.mxu0 %v1210
      %1303 = vmatpush.msra.mxu0 %v1209
      %1304 = vmatpush.msra.mxu0 %v1208
      %1305 = vmatpush.msra.mxu0 %v1207
      %1306 = vmatpush.msra.mxu0 %v1206
      %1307 = vmatpush.msra.mxu0 %v1205
      %1308 = vmatpush.msra.mxu0 %v1204
      %1309 = vmatpush.msra.mxu0 %v1203
      %1310 = vmatpush.msra.mxu0 %v1202
      %1311 = vmatpush.msra.mxu0 %v1201
      %1312 = vmatpush.msra.mxu0 %v1200
      %1313 = vmatpush.msra.mxu0 %v1199
      %1314 = vmatpush.msra.mxu0 %v1198
      %1315 = vmatpush.msra.mxu0 %v1197
      %1316 = vmatpush.msra.mxu0 %v1196
      %1317 = vmatmul.f32.gmra.mxu0 %v1253
      %v1318 = vpop.f32.mrf.mxu0
      %v1319 = vadd.f32 %v1296, %v1318
      %1320 = vmatmul.f32.gmra.mxu0 %v1258
      %v1321 = vpop.f32.mrf.mxu0
      %v1322 = vadd.f32 %v1299, %v1321
      %1323 = vdwg.mxu0
      %1324 = vmatpush.msra.mxu0 %v1227
      %1325 = vmatpush.msra.mxu0 %v1226
      %1326 = vmatpush.msra.mxu0 %v1225
      %1327 = vmatpush.msra.mxu0 %v1224
      %1328 = vmatpush.msra.mxu0 %v1223
      %1329 = vmatpush.msra.mxu0 %v1222
      %1330 = vmatpush.msra.mxu0 %v1221
      %1331 = vmatpush.msra.mxu0 %v1220
      %1332 = vmatpush.msra.mxu0 %v1219
      %1333 = vmatpush.msra.mxu0 %v1218
      %1334 = vmatpush.msra.mxu0 %v1217
      %1335 = vmatpush.msra.mxu0 %v1216
      %1336 = vmatpush.msra.mxu0 %v1215
      %1337 = vmatpush.msra.mxu0 %v1214
      %1338 = vmatpush.msra.mxu0 %v1213
      %1339 = vmatpush.msra.mxu0 %v1212
      %1340 = vmatmul.f32.gmra.mxu0 %v1254
      %v1341 = vpop.f32.mrf.mxu0
      %v1342 = vadd.f32 %v1319, %v1341
      %1343 = vmatmul.f32.gmra.mxu0 %v1259
      %v1344 = vpop.f32.mrf.mxu0
      %v1345 = vadd.f32 %v1322, %v1344
      %1346 = vdwg.mxu0
      %1347 = vmatpush.msra.mxu0 %v1243
      %1348 = vmatpush.msra.mxu0 %v1242
      %1349 = vmatpush.msra.mxu0 %v1241
      %1350 = vmatpush.msra.mxu0 %v1240
      %1351 = vmatpush.msra.mxu0 %v1239
      %1352 = vmatpush.msra.mxu0 %v1238
      %1353 = vmatpush.msra.mxu0 %v1237
      %1354 = vmatpush.msra.mxu0 %v1236
      %1355 = vmatpush.msra.mxu0 %v1235
      %1356 = vmatpush.msra.mxu0 %v1234
      %1357 = vmatpush.msra.mxu0 %v1233
      %1358 = vmatpush.msra.mxu0 %v1232
      %1359 = vmatpush.msra.mxu0 %v1231
      %1360 = vmatpush.msra.mxu0 %v1230
      %1361 = vmatpush.msra.mxu0 %v1229
      %1362 = vmatpush.msra.mxu0 %v1228
      %1363 = vmatmul.f32.gmra.mxu0 %v1255
      %v1364 = vpop.f32.mrf.mxu0
      %v1365 = vadd.f32 %v1342, %v1364
      %1366 = vmatmul.f32.gmra.mxu0 %v1260
      %v1367 = vpop.f32.mrf.mxu0
      %v1368 = vadd.f32 %v1345, %v1367
      %1369 = vdwg.mxu0
      %1370 = vmatpush.msra.mxu0 0.0
      %1371 = vmatpush.msra.mxu0 0.0
      %1372 = vmatpush.msra.mxu0 0.0
      %1373 = vmatpush.msra.mxu0 0.0
      %1374 = vmatpush.msra.mxu0 0.0
      %1375 = vmatpush.msra.mxu0 0.0
      %1376 = vmatpush.msra.mxu0 0.0
      %1377 = vmatpush.msra.mxu0 0.0
      %1378 = vmatpush.msra.mxu0 %v1251
      %1379 = vmatpush.msra.mxu0 %v1250
      %1380 = vmatpush.msra.mxu0 %v1249
      %1381 = vmatpush.msra.mxu0 %v1248
      %1382 = vmatpush.msra.mxu0 %v1247
      %1383 = vmatpush.msra.mxu0 %v1246
      %1384 = vmatpush.msra.mxu0 %v1245
      %1385 = vmatpush.msra.mxu0 %v1244
      %1386 = vmatmul.f32.gmra.mxu0 %v1273
      %v1387 = vpop.f32.mrf.mxu0
      %v1388 = vadd.f32 %v1365, %v1387
      %1389 = vmatmul.f32.gmra.mxu0 %v1276
      %v1390 = vpop.f32.mrf.mxu0
      %v1391 = vadd.f32 %v1368, %v1390
      %1392 = vdwg.mxu0
      %v1394 = vsel %vm601, %v1266, 0
      %v1397 = vsel %vm601, %v1271, 0
      %1399 = vmatpush.msra.mxu0 %v1195
      %1400 = vmatpush.msra.mxu0 %v1194
      %1401 = vmatpush.msra.mxu0 %v1193
      %1402 = vmatpush.msra.mxu0 %v1192
      %1403 = vmatpush.msra.mxu0 %v1191
      %1404 = vmatpush.msra.mxu0 %v1190
      %1405 = vmatpush.msra.mxu0 %v1189
      %1406 = vmatpush.msra.mxu0 %v1188
      %1407 = vmatpush.msra.mxu0 %v1187
      %1408 = vmatpush.msra.mxu0 %v1186
      %1409 = vmatpush.msra.mxu0 %v1185
      %1410 = vmatpush.msra.mxu0 %v1184
      %1411 = vmatpush.msra.mxu0 %v1183
      %1412 = vmatpush.msra.mxu0 %v1182
      %1413 = vmatpush.msra.mxu0 %v1181
      %1414 = vmatpush.msra.mxu0 %v1180
      %1415 = vmatmul.f32.gmra.mxu0 %v1262
      %v1416 = vpop.f32.mrf.mxu0
      %v1417 = vadd.f32 0.0, %v1416
      %1418 = vmatmul.f32.gmra.mxu0 %v1267
      %v1419 = vpop.f32.mrf.mxu0
      %v1420 = vadd.f32 0.0, %v1419
      %1421 = vdwg.mxu0
      %1422 = vmatpush.msra.mxu0 %v1211
      %1423 = vmatpush.msra.mxu0 %v1210
      %1424 = vmatpush.msra.mxu0 %v1209
      %1425 = vmatpush.msra.mxu0 %v1208
      %1426 = vmatpush.msra.mxu0 %v1207
      %1427 = vmatpush.msra.mxu0 %v1206
      %1428 = vmatpush.msra.mxu0 %v1205
      %1429 = vmatpush.msra.mxu0 %v1204
      %1430 = vmatpush.msra.mxu0 %v1203
      %1431 = vmatpush.msra.mxu0 %v1202
      %1432 = vmatpush.msra.mxu0 %v1201
      %1433 = vmatpush.msra.mxu0 %v1200
      %1434 = vmatpush.msra.mxu0 %v1199
      %1435 = vmatpush.msra.mxu0 %v1198
      %1436 = vmatpush.msra.mxu0 %v1197
      %1437 = vmatpush.msra.mxu0 %v1196
      %1438 = vmatmul.f32.gmra.mxu0 %v1263
      %v1439 = vpop.f32.mrf.mxu0
      %v1440 = vadd.f32 %v1417, %v1439
      %1441 = vmatmul.f32.gmra.mxu0 %v1268
      %v1442 = vpop.f32.mrf.mxu0
      %v1443 = vadd.f32 %v1420, %v1442
      %1444 = vdwg.mxu0
      %1445 = vmatpush.msra.mxu0 %v1227
      %1446 = vmatpush.msra.mxu0 %v1226
      %1447 = vmatpush.msra.mxu0 %v1225
      %1448 = vmatpush.msra.mxu0 %v1224
      %1449 = vmatpush.msra.mxu0 %v1223
      %1450 = vmatpush.msra.mxu0 %v1222
      %1451 = vmatpush.msra.mxu0 %v1221
      %1452 = vmatpush.msra.mxu0 %v1220
      %1453 = vmatpush.msra.mxu0 %v1219
      %1454 = vmatpush.msra.mxu0 %v1218
      %1455 = vmatpush.msra.mxu0 %v1217
      %1456 = vmatpush.msra.mxu0 %v1216
      %1457 = vmatpush.msra.mxu0 %v1215
      %1458 = vmatpush.msra.mxu0 %v1214
      %1459 = vmatpush.msra.mxu0 %v1213
      %1460 = vmatpush.msra.mxu0 %v1212
      %1461 = vmatmul.f32.gmra.mxu0 %v1264
      %v1462 = vpop.f32.mrf.mxu0
      %v1463 = vadd.f32 %v1440, %v1462
      %1464 = vmatmul.f32.gmra.mxu0 %v1269
      %v1465 = vpop.f32.mrf.mxu0
      %v1466 = vadd.f32 %v1443, %v1465
      %1467 = vdwg.mxu0
      %1468 = vmatpush.msra.mxu0 %v1243
      %1469 = vmatpush.msra.mxu0 %v1242
      %1470 = vmatpush.msra.mxu0 %v1241
      %1471 = vmatpush.msra.mxu0 %v1240
      %1472 = vmatpush.msra.mxu0 %v1239
      %1473 = vmatpush.msra.mxu0 %v1238
      %1474 = vmatpush.msra.mxu0 %v1237
      %1475 = vmatpush.msra.mxu0 %v1236
      %1476 = vmatpush.msra.mxu0 %v1235
      %1477 = vmatpush.msra.mxu0 %v1234
      %1478 = vmatpush.msra.mxu0 %v1233
      %1479 = vmatpush.msra.mxu0 %v1232
      %1480 = vmatpush.msra.mxu0 %v1231
      %1481 = vmatpush.msra.mxu0 %v1230
      %1482 = vmatpush.msra.mxu0 %v1229
      %1483 = vmatpush.msra.mxu0 %v1228
      %1484 = vmatmul.f32.gmra.mxu0 %v1265
      %v1485 = vpop.f32.mrf.mxu0
      %v1486 = vadd.f32 %v1463, %v1485
      %1487 = vmatmul.f32.gmra.mxu0 %v1270
      %v1488 = vpop.f32.mrf.mxu0
      %v1489 = vadd.f32 %v1466, %v1488
      %1490 = vdwg.mxu0
      %1491 = vmatpush.msra.mxu0 0.0
      %1492 = vmatpush.msra.mxu0 0.0
      %1493 = vmatpush.msra.mxu0 0.0
      %1494 = vmatpush.msra.mxu0 0.0
      %1495 = vmatpush.msra.mxu0 0.0
      %1496 = vmatpush.msra.mxu0 0.0
      %1497 = vmatpush.msra.mxu0 0.0
      %1498 = vmatpush.msra.mxu0 0.0
      %1499 = vmatpush.msra.mxu0 %v1251
      %1500 = vmatpush.msra.mxu0 %v1250
      %1501 = vmatpush.msra.mxu0 %v1249
      %1502 = vmatpush.msra.mxu0 %v1248
      %1503 = vmatpush.msra.mxu0 %v1247
      %1504 = vmatpush.msra.mxu0 %v1246
      %1505 = vmatpush.msra.mxu0 %v1245
      %1506 = vmatpush.msra.mxu0 %v1244
      %1507 = vmatmul.f32.gmra.mxu0 %v1394
      %v1508 = vpop.f32.mrf.mxu0
      %v1509 = vadd.f32 %v1486, %v1508
      %1510 = vmatmul.f32.gmra.mxu0 %v1397
      %v1511 = vpop.f32.mrf.mxu0
      %v1512 = vadd.f32 %v1489, %v1511
      %1513 = vdwg.mxu0
      %s1514 = scalar_lea.vmem %s5, 1728
      %v1515 = vld [vmem:[%s1514] sm:$0xff]
      %v1516 = vld [vmem:[%s1514 + $0x8] sm:$0xff]
      %v1517 = vld [vmem:[%s1514 + $0x10] sm:$0xff]
      %v1518 = vld [vmem:[%s1514 + $0x18] sm:$0xff]
      %v1519 = vld [vmem:[%s1514 + $0x20] sm:$0xff]
      %v1520 = vld [vmem:[%s1514 + $0x28] sm:$0xff]
      %v1521 = vld [vmem:[%s1514 + $0x30] sm:$0xff]
      %v1522 = vld [vmem:[%s1514 + $0x38] sm:$0xff]
      %v1523 = vld [vmem:[%s1514 + $0x40] sm:$0xff]
      %v1524 = vld [vmem:[%s1514 + $0x48] sm:$0xff]
      %v1525 = vld [vmem:[%s1514 + $0x50] sm:$0xff]
      %v1526 = vld [vmem:[%s1514 + $0x58] sm:$0xff]
      %v1527 = vld [vmem:[%s1514 + $0x60] sm:$0xff]
      %v1528 = vld [vmem:[%s1514 + $0x68] sm:$0xff]
      %v1529 = vld [vmem:[%s1514 + $0x70] sm:$0xff]
      %v1530 = vld [vmem:[%s1514 + $0x78] sm:$0xff]
      %v1531 = vld [vmem:[%s1514 + $0x80] sm:$0xff]
      %v1532 = vld [vmem:[%s1514 + $0x88] sm:$0xff]
      %v1533 = vld [vmem:[%s1514 + $0x90] sm:$0xff]
      %v1534 = vld [vmem:[%s1514 + $0x98] sm:$0xff]
      %v1535 = vld [vmem:[%s1514 + $0xa0] sm:$0xff]
      %v1536 = vld [vmem:[%s1514 + $0xa8] sm:$0xff]
      %v1537 = vld [vmem:[%s1514 + $0xb0] sm:$0xff]
      %v1538 = vld [vmem:[%s1514 + $0xb8] sm:$0xff]
      %v1539 = vld [vmem:[%s1514 + $0xc0] sm:$0xff]
      %v1540 = vld [vmem:[%s1514 + $0xc8] sm:$0xff]
      %v1541 = vld [vmem:[%s1514 + $0xd0] sm:$0xff]
      %v1542 = vld [vmem:[%s1514 + $0xd8] sm:$0xff]
      %v1543 = vld [vmem:[%s1514 + $0xe0] sm:$0xff]
      %v1544 = vld [vmem:[%s1514 + $0xe8] sm:$0xff]
      %v1545 = vld [vmem:[%s1514 + $0xf0] sm:$0xff]
      %v1546 = vld [vmem:[%s1514 + $0xf8] sm:$0xff]
      %v1547 = vld [vmem:[%s1514 + $0x100] sm:$0xff]
      %v1548 = vld [vmem:[%s1514 + $0x108] sm:$0xff]
      %v1549 = vld [vmem:[%s1514 + $0x110] sm:$0xff]
      %v1550 = vld [vmem:[%s1514 + $0x118] sm:$0xff]
      %v1551 = vld [vmem:[%s1514 + $0x120] sm:$0xff]
      %v1552 = vld [vmem:[%s1514 + $0x128] sm:$0xff]
      %v1553 = vld [vmem:[%s1514 + $0x130] sm:$0xff]
      %v1554 = vld [vmem:[%s1514 + $0x138] sm:$0xff]
      %v1555 = vld [vmem:[%s1514 + $0x140] sm:$0xff]
      %v1556 = vld [vmem:[%s1514 + $0x148] sm:$0xff]
      %v1557 = vld [vmem:[%s1514 + $0x150] sm:$0xff]
      %v1558 = vld [vmem:[%s1514 + $0x158] sm:$0xff]
      %v1559 = vld [vmem:[%s1514 + $0x160] sm:$0xff]
      %v1560 = vld [vmem:[%s1514 + $0x168] sm:$0xff]
      %v1561 = vld [vmem:[%s1514 + $0x170] sm:$0xff]
      %v1562 = vld [vmem:[%s1514 + $0x178] sm:$0xff]
      %v1563 = vld [vmem:[%s1514 + $0x180] sm:$0xff]
      %v1564 = vld [vmem:[%s1514 + $0x188] sm:$0xff]
      %v1565 = vld [vmem:[%s1514 + $0x190] sm:$0xff]
      %v1566 = vld [vmem:[%s1514 + $0x198] sm:$0xff]
      %v1567 = vld [vmem:[%s1514 + $0x1a0] sm:$0xff]
      %v1568 = vld [vmem:[%s1514 + $0x1a8] sm:$0xff]
      %v1569 = vld [vmem:[%s1514 + $0x1b0] sm:$0xff]
      %v1570 = vld [vmem:[%s1514 + $0x1b8] sm:$0xff]
      %v1571 = vld [vmem:[%s1514 + $0x1c0] sm:$0xff]
      %v1572 = vld [vmem:[%s1514 + $0x1c8] sm:$0xff]
      %v1573 = vld [vmem:[%s1514 + $0x1d0] sm:$0xff]
      %v1574 = vld [vmem:[%s1514 + $0x1d8] sm:$0xff]
      %v1575 = vld [vmem:[%s1514 + $0x1e0] sm:$0xff]
      %v1576 = vld [vmem:[%s1514 + $0x1e8] sm:$0xff]
      %v1577 = vld [vmem:[%s1514 + $0x1f0] sm:$0xff]
      %v1578 = vld [vmem:[%s1514 + $0x1f8] sm:$0xff]
      %v1579 = vld [vmem:[%s1514 + $0x200] sm:$0xff]
      %v1580 = vld [vmem:[%s1514 + $0x208] sm:$0xff]
      %v1581 = vld [vmem:[%s1514 + $0x210] sm:$0xff]
      %v1582 = vld [vmem:[%s1514 + $0x218] sm:$0xff]
      %v1583 = vld [vmem:[%s1514 + $0x220] sm:$0xff]
      %v1584 = vld [vmem:[%s1514 + $0x228] sm:$0xff]
      %v1585 = vld [vmem:[%s1514 + $0x230] sm:$0xff]
      %v1586 = vld [vmem:[%s1514 + $0x238] sm:$0xff]
      %v1587 = vld [vmem:[%s416 + $0xf0] sm:$0xff]
      %v1588 = vld [vmem:[%s416 + $0xf8] sm:$0xff]
      %v1589 = vld [vmem:[%s416 + $0x100] sm:$0xff]
      %v1590 = vld [vmem:[%s416 + $0x108] sm:$0xff]
      %v1591 = vld [vmem:[%s416 + $0x110] sm:$0xff]
      %v1592 = vld [vmem:[%s416 + $0x118] sm:$0xff]
      %v1593 = vld [vmem:[%s416 + $0x120] sm:$0xff]
      %v1594 = vld [vmem:[%s416 + $0x128] sm:$0xff]
      %v1595 = vld [vmem:[%s416 + $0x130] sm:$0xff]
      %v1596 = vld [vmem:[%s416 + $0x138] sm:$0xff]
      %v1597 = vld [vmem:[%s421 + $0xf0] sm:$0xff]
      %v1598 = vld [vmem:[%s421 + $0xf8] sm:$0xff]
      %v1599 = vld [vmem:[%s421 + $0x100] sm:$0xff]
      %v1600 = vld [vmem:[%s421 + $0x108] sm:$0xff]
      %v1601 = vld [vmem:[%s421 + $0x110] sm:$0xff]
      %v1602 = vld [vmem:[%s421 + $0x118] sm:$0xff]
      %v1603 = vld [vmem:[%s421 + $0x120] sm:$0xff]
      %v1604 = vld [vmem:[%s421 + $0x128] sm:$0xff]
      %v1605 = vld [vmem:[%s421 + $0x130] sm:$0xff]
      %v1606 = vld [vmem:[%s421 + $0x138] sm:$0xff]
      %v1608 = vsel %vm601, %v1591, 0
      %v1611 = vsel %vm601, %v1596, 0
      %1613 = vmatpush.msra.mxu0 %v1530
      %1614 = vmatpush.msra.mxu0 %v1529
      %1615 = vmatpush.msra.mxu0 %v1528
      %1616 = vmatpush.msra.mxu0 %v1527
      %1617 = vmatpush.msra.mxu0 %v1526
      %1618 = vmatpush.msra.mxu0 %v1525
      %1619 = vmatpush.msra.mxu0 %v1524
      %1620 = vmatpush.msra.mxu0 %v1523
      %1621 = vmatpush.msra.mxu0 %v1522
      %1622 = vmatpush.msra.mxu0 %v1521
      %1623 = vmatpush.msra.mxu0 %v1520
      %1624 = vmatpush.msra.mxu0 %v1519
      %1625 = vmatpush.msra.mxu0 %v1518
      %1626 = vmatpush.msra.mxu0 %v1517
      %1627 = vmatpush.msra.mxu0 %v1516
      %1628 = vmatpush.msra.mxu0 %v1515
      %1629 = vmatmul.f32.gmra.mxu0 %v1587
      %v1630 = vpop.f32.mrf.mxu0
      %v1631 = vadd.f32 0.0, %v1630
      %1632 = vmatmul.f32.gmra.mxu0 %v1592
      %v1633 = vpop.f32.mrf.mxu0
      %v1634 = vadd.f32 0.0, %v1633
      %1635 = vdwg.mxu0
      %1636 = vmatpush.msra.mxu0 %v1546
      %1637 = vmatpush.msra.mxu0 %v1545
      %1638 = vmatpush.msra.mxu0 %v1544
      %1639 = vmatpush.msra.mxu0 %v1543
      %1640 = vmatpush.msra.mxu0 %v1542
      %1641 = vmatpush.msra.mxu0 %v1541
      %1642 = vmatpush.msra.mxu0 %v1540
      %1643 = vmatpush.msra.mxu0 %v1539
      %1644 = vmatpush.msra.mxu0 %v1538
      %1645 = vmatpush.msra.mxu0 %v1537
      %1646 = vmatpush.msra.mxu0 %v1536
      %1647 = vmatpush.msra.mxu0 %v1535
      %1648 = vmatpush.msra.mxu0 %v1534
      %1649 = vmatpush.msra.mxu0 %v1533
      %1650 = vmatpush.msra.mxu0 %v1532
      %1651 = vmatpush.msra.mxu0 %v1531
      %1652 = vmatmul.f32.gmra.mxu0 %v1588
      %v1653 = vpop.f32.mrf.mxu0
      %v1654 = vadd.f32 %v1631, %v1653
      %1655 = vmatmul.f32.gmra.mxu0 %v1593
      %v1656 = vpop.f32.mrf.mxu0
      %v1657 = vadd.f32 %v1634, %v1656
      %1658 = vdwg.mxu0
      %1659 = vmatpush.msra.mxu0 %v1562
      %1660 = vmatpush.msra.mxu0 %v1561
      %1661 = vmatpush.msra.mxu0 %v1560
      %1662 = vmatpush.msra.mxu0 %v1559
      %1663 = vmatpush.msra.mxu0 %v1558
      %1664 = vmatpush.msra.mxu0 %v1557
      %1665 = vmatpush.msra.mxu0 %v1556
      %1666 = vmatpush.msra.mxu0 %v1555
      %1667 = vmatpush.msra.mxu0 %v1554
      %1668 = vmatpush.msra.mxu0 %v1553
      %1669 = vmatpush.msra.mxu0 %v1552
      %1670 = vmatpush.msra.mxu0 %v1551
      %1671 = vmatpush.msra.mxu0 %v1550
      %1672 = vmatpush.msra.mxu0 %v1549
      %1673 = vmatpush.msra.mxu0 %v1548
      %1674 = vmatpush.msra.mxu0 %v1547
      %1675 = vmatmul.f32.gmra.mxu0 %v1589
      %v1676 = vpop.f32.mrf.mxu0
      %v1677 = vadd.f32 %v1654, %v1676
      %1678 = vmatmul.f32.gmra.mxu0 %v1594
      %v1679 = vpop.f32.mrf.mxu0
      %v1680 = vadd.f32 %v1657, %v1679
      %1681 = vdwg.mxu0
      %1682 = vmatpush.msra.mxu0 %v1578
      %1683 = vmatpush.msra.mxu0 %v1577
      %1684 = vmatpush.msra.mxu0 %v1576
      %1685 = vmatpush.msra.mxu0 %v1575
      %1686 = vmatpush.msra.mxu0 %v1574
      %1687 = vmatpush.msra.mxu0 %v1573
      %1688 = vmatpush.msra.mxu0 %v1572
      %1689 = vmatpush.msra.mxu0 %v1571
      %1690 = vmatpush.msra.mxu0 %v1570
      %1691 = vmatpush.msra.mxu0 %v1569
      %1692 = vmatpush.msra.mxu0 %v1568
      %1693 = vmatpush.msra.mxu0 %v1567
      %1694 = vmatpush.msra.mxu0 %v1566
      %1695 = vmatpush.msra.mxu0 %v1565
      %1696 = vmatpush.msra.mxu0 %v1564
      %1697 = vmatpush.msra.mxu0 %v1563
      %1698 = vmatmul.f32.gmra.mxu0 %v1590
      %v1699 = vpop.f32.mrf.mxu0
      %v1700 = vadd.f32 %v1677, %v1699
      %1701 = vmatmul.f32.gmra.mxu0 %v1595
      %v1702 = vpop.f32.mrf.mxu0
      %v1703 = vadd.f32 %v1680, %v1702
      %1704 = vdwg.mxu0
      %1705 = vmatpush.msra.mxu0 0.0
      %1706 = vmatpush.msra.mxu0 0.0
      %1707 = vmatpush.msra.mxu0 0.0
      %1708 = vmatpush.msra.mxu0 0.0
      %1709 = vmatpush.msra.mxu0 0.0
      %1710 = vmatpush.msra.mxu0 0.0
      %1711 = vmatpush.msra.mxu0 0.0
      %1712 = vmatpush.msra.mxu0 0.0
      %1713 = vmatpush.msra.mxu0 %v1586
      %1714 = vmatpush.msra.mxu0 %v1585
      %1715 = vmatpush.msra.mxu0 %v1584
      %1716 = vmatpush.msra.mxu0 %v1583
      %1717 = vmatpush.msra.mxu0 %v1582
      %1718 = vmatpush.msra.mxu0 %v1581
      %1719 = vmatpush.msra.mxu0 %v1580
      %1720 = vmatpush.msra.mxu0 %v1579
      %1721 = vmatmul.f32.gmra.mxu0 %v1608
      %v1722 = vpop.f32.mrf.mxu0
      %v1723 = vadd.f32 %v1700, %v1722
      %1724 = vmatmul.f32.gmra.mxu0 %v1611
      %v1725 = vpop.f32.mrf.mxu0
      %v1726 = vadd.f32 %v1703, %v1725
      %1727 = vdwg.mxu0
      %v1729 = vsel %vm601, %v1601, 0
      %v1732 = vsel %vm601, %v1606, 0
      %1734 = vmatpush.msra.mxu0 %v1530
      %1735 = vmatpush.msra.mxu0 %v1529
      %1736 = vmatpush.msra.mxu0 %v1528
      %1737 = vmatpush.msra.mxu0 %v1527
      %1738 = vmatpush.msra.mxu0 %v1526
      %1739 = vmatpush.msra.mxu0 %v1525
      %1740 = vmatpush.msra.mxu0 %v1524
      %1741 = vmatpush.msra.mxu0 %v1523
      %1742 = vmatpush.msra.mxu0 %v1522
      %1743 = vmatpush.msra.mxu0 %v1521
      %1744 = vmatpush.msra.mxu0 %v1520
      %1745 = vmatpush.msra.mxu0 %v1519
      %1746 = vmatpush.msra.mxu0 %v1518
      %1747 = vmatpush.msra.mxu0 %v1517
      %1748 = vmatpush.msra.mxu0 %v1516
      %1749 = vmatpush.msra.mxu0 %v1515
      %1750 = vmatmul.f32.gmra.mxu0 %v1597
      %v1751 = vpop.f32.mrf.mxu0
      %v1752 = vadd.f32 0.0, %v1751
      %1753 = vmatmul.f32.gmra.mxu0 %v1602
      %v1754 = vpop.f32.mrf.mxu0
      %v1755 = vadd.f32 0.0, %v1754
      %1756 = vdwg.mxu0
      %1757 = vmatpush.msra.mxu0 %v1546
      %1758 = vmatpush.msra.mxu0 %v1545
      %1759 = vmatpush.msra.mxu0 %v1544
      %1760 = vmatpush.msra.mxu0 %v1543
      %1761 = vmatpush.msra.mxu0 %v1542
      %1762 = vmatpush.msra.mxu0 %v1541
      %1763 = vmatpush.msra.mxu0 %v1540
      %1764 = vmatpush.msra.mxu0 %v1539
      %1765 = vmatpush.msra.mxu0 %v1538
      %1766 = vmatpush.msra.mxu0 %v1537
      %1767 = vmatpush.msra.mxu0 %v1536
      %1768 = vmatpush.msra.mxu0 %v1535
      %1769 = vmatpush.msra.mxu0 %v1534
      %1770 = vmatpush.msra.mxu0 %v1533
      %1771 = vmatpush.msra.mxu0 %v1532
      %1772 = vmatpush.msra.mxu0 %v1531
      %1773 = vmatmul.f32.gmra.mxu0 %v1598
      %v1774 = vpop.f32.mrf.mxu0
      %v1775 = vadd.f32 %v1752, %v1774
      %1776 = vmatmul.f32.gmra.mxu0 %v1603
      %v1777 = vpop.f32.mrf.mxu0
      %v1778 = vadd.f32 %v1755, %v1777
      %1779 = vdwg.mxu0
      %1780 = vmatpush.msra.mxu0 %v1562
      %1781 = vmatpush.msra.mxu0 %v1561
      %1782 = vmatpush.msra.mxu0 %v1560
      %1783 = vmatpush.msra.mxu0 %v1559
      %1784 = vmatpush.msra.mxu0 %v1558
      %1785 = vmatpush.msra.mxu0 %v1557
      %1786 = vmatpush.msra.mxu0 %v1556
      %1787 = vmatpush.msra.mxu0 %v1555
      %1788 = vmatpush.msra.mxu0 %v1554
      %1789 = vmatpush.msra.mxu0 %v1553
      %1790 = vmatpush.msra.mxu0 %v1552
      %1791 = vmatpush.msra.mxu0 %v1551
      %1792 = vmatpush.msra.mxu0 %v1550
      %1793 = vmatpush.msra.mxu0 %v1549
      %1794 = vmatpush.msra.mxu0 %v1548
      %1795 = vmatpush.msra.mxu0 %v1547
      %1796 = vmatmul.f32.gmra.mxu0 %v1599
      %v1797 = vpop.f32.mrf.mxu0
      %v1798 = vadd.f32 %v1775, %v1797
      %1799 = vmatmul.f32.gmra.mxu0 %v1604
      %v1800 = vpop.f32.mrf.mxu0
      %v1801 = vadd.f32 %v1778, %v1800
      %1802 = vdwg.mxu0
      %1803 = vmatpush.msra.mxu0 %v1578
      %1804 = vmatpush.msra.mxu0 %v1577
      %1805 = vmatpush.msra.mxu0 %v1576
      %1806 = vmatpush.msra.mxu0 %v1575
      %1807 = vmatpush.msra.mxu0 %v1574
      %1808 = vmatpush.msra.mxu0 %v1573
      %1809 = vmatpush.msra.mxu0 %v1572
      %1810 = vmatpush.msra.mxu0 %v1571
      %1811 = vmatpush.msra.mxu0 %v1570
      %1812 = vmatpush.msra.mxu0 %v1569
      %1813 = vmatpush.msra.mxu0 %v1568
      %1814 = vmatpush.msra.mxu0 %v1567
      %1815 = vmatpush.msra.mxu0 %v1566
      %1816 = vmatpush.msra.mxu0 %v1565
      %1817 = vmatpush.msra.mxu0 %v1564
      %1818 = vmatpush.msra.mxu0 %v1563
      %1819 = vmatmul.f32.gmra.mxu0 %v1600
      %v1820 = vpop.f32.mrf.mxu0
      %v1821 = vadd.f32 %v1798, %v1820
      %1822 = vmatmul.f32.gmra.mxu0 %v1605
      %v1823 = vpop.f32.mrf.mxu0
      %v1824 = vadd.f32 %v1801, %v1823
      %1825 = vdwg.mxu0
      %1826 = vmatpush.msra.mxu0 0.0
      %1827 = vmatpush.msra.mxu0 0.0
      %1828 = vmatpush.msra.mxu0 0.0
      %1829 = vmatpush.msra.mxu0 0.0
      %1830 = vmatpush.msra.mxu0 0.0
      %1831 = vmatpush.msra.mxu0 0.0
      %1832 = vmatpush.msra.mxu0 0.0
      %1833 = vmatpush.msra.mxu0 0.0
      %1834 = vmatpush.msra.mxu0 %v1586
      %1835 = vmatpush.msra.mxu0 %v1585
      %1836 = vmatpush.msra.mxu0 %v1584
      %1837 = vmatpush.msra.mxu0 %v1583
      %1838 = vmatpush.msra.mxu0 %v1582
      %1839 = vmatpush.msra.mxu0 %v1581
      %1840 = vmatpush.msra.mxu0 %v1580
      %1841 = vmatpush.msra.mxu0 %v1579
      %1842 = vmatmul.f32.gmra.mxu0 %v1729
      %v1843 = vpop.f32.mrf.mxu0
      %v1844 = vadd.f32 %v1821, %v1843
      %1845 = vmatmul.f32.gmra.mxu0 %v1732
      %v1846 = vpop.f32.mrf.mxu0
      %v1847 = vadd.f32 %v1824, %v1846
      %1848 = vdwg.mxu0
      %v1849 = vld [vmem:[%s6] sm:$0xff]
      %v1850 = vld [vmem:[%s6 + $0x8] sm:$0xff]
      %v1851 = vld [vmem:[%s6 + $0x10] sm:$0xff]
      %v1852 = vld [vmem:[%s6 + $0x18] sm:$0xff]
      %v1853 = vld [vmem:[%s6 + $0x20] sm:$0xff]
      %v1854 = vld [vmem:[%s6 + $0x28] sm:$0xff]
      %v1855 = vld [vmem:[%s6 + $0x30] sm:$0xff]
      %v1856 = vld [vmem:[%s6 + $0x38] sm:$0xff]
      %v1857 = vadd.f32 %v718, %v1849
      %v1858 = vadd.f32 %v721, %v1850
      %v1859 = vadd.f32 %v1053, %v1851
      %v1860 = vadd.f32 %v1056, %v1852
      %v1861 = vadd.f32 %v1388, %v1853
      %v1862 = vadd.f32 %v1391, %v1854
      %v1863 = vadd.f32 %v1723, %v1855
      %v1864 = vadd.f32 %v1726, %v1856
      %v1865 = vld [vmem:[%s7] sm:$0xff]
      %v1866 = vld [vmem:[%s7 + $0x8] sm:$0xff]
      %v1867 = vld [vmem:[%s7 + $0x10] sm:$0xff]
      %v1868 = vld [vmem:[%s7 + $0x18] sm:$0xff]
      %v1869 = vld [vmem:[%s7 + $0x20] sm:$0xff]
      %v1870 = vld [vmem:[%s7 + $0x28] sm:$0xff]
      %v1871 = vld [vmem:[%s7 + $0x30] sm:$0xff]
      %v1872 = vld [vmem:[%s7 + $0x38] sm:$0xff]
      %v1873 = vadd.f32 %v839, %v1865
      %v1874 = vadd.f32 %v842, %v1866
      %v1875 = vadd.f32 %v1174, %v1867
      %v1876 = vadd.f32 %v1177, %v1868
      %v1877 = vadd.f32 %v1509, %v1869
      %v1878 = vadd.f32 %v1512, %v1870
      %v1879 = vadd.f32 %v1844, %v1871
      %v1880 = vadd.f32 %v1847, %v1872
      %v1881 = vld [vmem:[%s8] sm:$0x1]
      %v1882 = vmul.f32 %v486, 0.35355338
      %v1883 = vmul.f32 %v489, 0.35355338
      %v1884 = vmul.f32 %v492, 0.35355338
      %v1885 = vmul.f32 %v495, 0.35355338
      %v1886 = vmul.f32 %v498, 0.35355338
      %v1887 = vmul.f32 %v501, 0.35355338
      %v1888 = vmul.f32 %v504, 0.35355338
      %v1889 = vmul.f32 %v507, 0.35355338
      %v1891 = vperm.slane %v1881, 0
      %vm1893 = vcmask 64512
      %v1895 = vsel %vm1893, %v1882, 0
      %v1898 = vsel %vm1893, %v1883, 0
      %v1901 = vsel %vm1893, %v1884, 0
      %v1904 = vsel %vm1893, %v1885, 0
      %v1907 = vsel %vm1893, %v1886, 0
      %v1910 = vsel %vm1893, %v1887, 0
      %v1913 = vsel %vm1893, %v1888, 0
      %v1916 = vsel %vm1893, %v1889, 0
      %v1919 = vsel %vm1893, %v1857, 0
      %v1922 = vsel %vm1893, %v1858, 0
      %v1925 = vsel %vm1893, %v1859, 0
      %v1928 = vsel %vm1893, %v1860, 0
      %v1931 = vsel %vm1893, %v1861, 0
      %v1934 = vsel %vm1893, %v1862, 0
      %v1937 = vsel %vm1893, %v1863, 0
      %v1940 = vsel %vm1893, %v1864, 0
      %1942 = vmatpush.xpose.msra.mxu0 0.0
      %1943 = vmatpush.xpose.msra.mxu0 0.0
      %1944 = vmatpush.xpose.msra.mxu0 0.0
      %1945 = vmatpush.xpose.msra.mxu0 0.0
      %1946 = vmatpush.xpose.msra.mxu0 0.0
      %1947 = vmatpush.xpose.msra.mxu0 0.0
      %1948 = vmatpush.xpose.msra.mxu0 0.0
      %1949 = vmatpush.xpose.msra.mxu0 0.0
      %1950 = vmatpush.xpose.msra.mxu0 %v1940
      %1951 = vmatpush.xpose.msra.mxu0 %v1937
      %1952 = vmatpush.xpose.msra.mxu0 %v1934
      %1953 = vmatpush.xpose.msra.mxu0 %v1931
      %1954 = vmatpush.xpose.msra.mxu0 %v1928
      %1955 = vmatpush.xpose.msra.mxu0 %v1925
      %1956 = vmatpush.xpose.msra.mxu0 %v1922
      %1957 = vmatpush.xpose.msra.mxu0 %v1919
      %1958 = vmatmul.f32.gmra.mxu0 %v1895
      %v1959 = vpop.f32.mrf.mxu0
      %v1960 = vadd.f32 %v1891, %v1959
      %1961 = vmatmul.f32.gmra.mxu0 %v1898
      %v1962 = vpop.f32.mrf.mxu0
      %v1963 = vadd.f32 %v1891, %v1962
      %1964 = vmatmul.f32.gmra.mxu0 %v1901
      %v1965 = vpop.f32.mrf.mxu0
      %v1966 = vadd.f32 %v1891, %v1965
      %1967 = vmatmul.f32.gmra.mxu0 %v1904
      %v1968 = vpop.f32.mrf.mxu0
      %v1969 = vadd.f32 %v1891, %v1968
      %1970 = vmatmul.f32.gmra.mxu0 %v1907
      %v1971 = vpop.f32.mrf.mxu0
      %v1972 = vadd.f32 %v1891, %v1971
      %1973 = vmatmul.f32.gmra.mxu0 %v1910
      %v1974 = vpop.f32.mrf.mxu0
      %v1975 = vadd.f32 %v1891, %v1974
      %1976 = vmatmul.f32.gmra.mxu0 %v1913
      %v1977 = vpop.f32.mrf.mxu0
      %v1978 = vadd.f32 %v1891, %v1977
      %1979 = vmatmul.f32.gmra.mxu0 %v1916
      %v1980 = vpop.f32.mrf.mxu0
      %v1981 = vadd.f32 %v1891, %v1980
      %1982 = vdwg.mxu0
      %v1983 = vsel %vm601, %v1960, -inf
      %1984 = vmax.xlane.f32.xlu0 %v1983
      %v1985 = vpop.xlane.xlu0 %1984
      %v1986 = vsel %vm601, %v1963, -inf
      %1987 = vmax.xlane.f32.xlu0 %v1986
      %v1988 = vpop.xlane.xlu0 %1987
      %v1989 = vsel %vm601, %v1966, -inf
      %1990 = vmax.xlane.f32.xlu0 %v1989
      %v1991 = vpop.xlane.xlu0 %1990
      %v1992 = vsel %vm601, %v1969, -inf
      %1993 = vmax.xlane.f32.xlu0 %v1992
      %v1994 = vpop.xlane.xlu0 %1993
      %v1995 = vsel %vm601, %v1972, -inf
      %1996 = vmax.xlane.f32.xlu0 %v1995
      %v1997 = vpop.xlane.xlu0 %1996
      %v1998 = vsel %vm601, %v1975, -inf
      %1999 = vmax.xlane.f32.xlu0 %v1998
      %v2000 = vpop.xlane.xlu0 %1999
      %v2001 = vsel %vm601, %v1978, -inf
      %2002 = vmax.xlane.f32.xlu0 %v2001
      %v2003 = vpop.xlane.xlu0 %2002
      %v2004 = vsel %vm601, %v1981, -inf
      %2005 = vmax.xlane.f32.xlu0 %v2004
      %v2006 = vpop.xlane.xlu0 %2005
      %v2007 = vsub.f32 %v1960, %v1985
      %v2008 = vsub.f32 %v1963, %v1988
      %v2009 = vsub.f32 %v1966, %v1991
      %v2010 = vsub.f32 %v1969, %v1994
      %v2011 = vsub.f32 %v1972, %v1997
      %v2012 = vsub.f32 %v1975, %v2000
      %v2013 = vsub.f32 %v1978, %v2003
      %v2014 = vsub.f32 %v1981, %v2006
      %v2015 = vmul.f32 %v2007, 1.442695
      %v2016 = vpow.pop %v2015
      %v2017 = vmul.f32 %v2008, 1.442695
      %v2018 = vpow.pop %v2017
      %v2019 = vmul.f32 %v2009, 1.442695
      %v2020 = vpow.pop %v2019
      %v2021 = vmul.f32 %v2010, 1.442695
      %v2022 = vpow.pop %v2021
      %v2023 = vmul.f32 %v2011, 1.442695
      %v2024 = vpow.pop %v2023
      %v2025 = vmul.f32 %v2012, 1.442695
      %v2026 = vpow.pop %v2025
      %v2027 = vmul.f32 %v2013, 1.442695
      %v2028 = vpow.pop %v2027
      %v2029 = vmul.f32 %v2014, 1.442695
      %v2030 = vpow.pop %v2029
      %v2031 = vsel %vm601, %v2016, 0.0
      %2032 = vadd.xlane.f32.xlu0 %v2031
      %v2033 = vpop.xlane.xlu0 %2032
      %v2034 = vsel %vm601, %v2018, 0.0
      %2035 = vadd.xlane.f32.xlu0 %v2034
      %v2036 = vpop.xlane.xlu0 %2035
      %v2037 = vsel %vm601, %v2020, 0.0
      %2038 = vadd.xlane.f32.xlu0 %v2037
      %v2039 = vpop.xlane.xlu0 %2038
      %v2040 = vsel %vm601, %v2022, 0.0
      %2041 = vadd.xlane.f32.xlu0 %v2040
      %v2042 = vpop.xlane.xlu0 %2041
      %v2043 = vsel %vm601, %v2024, 0.0
      %2044 = vadd.xlane.f32.xlu0 %v2043
      %v2045 = vpop.xlane.xlu0 %2044
      %v2046 = vsel %vm601, %v2026, 0.0
      %2047 = vadd.xlane.f32.xlu0 %v2046
      %v2048 = vpop.xlane.xlu0 %2047
      %v2049 = vsel %vm601, %v2028, 0.0
      %2050 = vadd.xlane.f32.xlu0 %v2049
      %v2051 = vpop.xlane.xlu0 %2050
      %v2052 = vsel %vm601, %v2030, 0.0
      %2053 = vadd.xlane.f32.xlu0 %v2052
      %v2054 = vpop.xlane.xlu0 %2053
      %v2055 = vrcp.pop %v2033
      %v2056 = vrcp.pop %v2036
      %v2057 = vrcp.pop %v2039
      %v2058 = vrcp.pop %v2042
      %v2059 = vrcp.pop %v2045
      %v2060 = vrcp.pop %v2048
      %v2061 = vrcp.pop %v2051
      %v2062 = vrcp.pop %v2054
      %v2063 = vmul.f32 %v2016, %v2055
      %v2064 = vmul.f32 %v2018, %v2056
      %v2065 = vmul.f32 %v2020, %v2057
      %v2066 = vmul.f32 %v2022, %v2058
      %v2067 = vmul.f32 %v2024, %v2059
      %v2068 = vmul.f32 %v2026, %v2060
      %v2069 = vmul.f32 %v2028, %v2061
      %v2070 = vmul.f32 %v2030, %v2062
      %v2072 = vsel %vm601, %v2063, 0
      %v2075 = vsel %vm601, %v2064, 0
      %v2078 = vsel %vm601, %v2065, 0
      %v2081 = vsel %vm601, %v2066, 0
      %v2084 = vsel %vm601, %v2067, 0
      %v2087 = vsel %vm601, %v2068, 0
      %v2090 = vsel %vm601, %v2069, 0
      %v2093 = vsel %vm601, %v2070, 0
      %2095 = vmatpush.msra.mxu0 0.0
      %2096 = vmatpush.msra.mxu0 0.0
      %2097 = vmatpush.msra.mxu0 0.0
      %2098 = vmatpush.msra.mxu0 0.0
      %2099 = vmatpush.msra.mxu0 0.0
      %2100 = vmatpush.msra.mxu0 0.0
      %2101 = vmatpush.msra.mxu0 0.0
      %2102 = vmatpush.msra.mxu0 0.0
      %2103 = vmatpush.msra.mxu0 %v1880
      %2104 = vmatpush.msra.mxu0 %v1879
      %2105 = vmatpush.msra.mxu0 %v1878
      %2106 = vmatpush.msra.mxu0 %v1877
      %2107 = vmatpush.msra.mxu0 %v1876
      %2108 = vmatpush.msra.mxu0 %v1875
      %2109 = vmatpush.msra.mxu0 %v1874
      %2110 = vmatpush.msra.mxu0 %v1873
      %2111 = vmatmul.f32.gmra.mxu0 %v2072
      %v2112 = vpop.f32.mrf.mxu0
      %v2113 = vadd.f32 0.0, %v2112
      %2114 = vmatmul.f32.gmra.mxu0 %v2075
      %v2115 = vpop.f32.mrf.mxu0
      %v2116 = vadd.f32 0.0, %v2115
      %2117 = vmatmul.f32.gmra.mxu0 %v2078
      %v2118 = vpop.f32.mrf.mxu0
      %v2119 = vadd.f32 0.0, %v2118
      %2120 = vmatmul.f32.gmra.mxu0 %v2081
      %v2121 = vpop.f32.mrf.mxu0
      %v2122 = vadd.f32 0.0, %v2121
      %2123 = vmatmul.f32.gmra.mxu0 %v2084
      %v2124 = vpop.f32.mrf.mxu0
      %v2125 = vadd.f32 0.0, %v2124
      %2126 = vmatmul.f32.gmra.mxu0 %v2087
      %v2127 = vpop.f32.mrf.mxu0
      %v2128 = vadd.f32 0.0, %v2127
      %2129 = vmatmul.f32.gmra.mxu0 %v2090
      %v2130 = vpop.f32.mrf.mxu0
      %v2131 = vadd.f32 0.0, %v2130
      %2132 = vmatmul.f32.gmra.mxu0 %v2093
      %v2133 = vpop.f32.mrf.mxu0
      %v2134 = vadd.f32 0.0, %v2133
      %2135 = vdwg.mxu0
      %v2136 = vld [vmem:[%s9] sm:$0xff]
      %2137 = vrot.lane.b32.xlu0 %v1882, 120
      %v2138 = vpop.permute.xlu0 %2137
      %2139 = vrot.lane.b32.xlu0 %v1883, 120
      %v2140 = vpop.permute.xlu0 %2139
      %2141 = vrot.lane.b32.xlu0 %v1884, 120
      %v2142 = vpop.permute.xlu0 %2141
      %2143 = vrot.lane.b32.xlu0 %v1885, 120
      %v2144 = vpop.permute.xlu0 %2143
      %2145 = vrot.lane.b32.xlu0 %v1886, 120
      %v2146 = vpop.permute.xlu0 %2145
      %2147 = vrot.lane.b32.xlu0 %v1887, 120
      %v2148 = vpop.permute.xlu0 %2147
      %2149 = vrot.lane.b32.xlu0 %v1888, 120
      %v2150 = vpop.permute.xlu0 %2149
      %2151 = vrot.lane.b32.xlu0 %v1889, 120
      %v2152 = vpop.permute.xlu0 %2151
      %2153 = vrot.lane.b32.xlu0 %v1857, 120
      %v2154 = vpop.permute.xlu0 %2153
      %2155 = vrot.lane.b32.xlu0 %v1858, 120
      %v2156 = vpop.permute.xlu0 %2155
      %2157 = vrot.lane.b32.xlu0 %v1859, 120
      %v2158 = vpop.permute.xlu0 %2157
      %2159 = vrot.lane.b32.xlu0 %v1860, 120
      %v2160 = vpop.permute.xlu0 %2159
      %2161 = vrot.lane.b32.xlu0 %v1861, 120
      %v2162 = vpop.permute.xlu0 %2161
      %2163 = vrot.lane.b32.xlu0 %v1862, 120
      %v2164 = vpop.permute.xlu0 %2163
      %2165 = vrot.lane.b32.xlu0 %v1863, 120
      %v2166 = vpop.permute.xlu0 %2165
      %2167 = vrot.lane.b32.xlu0 %v1864, 120
      %v2168 = vpop.permute.xlu0 %2167
      %v2169 = vsel %vm1893, %v2138, 0
      %v2171 = vsel %vm1893, %v2140, 0
      %v2173 = vsel %vm1893, %v2142, 0
      %v2175 = vsel %vm1893, %v2144, 0
      %v2177 = vsel %vm1893, %v2146, 0
      %v2179 = vsel %vm1893, %v2148, 0
      %v2181 = vsel %vm1893, %v2150, 0
      %v2183 = vsel %vm1893, %v2152, 0
      %v2185 = vsel %vm1893, %v2154, 0
      %v2187 = vsel %vm1893, %v2156, 0
      %v2189 = vsel %vm1893, %v2158, 0
      %v2191 = vsel %vm1893, %v2160, 0
      %v2193 = vsel %vm1893, %v2162, 0
      %v2195 = vsel %vm1893, %v2164, 0
      %v2197 = vsel %vm1893, %v2166, 0
      %v2199 = vsel %vm1893, %v2168, 0
      %2201 = vmatpush.xpose.msra.mxu0 0.0
      %2202 = vmatpush.xpose.msra.mxu0 0.0
      %2203 = vmatpush.xpose.msra.mxu0 0.0
      %2204 = vmatpush.xpose.msra.mxu0 0.0
      %2205 = vmatpush.xpose.msra.mxu0 0.0
      %2206 = vmatpush.xpose.msra.mxu0 0.0
      %2207 = vmatpush.xpose.msra.mxu0 0.0
      %2208 = vmatpush.xpose.msra.mxu0 0.0
      %2209 = vmatpush.xpose.msra.mxu0 %v2199
      %2210 = vmatpush.xpose.msra.mxu0 %v2197
      %2211 = vmatpush.xpose.msra.mxu0 %v2195
      %2212 = vmatpush.xpose.msra.mxu0 %v2193
      %2213 = vmatpush.xpose.msra.mxu0 %v2191
      %2214 = vmatpush.xpose.msra.mxu0 %v2189
      %2215 = vmatpush.xpose.msra.mxu0 %v2187
      %2216 = vmatpush.xpose.msra.mxu0 %v2185
      %2217 = vmatmul.f32.gmra.mxu0 %v2169
      %v2218 = vpop.f32.mrf.mxu0
      %v2219 = vadd.f32 %v1891, %v2218
      %2220 = vmatmul.f32.gmra.mxu0 %v2171
      %v2221 = vpop.f32.mrf.mxu0
      %v2222 = vadd.f32 %v1891, %v2221
      %2223 = vmatmul.f32.gmra.mxu0 %v2173
      %v2224 = vpop.f32.mrf.mxu0
      %v2225 = vadd.f32 %v1891, %v2224
      %2226 = vmatmul.f32.gmra.mxu0 %v2175
      %v2227 = vpop.f32.mrf.mxu0
      %v2228 = vadd.f32 %v1891, %v2227
      %2229 = vmatmul.f32.gmra.mxu0 %v2177
      %v2230 = vpop.f32.mrf.mxu0
      %v2231 = vadd.f32 %v1891, %v2230
      %2232 = vmatmul.f32.gmra.mxu0 %v2179
      %v2233 = vpop.f32.mrf.mxu0
      %v2234 = vadd.f32 %v1891, %v2233
      %2235 = vmatmul.f32.gmra.mxu0 %v2181
      %v2236 = vpop.f32.mrf.mxu0
      %v2237 = vadd.f32 %v1891, %v2236
      %2238 = vmatmul.f32.gmra.mxu0 %v2183
      %v2239 = vpop.f32.mrf.mxu0
      %v2240 = vadd.f32 %v1891, %v2239
      %2241 = vdwg.mxu0
      %v2242 = vsel %vm601, %v2219, -inf
      %2243 = vmax.xlane.f32.xlu0 %v2242
      %v2244 = vpop.xlane.xlu0 %2243
      %v2245 = vsel %vm601, %v2222, -inf
      %2246 = vmax.xlane.f32.xlu0 %v2245
      %v2247 = vpop.xlane.xlu0 %2246
      %v2248 = vsel %vm601, %v2225, -inf
      %2249 = vmax.xlane.f32.xlu0 %v2248
      %v2250 = vpop.xlane.xlu0 %2249
      %v2251 = vsel %vm601, %v2228, -inf
      %2252 = vmax.xlane.f32.xlu0 %v2251
      %v2253 = vpop.xlane.xlu0 %2252
      %v2254 = vsel %vm601, %v2231, -inf
      %2255 = vmax.xlane.f32.xlu0 %v2254
      %v2256 = vpop.xlane.xlu0 %2255
      %v2257 = vsel %vm601, %v2234, -inf
      %2258 = vmax.xlane.f32.xlu0 %v2257
      %v2259 = vpop.xlane.xlu0 %2258
      %v2260 = vsel %vm601, %v2237, -inf
      %2261 = vmax.xlane.f32.xlu0 %v2260
      %v2262 = vpop.xlane.xlu0 %2261
      %v2263 = vsel %vm601, %v2240, -inf
      %2264 = vmax.xlane.f32.xlu0 %v2263
      %v2265 = vpop.xlane.xlu0 %2264
      %v2266 = vsub.f32 %v2219, %v2244
      %v2267 = vsub.f32 %v2222, %v2247
      %v2268 = vsub.f32 %v2225, %v2250
      %v2269 = vsub.f32 %v2228, %v2253
      %v2270 = vsub.f32 %v2231, %v2256
      %v2271 = vsub.f32 %v2234, %v2259
      %v2272 = vsub.f32 %v2237, %v2262
      %v2273 = vsub.f32 %v2240, %v2265
      %v2274 = vmul.f32 %v2266, 1.442695
      %v2275 = vpow.pop %v2274
      %v2276 = vmul.f32 %v2267, 1.442695
      %v2277 = vpow.pop %v2276
      %v2278 = vmul.f32 %v2268, 1.442695
      %v2279 = vpow.pop %v2278
      %v2280 = vmul.f32 %v2269, 1.442695
      %v2281 = vpow.pop %v2280
      %v2282 = vmul.f32 %v2270, 1.442695
      %v2283 = vpow.pop %v2282
      %v2284 = vmul.f32 %v2271, 1.442695
      %v2285 = vpow.pop %v2284
      %v2286 = vmul.f32 %v2272, 1.442695
      %v2287 = vpow.pop %v2286
      %v2288 = vmul.f32 %v2273, 1.442695
      %v2289 = vpow.pop %v2288
      %v2290 = vsel %vm601, %v2275, 0.0
      %2291 = vadd.xlane.f32.xlu0 %v2290
      %v2292 = vpop.xlane.xlu0 %2291
      %v2293 = vsel %vm601, %v2277, 0.0
      %2294 = vadd.xlane.f32.xlu0 %v2293
      %v2295 = vpop.xlane.xlu0 %2294
      %v2296 = vsel %vm601, %v2279, 0.0
      %2297 = vadd.xlane.f32.xlu0 %v2296
      %v2298 = vpop.xlane.xlu0 %2297
      %v2299 = vsel %vm601, %v2281, 0.0
      %2300 = vadd.xlane.f32.xlu0 %v2299
      %v2301 = vpop.xlane.xlu0 %2300
      %v2302 = vsel %vm601, %v2283, 0.0
      %2303 = vadd.xlane.f32.xlu0 %v2302
      %v2304 = vpop.xlane.xlu0 %2303
      %v2305 = vsel %vm601, %v2285, 0.0
      %2306 = vadd.xlane.f32.xlu0 %v2305
      %v2307 = vpop.xlane.xlu0 %2306
      %v2308 = vsel %vm601, %v2287, 0.0
      %2309 = vadd.xlane.f32.xlu0 %v2308
      %v2310 = vpop.xlane.xlu0 %2309
      %v2311 = vsel %vm601, %v2289, 0.0
      %2312 = vadd.xlane.f32.xlu0 %v2311
      %v2313 = vpop.xlane.xlu0 %2312
      %v2314 = vrcp.pop %v2292
      %v2315 = vrcp.pop %v2295
      %v2316 = vrcp.pop %v2298
      %v2317 = vrcp.pop %v2301
      %v2318 = vrcp.pop %v2304
      %v2319 = vrcp.pop %v2307
      %v2320 = vrcp.pop %v2310
      %v2321 = vrcp.pop %v2313
      %v2322 = vmul.f32 %v2275, %v2314
      %v2323 = vmul.f32 %v2277, %v2315
      %v2324 = vmul.f32 %v2279, %v2316
      %v2325 = vmul.f32 %v2281, %v2317
      %v2326 = vmul.f32 %v2283, %v2318
      %v2327 = vmul.f32 %v2285, %v2319
      %v2328 = vmul.f32 %v2287, %v2320
      %v2329 = vmul.f32 %v2289, %v2321
      %2338 = vrot.lane.b32.xlu0 %v1873, 120
      %v2339 = vpop.permute.xlu0 %2338
      %2340 = vrot.lane.b32.xlu0 %v1874, 120
      %v2341 = vpop.permute.xlu0 %2340
      %2342 = vrot.lane.b32.xlu0 %v1875, 120
      %v2343 = vpop.permute.xlu0 %2342
      %2344 = vrot.lane.b32.xlu0 %v1876, 120
      %v2345 = vpop.permute.xlu0 %2344
      %2346 = vrot.lane.b32.xlu0 %v1877, 120
      %v2347 = vpop.permute.xlu0 %2346
      %2348 = vrot.lane.b32.xlu0 %v1878, 120
      %v2349 = vpop.permute.xlu0 %2348
      %2350 = vrot.lane.b32.xlu0 %v1879, 120
      %v2351 = vpop.permute.xlu0 %2350
      %2352 = vrot.lane.b32.xlu0 %v1880, 120
      %v2353 = vpop.permute.xlu0 %2352
      %v2363 = vsel %vm601, %v2322, 0
      %v2366 = vsel %vm601, %v2323, 0
      %v2369 = vsel %vm601, %v2324, 0
      %v2372 = vsel %vm601, %v2325, 0
      %v2375 = vsel %vm601, %v2326, 0
      %v2378 = vsel %vm601, %v2327, 0
      %v2381 = vsel %vm601, %v2328, 0
      %v2384 = vsel %vm601, %v2329, 0
      %2386 = vmatpush.msra.mxu0 0.0
      %2387 = vmatpush.msra.mxu0 0.0
      %2388 = vmatpush.msra.mxu0 0.0
      %2389 = vmatpush.msra.mxu0 0.0
      %2390 = vmatpush.msra.mxu0 0.0
      %2391 = vmatpush.msra.mxu0 0.0
      %2392 = vmatpush.msra.mxu0 0.0
      %2393 = vmatpush.msra.mxu0 0.0
      %2394 = vmatpush.msra.mxu0 %v2353
      %2395 = vmatpush.msra.mxu0 %v2351
      %2396 = vmatpush.msra.mxu0 %v2349
      %2397 = vmatpush.msra.mxu0 %v2347
      %2398 = vmatpush.msra.mxu0 %v2345
      %2399 = vmatpush.msra.mxu0 %v2343
      %2400 = vmatpush.msra.mxu0 %v2341
      %2401 = vmatpush.msra.mxu0 %v2339
      %2402 = vmatmul.f32.gmra.mxu0 %v2363
      %v2403 = vpop.f32.mrf.mxu0
      %v2404 = vadd.f32 0.0, %v2403
      %2405 = vmatmul.f32.gmra.mxu0 %v2366
      %v2406 = vpop.f32.mrf.mxu0
      %v2407 = vadd.f32 0.0, %v2406
      %2408 = vmatmul.f32.gmra.mxu0 %v2369
      %v2409 = vpop.f32.mrf.mxu0
      %v2410 = vadd.f32 0.0, %v2409
      %2411 = vmatmul.f32.gmra.mxu0 %v2372
      %v2412 = vpop.f32.mrf.mxu0
      %v2413 = vadd.f32 0.0, %v2412
      %2414 = vmatmul.f32.gmra.mxu0 %v2375
      %v2415 = vpop.f32.mrf.mxu0
      %v2416 = vadd.f32 0.0, %v2415
      %2417 = vmatmul.f32.gmra.mxu0 %v2378
      %v2418 = vpop.f32.mrf.mxu0
      %v2419 = vadd.f32 0.0, %v2418
      %2420 = vmatmul.f32.gmra.mxu0 %v2381
      %v2421 = vpop.f32.mrf.mxu0
      %v2422 = vadd.f32 0.0, %v2421
      %2423 = vmatmul.f32.gmra.mxu0 %v2384
      %v2424 = vpop.f32.mrf.mxu0
      %v2425 = vadd.f32 0.0, %v2424
      %2426 = vdwg.mxu0
      %v2427 = vld [vmem:[%s9 + $0x8] sm:$0xff]
      %v2429 = vsel %vm1893, %v2404, 0
      %v2432 = vsel %vm1893, %v2407, 0
      %v2435 = vsel %vm1893, %v2410, 0
      %v2438 = vsel %vm1893, %v2413, 0
      %v2441 = vsel %vm1893, %v2416, 0
      %v2444 = vsel %vm1893, %v2419, 0
      %v2447 = vsel %vm1893, %v2422, 0
      %v2450 = vsel %vm1893, %v2425, 0
      %2452 = vmatpush.msra.mxu0 0.0
      %2453 = vmatpush.msra.mxu0 0.0
      %2454 = vmatpush.msra.mxu0 0.0
      %2455 = vmatpush.msra.mxu0 0.0
      %2456 = vmatpush.msra.mxu0 0.0
      %2457 = vmatpush.msra.mxu0 0.0
      %2458 = vmatpush.msra.mxu0 0.0
      %2459 = vmatpush.msra.mxu0 0.0
      %2460 = vmatpush.msra.mxu0 0.0
      %2461 = vmatpush.msra.mxu0 0.0
      %2462 = vmatpush.msra.mxu0 0.0
      %2463 = vmatpush.msra.mxu0 0.0
      %2464 = vmatpush.msra.mxu0 0.0
      %2465 = vmatpush.msra.mxu0 0.0
      %2466 = vmatpush.msra.mxu0 0.0
      %2467 = vmatpush.msra.mxu0 %v2427
      %2468 = vmatmul.f32.gmra.mxu0 %v2429
      %v2469 = vpop.f32.mrf.mxu0
      %v2470 = vadd.f32 0.0, %v2469
      %2471 = vmatmul.f32.gmra.mxu0 %v2432
      %v2472 = vpop.f32.mrf.mxu0
      %v2473 = vadd.f32 0.0, %v2472
      %2474 = vmatmul.f32.gmra.mxu0 %v2435
      %v2475 = vpop.f32.mrf.mxu0
      %v2476 = vadd.f32 0.0, %v2475
      %2477 = vmatmul.f32.gmra.mxu0 %v2438
      %v2478 = vpop.f32.mrf.mxu0
      %v2479 = vadd.f32 0.0, %v2478
      %2480 = vmatmul.f32.gmra.mxu0 %v2441
      %v2481 = vpop.f32.mrf.mxu0
      %v2482 = vadd.f32 0.0, %v2481
      %2483 = vmatmul.f32.gmra.mxu0 %v2444
      %v2484 = vpop.f32.mrf.mxu0
      %v2485 = vadd.f32 0.0, %v2484
      %2486 = vmatmul.f32.gmra.mxu0 %v2447
      %v2487 = vpop.f32.mrf.mxu0
      %v2488 = vadd.f32 0.0, %v2487
      %2489 = vmatmul.f32.gmra.mxu0 %v2450
      %v2490 = vpop.f32.mrf.mxu0
      %v2491 = vadd.f32 0.0, %v2490
      %2492 = vdwg.mxu0
      %v2494 = vsel %vm1893, %v2113, 0
      %v2497 = vsel %vm1893, %v2116, 0
      %v2500 = vsel %vm1893, %v2119, 0
      %v2503 = vsel %vm1893, %v2122, 0
      %v2506 = vsel %vm1893, %v2125, 0
      %v2509 = vsel %vm1893, %v2128, 0
      %v2512 = vsel %vm1893, %v2131, 0
      %v2515 = vsel %vm1893, %v2134, 0
      %2517 = vmatpush.msra.mxu0 0.0
      %2518 = vmatpush.msra.mxu0 0.0
      %2519 = vmatpush.msra.mxu0 0.0
      %2520 = vmatpush.msra.mxu0 0.0
      %2521 = vmatpush.msra.mxu0 0.0
      %2522 = vmatpush.msra.mxu0 0.0
      %2523 = vmatpush.msra.mxu0 0.0
      %2524 = vmatpush.msra.mxu0 0.0
      %2525 = vmatpush.msra.mxu0 0.0
      %2526 = vmatpush.msra.mxu0 0.0
      %2527 = vmatpush.msra.mxu0 0.0
      %2528 = vmatpush.msra.mxu0 0.0
      %2529 = vmatpush.msra.mxu0 0.0
      %2530 = vmatpush.msra.mxu0 0.0
      %2531 = vmatpush.msra.mxu0 0.0
      %2532 = vmatpush.msra.mxu0 %v2136
      %2533 = vmatmul.f32.gmra.mxu0 %v2494
      %v2534 = vpop.f32.mrf.mxu0
      %v2535 = vadd.f32 %v2470, %v2534
      %2536 = vmatmul.f32.gmra.mxu0 %v2497
      %v2537 = vpop.f32.mrf.mxu0
      %v2538 = vadd.f32 %v2473, %v2537
      %2539 = vmatmul.f32.gmra.mxu0 %v2500
      %v2540 = vpop.f32.mrf.mxu0
      %v2541 = vadd.f32 %v2476, %v2540
      %2542 = vmatmul.f32.gmra.mxu0 %v2503
      %v2543 = vpop.f32.mrf.mxu0
      %v2544 = vadd.f32 %v2479, %v2543
      %2545 = vmatmul.f32.gmra.mxu0 %v2506
      %v2546 = vpop.f32.mrf.mxu0
      %v2547 = vadd.f32 %v2482, %v2546
      %2548 = vmatmul.f32.gmra.mxu0 %v2509
      %v2549 = vpop.f32.mrf.mxu0
      %v2550 = vadd.f32 %v2485, %v2549
      %2551 = vmatmul.f32.gmra.mxu0 %v2512
      %v2552 = vpop.f32.mrf.mxu0
      %v2553 = vadd.f32 %v2488, %v2552
      %2554 = vmatmul.f32.gmra.mxu0 %v2515
      %v2555 = vpop.f32.mrf.mxu0
      %v2556 = vadd.f32 %v2491, %v2555
      %2557 = vdwg.mxu0
      %2558 = vrot.lane.b32.xlu0 %v1882, 112
      %v2559 = vpop.permute.xlu0 %2558
      %2560 = vrot.lane.b32.xlu0 %v1883, 112
      %v2561 = vpop.permute.xlu0 %2560
      %2562 = vrot.lane.b32.xlu0 %v1884, 112
      %v2563 = vpop.permute.xlu0 %2562
      %2564 = vrot.lane.b32.xlu0 %v1885, 112
      %v2565 = vpop.permute.xlu0 %2564
      %2566 = vrot.lane.b32.xlu0 %v1886, 112
      %v2567 = vpop.permute.xlu0 %2566
      %2568 = vrot.lane.b32.xlu0 %v1887, 112
      %v2569 = vpop.permute.xlu0 %2568
      %2570 = vrot.lane.b32.xlu0 %v1888, 112
      %v2571 = vpop.permute.xlu0 %2570
      %2572 = vrot.lane.b32.xlu0 %v1889, 112
      %v2573 = vpop.permute.xlu0 %2572
      %2574 = vrot.lane.b32.xlu0 %v1857, 112
      %v2575 = vpop.permute.xlu0 %2574
      %2576 = vrot.lane.b32.xlu0 %v1858, 112
      %v2577 = vpop.permute.xlu0 %2576
      %2578 = vrot.lane.b32.xlu0 %v1859, 112
      %v2579 = vpop.permute.xlu0 %2578
      %2580 = vrot.lane.b32.xlu0 %v1860, 112
      %v2581 = vpop.permute.xlu0 %2580
      %2582 = vrot.lane.b32.xlu0 %v1861, 112
      %v2583 = vpop.permute.xlu0 %2582
      %2584 = vrot.lane.b32.xlu0 %v1862, 112
      %v2585 = vpop.permute.xlu0 %2584
      %2586 = vrot.lane.b32.xlu0 %v1863, 112
      %v2587 = vpop.permute.xlu0 %2586
      %2588 = vrot.lane.b32.xlu0 %v1864, 112
      %v2589 = vpop.permute.xlu0 %2588
      %v2590 = vsel %vm1893, %v2559, 0
      %v2592 = vsel %vm1893, %v2561, 0
      %v2594 = vsel %vm1893, %v2563, 0
      %v2596 = vsel %vm1893, %v2565, 0
      %v2598 = vsel %vm1893, %v2567, 0
      %v2600 = vsel %vm1893, %v2569, 0
      %v2602 = vsel %vm1893, %v2571, 0
      %v2604 = vsel %vm1893, %v2573, 0
      %v2606 = vsel %vm1893, %v2575, 0
      %v2608 = vsel %vm1893, %v2577, 0
      %v2610 = vsel %vm1893, %v2579, 0
      %v2612 = vsel %vm1893, %v2581, 0
      %v2614 = vsel %vm1893, %v2583, 0
      %v2616 = vsel %vm1893, %v2585, 0
      %v2618 = vsel %vm1893, %v2587, 0
      %v2620 = vsel %vm1893, %v2589, 0
      %2622 = vmatpush.xpose.msra.mxu0 0.0
      %2623 = vmatpush.xpose.msra.mxu0 0.0
      %2624 = vmatpush.xpose.msra.mxu0 0.0
      %2625 = vmatpush.xpose.msra.mxu0 0.0
      %2626 = vmatpush.xpose.msra.mxu0 0.0
      %2627 = vmatpush.xpose.msra.mxu0 0.0
      %2628 = vmatpush.xpose.msra.mxu0 0.0
      %2629 = vmatpush.xpose.msra.mxu0 0.0
      %2630 = vmatpush.xpose.msra.mxu0 %v2620
      %2631 = vmatpush.xpose.msra.mxu0 %v2618
      %2632 = vmatpush.xpose.msra.mxu0 %v2616
      %2633 = vmatpush.xpose.msra.mxu0 %v2614
      %2634 = vmatpush.xpose.msra.mxu0 %v2612
      %2635 = vmatpush.xpose.msra.mxu0 %v2610
      %2636 = vmatpush.xpose.msra.mxu0 %v2608
      %2637 = vmatpush.xpose.msra.mxu0 %v2606
      %2638 = vmatmul.f32.gmra.mxu0 %v2590
      %v2639 = vpop.f32.mrf.mxu0
      %v2640 = vadd.f32 %v1891, %v2639
      %2641 = vmatmul.f32.gmra.mxu0 %v2592
      %v2642 = vpop.f32.mrf.mxu0
      %v2643 = vadd.f32 %v1891, %v2642
      %2644 = vmatmul.f32.gmra.mxu0 %v2594
      %v2645 = vpop.f32.mrf.mxu0
      %v2646 = vadd.f32 %v1891, %v2645
      %2647 = vmatmul.f32.gmra.mxu0 %v2596
      %v2648 = vpop.f32.mrf.mxu0
      %v2649 = vadd.f32 %v1891, %v2648
      %2650 = vmatmul.f32.gmra.mxu0 %v2598
      %v2651 = vpop.f32.mrf.mxu0
      %v2652 = vadd.f32 %v1891, %v2651
      %2653 = vmatmul.f32.gmra.mxu0 %v2600
      %v2654 = vpop.f32.mrf.mxu0
      %v2655 = vadd.f32 %v1891, %v2654
      %2656 = vmatmul.f32.gmra.mxu0 %v2602
      %v2657 = vpop.f32.mrf.mxu0
      %v2658 = vadd.f32 %v1891, %v2657
      %2659 = vmatmul.f32.gmra.mxu0 %v2604
      %v2660 = vpop.f32.mrf.mxu0
      %v2661 = vadd.f32 %v1891, %v2660
      %2662 = vdwg.mxu0
      %v2663 = vsel %vm601, %v2640, -inf
      %2664 = vmax.xlane.f32.xlu0 %v2663
      %v2665 = vpop.xlane.xlu0 %2664
      %v2666 = vsel %vm601, %v2643, -inf
      %2667 = vmax.xlane.f32.xlu0 %v2666
      %v2668 = vpop.xlane.xlu0 %2667
      %v2669 = vsel %vm601, %v2646, -inf
      %2670 = vmax.xlane.f32.xlu0 %v2669
      %v2671 = vpop.xlane.xlu0 %2670
      %v2672 = vsel %vm601, %v2649, -inf
      %2673 = vmax.xlane.f32.xlu0 %v2672
      %v2674 = vpop.xlane.xlu0 %2673
      %v2675 = vsel %vm601, %v2652, -inf
      %2676 = vmax.xlane.f32.xlu0 %v2675
      %v2677 = vpop.xlane.xlu0 %2676
      %v2678 = vsel %vm601, %v2655, -inf
      %2679 = vmax.xlane.f32.xlu0 %v2678
      %v2680 = vpop.xlane.xlu0 %2679
      %v2681 = vsel %vm601, %v2658, -inf
      %2682 = vmax.xlane.f32.xlu0 %v2681
      %v2683 = vpop.xlane.xlu0 %2682
      %v2684 = vsel %vm601, %v2661, -inf
      %2685 = vmax.xlane.f32.xlu0 %v2684
      %v2686 = vpop.xlane.xlu0 %2685
      %v2687 = vsub.f32 %v2640, %v2665
      %v2688 = vsub.f32 %v2643, %v2668
      %v2689 = vsub.f32 %v2646, %v2671
      %v2690 = vsub.f32 %v2649, %v2674
      %v2691 = vsub.f32 %v2652, %v2677
      %v2692 = vsub.f32 %v2655, %v2680
      %v2693 = vsub.f32 %v2658, %v2683
      %v2694 = vsub.f32 %v2661, %v2686
      %v2695 = vmul.f32 %v2687, 1.442695
      %v2696 = vpow.pop %v2695
      %v2697 = vmul.f32 %v2688, 1.442695
      %v2698 = vpow.pop %v2697
      %v2699 = vmul.f32 %v2689, 1.442695
      %v2700 = vpow.pop %v2699
      %v2701 = vmul.f32 %v2690, 1.442695
      %v2702 = vpow.pop %v2701
      %v2703 = vmul.f32 %v2691, 1.442695
      %v2704 = vpow.pop %v2703
      %v2705 = vmul.f32 %v2692, 1.442695
      %v2706 = vpow.pop %v2705
      %v2707 = vmul.f32 %v2693, 1.442695
      %v2708 = vpow.pop %v2707
      %v2709 = vmul.f32 %v2694, 1.442695
      %v2710 = vpow.pop %v2709
      %v2711 = vsel %vm601, %v2696, 0.0
      %2712 = vadd.xlane.f32.xlu0 %v2711
      %v2713 = vpop.xlane.xlu0 %2712
      %v2714 = vsel %vm601, %v2698, 0.0
      %2715 = vadd.xlane.f32.xlu0 %v2714
      %v2716 = vpop.xlane.xlu0 %2715
      %v2717 = vsel %vm601, %v2700, 0.0
      %2718 = vadd.xlane.f32.xlu0 %v2717
      %v2719 = vpop.xlane.xlu0 %2718
      %v2720 = vsel %vm601, %v2702, 0.0
      %2721 = vadd.xlane.f32.xlu0 %v2720
      %v2722 = vpop.xlane.xlu0 %2721
      %v2723 = vsel %vm601, %v2704, 0.0
      %2724 = vadd.xlane.f32.xlu0 %v2723
      %v2725 = vpop.xlane.xlu0 %2724
      %v2726 = vsel %vm601, %v2706, 0.0
      %2727 = vadd.xlane.f32.xlu0 %v2726
      %v2728 = vpop.xlane.xlu0 %2727
      %v2729 = vsel %vm601, %v2708, 0.0
      %2730 = vadd.xlane.f32.xlu0 %v2729
      %v2731 = vpop.xlane.xlu0 %2730
      %v2732 = vsel %vm601, %v2710, 0.0
      %2733 = vadd.xlane.f32.xlu0 %v2732
      %v2734 = vpop.xlane.xlu0 %2733
      %v2735 = vrcp.pop %v2713
      %v2736 = vrcp.pop %v2716
      %v2737 = vrcp.pop %v2719
      %v2738 = vrcp.pop %v2722
      %v2739 = vrcp.pop %v2725
      %v2740 = vrcp.pop %v2728
      %v2741 = vrcp.pop %v2731
      %v2742 = vrcp.pop %v2734
      %v2743 = vmul.f32 %v2696, %v2735
      %v2744 = vmul.f32 %v2698, %v2736
      %v2745 = vmul.f32 %v2700, %v2737
      %v2746 = vmul.f32 %v2702, %v2738
      %v2747 = vmul.f32 %v2704, %v2739
      %v2748 = vmul.f32 %v2706, %v2740
      %v2749 = vmul.f32 %v2708, %v2741
      %v2750 = vmul.f32 %v2710, %v2742
      %2751 = vrot.lane.b32.xlu0 %v1873, 112
      %v2752 = vpop.permute.xlu0 %2751
      %2753 = vrot.lane.b32.xlu0 %v1874, 112
      %v2754 = vpop.permute.xlu0 %2753
      %2755 = vrot.lane.b32.xlu0 %v1875, 112
      %v2756 = vpop.permute.xlu0 %2755
      %2757 = vrot.lane.b32.xlu0 %v1876, 112
      %v2758 = vpop.permute.xlu0 %2757
      %2759 = vrot.lane.b32.xlu0 %v1877, 112
      %v2760 = vpop.permute.xlu0 %2759
      %2761 = vrot.lane.b32.xlu0 %v1878, 112
      %v2762 = vpop.permute.xlu0 %2761
      %2763 = vrot.lane.b32.xlu0 %v1879, 112
      %v2764 = vpop.permute.xlu0 %2763
      %2765 = vrot.lane.b32.xlu0 %v1880, 112
      %v2766 = vpop.permute.xlu0 %2765
      %v2776 = vsel %vm601, %v2743, 0
      %v2779 = vsel %vm601, %v2744, 0
      %v2782 = vsel %vm601, %v2745, 0
      %v2785 = vsel %vm601, %v2746, 0
      %v2788 = vsel %vm601, %v2747, 0
      %v2791 = vsel %vm601, %v2748, 0
      %v2794 = vsel %vm601, %v2749, 0
      %v2797 = vsel %vm601, %v2750, 0
      %2799 = vmatpush.msra.mxu0 0.0
      %2800 = vmatpush.msra.mxu0 0.0
      %2801 = vmatpush.msra.mxu0 0.0
      %2802 = vmatpush.msra.mxu0 0.0
      %2803 = vmatpush.msra.mxu0 0.0
      %2804 = vmatpush.msra.mxu0 0.0
      %2805 = vmatpush.msra.mxu0 0.0
      %2806 = vmatpush.msra.mxu0 0.0
      %2807 = vmatpush.msra.mxu0 %v2766
      %2808 = vmatpush.msra.mxu0 %v2764
      %2809 = vmatpush.msra.mxu0 %v2762
      %2810 = vmatpush.msra.mxu0 %v2760
      %2811 = vmatpush.msra.mxu0 %v2758
      %2812 = vmatpush.msra.mxu0 %v2756
      %2813 = vmatpush.msra.mxu0 %v2754
      %2814 = vmatpush.msra.mxu0 %v2752
      %2815 = vmatmul.f32.gmra.mxu0 %v2776
      %v2816 = vpop.f32.mrf.mxu0
      %v2817 = vadd.f32 0.0, %v2816
      %2818 = vmatmul.f32.gmra.mxu0 %v2779
      %v2819 = vpop.f32.mrf.mxu0
      %v2820 = vadd.f32 0.0, %v2819
      %2821 = vmatmul.f32.gmra.mxu0 %v2782
      %v2822 = vpop.f32.mrf.mxu0
      %v2823 = vadd.f32 0.0, %v2822
      %2824 = vmatmul.f32.gmra.mxu0 %v2785
      %v2825 = vpop.f32.mrf.mxu0
      %v2826 = vadd.f32 0.0, %v2825
      %2827 = vmatmul.f32.gmra.mxu0 %v2788
      %v2828 = vpop.f32.mrf.mxu0
      %v2829 = vadd.f32 0.0, %v2828
      %2830 = vmatmul.f32.gmra.mxu0 %v2791
      %v2831 = vpop.f32.mrf.mxu0
      %v2832 = vadd.f32 0.0, %v2831
      %2833 = vmatmul.f32.gmra.mxu0 %v2794
      %v2834 = vpop.f32.mrf.mxu0
      %v2835 = vadd.f32 0.0, %v2834
      %2836 = vmatmul.f32.gmra.mxu0 %v2797
      %v2837 = vpop.f32.mrf.mxu0
      %v2838 = vadd.f32 0.0, %v2837
      %2839 = vdwg.mxu0
      %v2840 = vld [vmem:[%s9 + $0x10] sm:$0xff]
      %v2842 = vsel %vm1893, %v2817, 0
      %v2845 = vsel %vm1893, %v2820, 0
      %v2848 = vsel %vm1893, %v2823, 0
      %v2851 = vsel %vm1893, %v2826, 0
      %v2854 = vsel %vm1893, %v2829, 0
      %v2857 = vsel %vm1893, %v2832, 0
      %v2860 = vsel %vm1893, %v2835, 0
      %v2863 = vsel %vm1893, %v2838, 0
      %2865 = vmatpush.msra.mxu0 0.0
      %2866 = vmatpush.msra.mxu0 0.0
      %2867 = vmatpush.msra.mxu0 0.0
      %2868 = vmatpush.msra.mxu0 0.0
      %2869 = vmatpush.msra.mxu0 0.0
      %2870 = vmatpush.msra.mxu0 0.0
      %2871 = vmatpush.msra.mxu0 0.0
      %2872 = vmatpush.msra.mxu0 0.0
      %2873 = vmatpush.msra.mxu0 0.0
      %2874 = vmatpush.msra.mxu0 0.0
      %2875 = vmatpush.msra.mxu0 0.0
      %2876 = vmatpush.msra.mxu0 0.0
      %2877 = vmatpush.msra.mxu0 0.0
      %2878 = vmatpush.msra.mxu0 0.0
      %2879 = vmatpush.msra.mxu0 0.0
      %2880 = vmatpush.msra.mxu0 %v2840
      %2881 = vmatmul.f32.gmra.mxu0 %v2842
      %v2882 = vpop.f32.mrf.mxu0
      %v2883 = vadd.f32 0.0, %v2882
      %2884 = vmatmul.f32.gmra.mxu0 %v2845
      %v2885 = vpop.f32.mrf.mxu0
      %v2886 = vadd.f32 0.0, %v2885
      %2887 = vmatmul.f32.gmra.mxu0 %v2848
      %v2888 = vpop.f32.mrf.mxu0
      %v2889 = vadd.f32 0.0, %v2888
      %2890 = vmatmul.f32.gmra.mxu0 %v2851
      %v2891 = vpop.f32.mrf.mxu0
      %v2892 = vadd.f32 0.0, %v2891
      %2893 = vmatmul.f32.gmra.mxu0 %v2854
      %v2894 = vpop.f32.mrf.mxu0
      %v2895 = vadd.f32 0.0, %v2894
      %2896 = vmatmul.f32.gmra.mxu0 %v2857
      %v2897 = vpop.f32.mrf.mxu0
      %v2898 = vadd.f32 0.0, %v2897
      %2899 = vmatmul.f32.gmra.mxu0 %v2860
      %v2900 = vpop.f32.mrf.mxu0
      %v2901 = vadd.f32 0.0, %v2900
      %2902 = vmatmul.f32.gmra.mxu0 %v2863
      %v2903 = vpop.f32.mrf.mxu0
      %v2904 = vadd.f32 0.0, %v2903
      %2905 = vdwg.mxu0
      %v2906 = vadd.f32 %v2535, %v2883
      %v2907 = vadd.f32 %v2538, %v2886
      %v2908 = vadd.f32 %v2541, %v2889
      %v2909 = vadd.f32 %v2544, %v2892
      %v2910 = vadd.f32 %v2547, %v2895
      %v2911 = vadd.f32 %v2550, %v2898
      %v2912 = vadd.f32 %v2553, %v2901
      %v2913 = vadd.f32 %v2556, %v2904
      %2914 = vrot.lane.b32.xlu0 %v1882, 104
      %v2915 = vpop.permute.xlu0 %2914
      %2916 = vrot.lane.b32.xlu0 %v1883, 104
      %v2917 = vpop.permute.xlu0 %2916
      %2918 = vrot.lane.b32.xlu0 %v1884, 104
      %v2919 = vpop.permute.xlu0 %2918
      %2920 = vrot.lane.b32.xlu0 %v1885, 104
      %v2921 = vpop.permute.xlu0 %2920
      %2922 = vrot.lane.b32.xlu0 %v1886, 104
      %v2923 = vpop.permute.xlu0 %2922
      %2924 = vrot.lane.b32.xlu0 %v1887, 104
      %v2925 = vpop.permute.xlu0 %2924
      %2926 = vrot.lane.b32.xlu0 %v1888, 104
      %v2927 = vpop.permute.xlu0 %2926
      %2928 = vrot.lane.b32.xlu0 %v1889, 104
      %v2929 = vpop.permute.xlu0 %2928
      %2930 = vrot.lane.b32.xlu0 %v1857, 104
      %v2931 = vpop.permute.xlu0 %2930
      %2932 = vrot.lane.b32.xlu0 %v1858, 104
      %v2933 = vpop.permute.xlu0 %2932
      %2934 = vrot.lane.b32.xlu0 %v1859, 104
      %v2935 = vpop.permute.xlu0 %2934
      %2936 = vrot.lane.b32.xlu0 %v1860, 104
      %v2937 = vpop.permute.xlu0 %2936
      %2938 = vrot.lane.b32.xlu0 %v1861, 104
      %v2939 = vpop.permute.xlu0 %2938
      %2940 = vrot.lane.b32.xlu0 %v1862, 104
      %v2941 = vpop.permute.xlu0 %2940
      %2942 = vrot.lane.b32.xlu0 %v1863, 104
      %v2943 = vpop.permute.xlu0 %2942
      %2944 = vrot.lane.b32.xlu0 %v1864, 104
      %v2945 = vpop.permute.xlu0 %2944
      %v2946 = vsel %vm1893, %v2915, 0
      %v2948 = vsel %vm1893, %v2917, 0
      %v2950 = vsel %vm1893, %v2919, 0
      %v2952 = vsel %vm1893, %v2921, 0
      %v2954 = vsel %vm1893, %v2923, 0
      %v2956 = vsel %vm1893, %v2925, 0
      %v2958 = vsel %vm1893, %v2927, 0
      %v2960 = vsel %vm1893, %v2929, 0
      %v2962 = vsel %vm1893, %v2931, 0
      %v2964 = vsel %vm1893, %v2933, 0
      %v2966 = vsel %vm1893, %v2935, 0
      %v2968 = vsel %vm1893, %v2937, 0
      %v2970 = vsel %vm1893, %v2939, 0
      %v2972 = vsel %vm1893, %v2941, 0
      %v2974 = vsel %vm1893, %v2943, 0
      %v2976 = vsel %vm1893, %v2945, 0
      %2978 = vmatpush.xpose.msra.mxu0 0.0
      %2979 = vmatpush.xpose.msra.mxu0 0.0
      %2980 = vmatpush.xpose.msra.mxu0 0.0
      %2981 = vmatpush.xpose.msra.mxu0 0.0
      %2982 = vmatpush.xpose.msra.mxu0 0.0
      %2983 = vmatpush.xpose.msra.mxu0 0.0
      %2984 = vmatpush.xpose.msra.mxu0 0.0
      %2985 = vmatpush.xpose.msra.mxu0 0.0
      %2986 = vmatpush.xpose.msra.mxu0 %v2976
      %2987 = vmatpush.xpose.msra.mxu0 %v2974
      %2988 = vmatpush.xpose.msra.mxu0 %v2972
      %2989 = vmatpush.xpose.msra.mxu0 %v2970
      %2990 = vmatpush.xpose.msra.mxu0 %v2968
      %2991 = vmatpush.xpose.msra.mxu0 %v2966
      %2992 = vmatpush.xpose.msra.mxu0 %v2964
      %2993 = vmatpush.xpose.msra.mxu0 %v2962
      %2994 = vmatmul.f32.gmra.mxu0 %v2946
      %v2995 = vpop.f32.mrf.mxu0
      %v2996 = vadd.f32 %v1891, %v2995
      %2997 = vmatmul.f32.gmra.mxu0 %v2948
      %v2998 = vpop.f32.mrf.mxu0
      %v2999 = vadd.f32 %v1891, %v2998
      %3000 = vmatmul.f32.gmra.mxu0 %v2950
      %v3001 = vpop.f32.mrf.mxu0
      %v3002 = vadd.f32 %v1891, %v3001
      %3003 = vmatmul.f32.gmra.mxu0 %v2952
      %v3004 = vpop.f32.mrf.mxu0
      %v3005 = vadd.f32 %v1891, %v3004
      %3006 = vmatmul.f32.gmra.mxu0 %v2954
      %v3007 = vpop.f32.mrf.mxu0
      %v3008 = vadd.f32 %v1891, %v3007
      %3009 = vmatmul.f32.gmra.mxu0 %v2956
      %v3010 = vpop.f32.mrf.mxu0
      %v3011 = vadd.f32 %v1891, %v3010
      %3012 = vmatmul.f32.gmra.mxu0 %v2958
      %v3013 = vpop.f32.mrf.mxu0
      %v3014 = vadd.f32 %v1891, %v3013
      %3015 = vmatmul.f32.gmra.mxu0 %v2960
      %v3016 = vpop.f32.mrf.mxu0
      %v3017 = vadd.f32 %v1891, %v3016
      %3018 = vdwg.mxu0
      %v3019 = vsel %vm601, %v2996, -inf
      %3020 = vmax.xlane.f32.xlu0 %v3019
      %v3021 = vpop.xlane.xlu0 %3020
      %v3022 = vsel %vm601, %v2999, -inf
      %3023 = vmax.xlane.f32.xlu0 %v3022
      %v3024 = vpop.xlane.xlu0 %3023
      %v3025 = vsel %vm601, %v3002, -inf
      %3026 = vmax.xlane.f32.xlu0 %v3025
      %v3027 = vpop.xlane.xlu0 %3026
      %v3028 = vsel %vm601, %v3005, -inf
      %3029 = vmax.xlane.f32.xlu0 %v3028
      %v3030 = vpop.xlane.xlu0 %3029
      %v3031 = vsel %vm601, %v3008, -inf
      %3032 = vmax.xlane.f32.xlu0 %v3031
      %v3033 = vpop.xlane.xlu0 %3032
      %v3034 = vsel %vm601, %v3011, -inf
      %3035 = vmax.xlane.f32.xlu0 %v3034
      %v3036 = vpop.xlane.xlu0 %3035
      %v3037 = vsel %vm601, %v3014, -inf
      %3038 = vmax.xlane.f32.xlu0 %v3037
      %v3039 = vpop.xlane.xlu0 %3038
      %v3040 = vsel %vm601, %v3017, -inf
      %3041 = vmax.xlane.f32.xlu0 %v3040
      %v3042 = vpop.xlane.xlu0 %3041
      %v3043 = vsub.f32 %v2996, %v3021
      %v3044 = vsub.f32 %v2999, %v3024
      %v3045 = vsub.f32 %v3002, %v3027
      %v3046 = vsub.f32 %v3005, %v3030
      %v3047 = vsub.f32 %v3008, %v3033
      %v3048 = vsub.f32 %v3011, %v3036
      %v3049 = vsub.f32 %v3014, %v3039
      %v3050 = vsub.f32 %v3017, %v3042
      %v3051 = vmul.f32 %v3043, 1.442695
      %v3052 = vpow.pop %v3051
      %v3053 = vmul.f32 %v3044, 1.442695
      %v3054 = vpow.pop %v3053
      %v3055 = vmul.f32 %v3045, 1.442695
      %v3056 = vpow.pop %v3055
      %v3057 = vmul.f32 %v3046, 1.442695
      %v3058 = vpow.pop %v3057
      %v3059 = vmul.f32 %v3047, 1.442695
      %v3060 = vpow.pop %v3059
      %v3061 = vmul.f32 %v3048, 1.442695
      %v3062 = vpow.pop %v3061
      %v3063 = vmul.f32 %v3049, 1.442695
      %v3064 = vpow.pop %v3063
      %v3065 = vmul.f32 %v3050, 1.442695
      %v3066 = vpow.pop %v3065
      %v3067 = vsel %vm601, %v3052, 0.0
      %3068 = vadd.xlane.f32.xlu0 %v3067
      %v3069 = vpop.xlane.xlu0 %3068
      %v3070 = vsel %vm601, %v3054, 0.0
      %3071 = vadd.xlane.f32.xlu0 %v3070
      %v3072 = vpop.xlane.xlu0 %3071
      %v3073 = vsel %vm601, %v3056, 0.0
      %3074 = vadd.xlane.f32.xlu0 %v3073
      %v3075 = vpop.xlane.xlu0 %3074
      %v3076 = vsel %vm601, %v3058, 0.0
      %3077 = vadd.xlane.f32.xlu0 %v3076
      %v3078 = vpop.xlane.xlu0 %3077
      %v3079 = vsel %vm601, %v3060, 0.0
      %3080 = vadd.xlane.f32.xlu0 %v3079
      %v3081 = vpop.xlane.xlu0 %3080
      %v3082 = vsel %vm601, %v3062, 0.0
      %3083 = vadd.xlane.f32.xlu0 %v3082
      %v3084 = vpop.xlane.xlu0 %3083
      %v3085 = vsel %vm601, %v3064, 0.0
      %3086 = vadd.xlane.f32.xlu0 %v3085
      %v3087 = vpop.xlane.xlu0 %3086
      %v3088 = vsel %vm601, %v3066, 0.0
      %3089 = vadd.xlane.f32.xlu0 %v3088
      %v3090 = vpop.xlane.xlu0 %3089
      %v3091 = vrcp.pop %v3069
      %v3092 = vrcp.pop %v3072
      %v3093 = vrcp.pop %v3075
      %v3094 = vrcp.pop %v3078
      %v3095 = vrcp.pop %v3081
      %v3096 = vrcp.pop %v3084
      %v3097 = vrcp.pop %v3087
      %v3098 = vrcp.pop %v3090
      %v3099 = vmul.f32 %v3052, %v3091
      %v3100 = vmul.f32 %v3054, %v3092
      %v3101 = vmul.f32 %v3056, %v3093
      %v3102 = vmul.f32 %v3058, %v3094
      %v3103 = vmul.f32 %v3060, %v3095
      %v3104 = vmul.f32 %v3062, %v3096
      %v3105 = vmul.f32 %v3064, %v3097
      %v3106 = vmul.f32 %v3066, %v3098
      %3107 = vrot.lane.b32.xlu0 %v1873, 104
      %v3108 = vpop.permute.xlu0 %3107
      %3109 = vrot.lane.b32.xlu0 %v1874, 104
      %v3110 = vpop.permute.xlu0 %3109
      %3111 = vrot.lane.b32.xlu0 %v1875, 104
      %v3112 = vpop.permute.xlu0 %3111
      %3113 = vrot.lane.b32.xlu0 %v1876, 104
      %v3114 = vpop.permute.xlu0 %3113
      %3115 = vrot.lane.b32.xlu0 %v1877, 104
      %v3116 = vpop.permute.xlu0 %3115
      %3117 = vrot.lane.b32.xlu0 %v1878, 104
      %v3118 = vpop.permute.xlu0 %3117
      %3119 = vrot.lane.b32.xlu0 %v1879, 104
      %v3120 = vpop.permute.xlu0 %3119
      %3121 = vrot.lane.b32.xlu0 %v1880, 104
      %v3122 = vpop.permute.xlu0 %3121
      %v3132 = vsel %vm601, %v3099, 0
      %v3135 = vsel %vm601, %v3100, 0
      %v3138 = vsel %vm601, %v3101, 0
      %v3141 = vsel %vm601, %v3102, 0
      %v3144 = vsel %vm601, %v3103, 0
      %v3147 = vsel %vm601, %v3104, 0
      %v3150 = vsel %vm601, %v3105, 0
      %v3153 = vsel %vm601, %v3106, 0
      %3155 = vmatpush.msra.mxu0 0.0
      %3156 = vmatpush.msra.mxu0 0.0
      %3157 = vmatpush.msra.mxu0 0.0
      %3158 = vmatpush.msra.mxu0 0.0
      %3159 = vmatpush.msra.mxu0 0.0
      %3160 = vmatpush.msra.mxu0 0.0
      %3161 = vmatpush.msra.mxu0 0.0
      %3162 = vmatpush.msra.mxu0 0.0
      %3163 = vmatpush.msra.mxu0 %v3122
      %3164 = vmatpush.msra.mxu0 %v3120
      %3165 = vmatpush.msra.mxu0 %v3118
      %3166 = vmatpush.msra.mxu0 %v3116
      %3167 = vmatpush.msra.mxu0 %v3114
      %3168 = vmatpush.msra.mxu0 %v3112
      %3169 = vmatpush.msra.mxu0 %v3110
      %3170 = vmatpush.msra.mxu0 %v3108
      %3171 = vmatmul.f32.gmra.mxu0 %v3132
      %v3172 = vpop.f32.mrf.mxu0
      %v3173 = vadd.f32 0.0, %v3172
      %3174 = vmatmul.f32.gmra.mxu0 %v3135
      %v3175 = vpop.f32.mrf.mxu0
      %v3176 = vadd.f32 0.0, %v3175
      %3177 = vmatmul.f32.gmra.mxu0 %v3138
      %v3178 = vpop.f32.mrf.mxu0
      %v3179 = vadd.f32 0.0, %v3178
      %3180 = vmatmul.f32.gmra.mxu0 %v3141
      %v3181 = vpop.f32.mrf.mxu0
      %v3182 = vadd.f32 0.0, %v3181
      %3183 = vmatmul.f32.gmra.mxu0 %v3144
      %v3184 = vpop.f32.mrf.mxu0
      %v3185 = vadd.f32 0.0, %v3184
      %3186 = vmatmul.f32.gmra.mxu0 %v3147
      %v3187 = vpop.f32.mrf.mxu0
      %v3188 = vadd.f32 0.0, %v3187
      %3189 = vmatmul.f32.gmra.mxu0 %v3150
      %v3190 = vpop.f32.mrf.mxu0
      %v3191 = vadd.f32 0.0, %v3190
      %3192 = vmatmul.f32.gmra.mxu0 %v3153
      %v3193 = vpop.f32.mrf.mxu0
      %v3194 = vadd.f32 0.0, %v3193
      %3195 = vdwg.mxu0
      %v3196 = vld [vmem:[%s9 + $0x18] sm:$0xff]
      %v3198 = vsel %vm1893, %v3173, 0
      %v3201 = vsel %vm1893, %v3176, 0
      %v3204 = vsel %vm1893, %v3179, 0
      %v3207 = vsel %vm1893, %v3182, 0
      %v3210 = vsel %vm1893, %v3185, 0
      %v3213 = vsel %vm1893, %v3188, 0
      %v3216 = vsel %vm1893, %v3191, 0
      %v3219 = vsel %vm1893, %v3194, 0
      %3221 = vmatpush.msra.mxu0 0.0
      %3222 = vmatpush.msra.mxu0 0.0
      %3223 = vmatpush.msra.mxu0 0.0
      %3224 = vmatpush.msra.mxu0 0.0
      %3225 = vmatpush.msra.mxu0 0.0
      %3226 = vmatpush.msra.mxu0 0.0
      %3227 = vmatpush.msra.mxu0 0.0
      %3228 = vmatpush.msra.mxu0 0.0
      %3229 = vmatpush.msra.mxu0 0.0
      %3230 = vmatpush.msra.mxu0 0.0
      %3231 = vmatpush.msra.mxu0 0.0
      %3232 = vmatpush.msra.mxu0 0.0
      %3233 = vmatpush.msra.mxu0 0.0
      %3234 = vmatpush.msra.mxu0 0.0
      %3235 = vmatpush.msra.mxu0 0.0
      %3236 = vmatpush.msra.mxu0 %v3196
      %3237 = vmatmul.f32.gmra.mxu0 %v3198
      %v3238 = vpop.f32.mrf.mxu0
      %v3239 = vadd.f32 0.0, %v3238
      %3240 = vmatmul.f32.gmra.mxu0 %v3201
      %v3241 = vpop.f32.mrf.mxu0
      %v3242 = vadd.f32 0.0, %v3241
      %3243 = vmatmul.f32.gmra.mxu0 %v3204
      %v3244 = vpop.f32.mrf.mxu0
      %v3245 = vadd.f32 0.0, %v3244
      %3246 = vmatmul.f32.gmra.mxu0 %v3207
      %v3247 = vpop.f32.mrf.mxu0
      %v3248 = vadd.f32 0.0, %v3247
      %3249 = vmatmul.f32.gmra.mxu0 %v3210
      %v3250 = vpop.f32.mrf.mxu0
      %v3251 = vadd.f32 0.0, %v3250
      %3252 = vmatmul.f32.gmra.mxu0 %v3213
      %v3253 = vpop.f32.mrf.mxu0
      %v3254 = vadd.f32 0.0, %v3253
      %3255 = vmatmul.f32.gmra.mxu0 %v3216
      %v3256 = vpop.f32.mrf.mxu0
      %v3257 = vadd.f32 0.0, %v3256
      %3258 = vmatmul.f32.gmra.mxu0 %v3219
      %v3259 = vpop.f32.mrf.mxu0
      %v3260 = vadd.f32 0.0, %v3259
      %3261 = vdwg.mxu0
      %v3262 = vadd.f32 %v2906, %v3239
      %v3263 = vadd.f32 %v2907, %v3242
      %v3264 = vadd.f32 %v2908, %v3245
      %v3265 = vadd.f32 %v2909, %v3248
      %v3266 = vadd.f32 %v2910, %v3251
      %v3267 = vadd.f32 %v2911, %v3254
      %v3268 = vadd.f32 %v2912, %v3257
      %v3269 = vadd.f32 %v2913, %v3260
      %v3270 = vld [vmem:[%s10] sm:$0x1]
      %v3272 = vperm.slane %v3270, 0
      %v3274 = vadd.f32 %v3262, %v3272
      %v3275 = vadd.f32 %v3263, %v3272
      %v3276 = vadd.f32 %v3264, %v3272
      %v3277 = vadd.f32 %v3265, %v3272
      %v3278 = vadd.f32 %v3266, %v3272
      %v3279 = vadd.f32 %v3267, %v3272
      %v3280 = vadd.f32 %v3268, %v3272
      %v3281 = vadd.f32 %v3269, %v3272
      %3282 = vst.msk [vmem:[%s426] sm:$0xff] %vm443, %v3274
      %3283 = vst.msk [vmem:[%s426 + $0x8] sm:$0xff] %vm443, %v3275
      %3284 = vst.msk [vmem:[%s426 + $0x10] sm:$0xff] %vm443, %v3276
      %3285 = vst.msk [vmem:[%s426 + $0x18] sm:$0xff] %vm443, %v3277
      %3286 = vst.msk [vmem:[%s426 + $0x20] sm:$0xff] %vm443, %v3278
      %3287 = vst.msk [vmem:[%s426 + $0x28] sm:$0xff] %vm443, %v3279
      %3288 = vst.msk [vmem:[%s426 + $0x30] sm:$0xff] %vm443, %v3280
      %3289 = vst.msk [vmem:[%s426 + $0x38] sm:$0xff] %vm443, %v3281
      %p3290 = scmp.lt.s32.totalorder %s22, 1
      %s3291 = scalar_select %p3290, %s22, 1
      %s3292 = smul.addr %s3291, 8
      %s3293 = smul.addr %s3292, 8
      %s3294 = scalar_lea.vmem %s11, %s3293
      // Predicated region
      $region65: #{dilated_window_attention.1} parent=63 // pred_check
        %p3295 = pneg %p286
      $region66: #{dilated_window_attention.1} parent=63 // pred_check_branch
        %3297 = sbr.rel (%p3295) target = $region68
      $region67: #{dilated_window_attention.1} parent=63 // pred_region
        _
      $region68: #{dilated_window_attention.1} parent=63 // pred_fallthru
        _
    $region64: #{dilated_window_attention.1} parent=5 // pred_fallthru
      _
    %p3298 = scmp.le.s32.totalorder 2, %s17
    // Predicated region
    $region69: #{dilated_window_attention.1} parent=5 // pred_check
      %p3299 = pneg %p3298
    $region70: #{dilated_window_attention.1} parent=5 // pred_check_branch
      %3301 = sbr.rel (%p3299) target = $region72
    $region71: #{dilated_window_attention.1} parent=5 // pred_region
      %s3302 = ssub.s32 %s17, 2
      // Predicated region
      $region73: #{dilated_window_attention.1} parent=71 // pred_check
        %p3303 = pneg %p292
      $region74: #{dilated_window_attention.1} parent=71 // pred_check_branch
        %3305 = sbr.rel (%p3303) target = $region76
      $region75: #{dilated_window_attention.1} parent=71 // pred_region
        %p3306 = scmp.lt.s32.totalorder %s23, 1
        %s3307 = scalar_select %p3306, %s23, 1
        %s3308 = smul.addr %s3307, 8
        %s3309 = smul.addr %s3308, 8
        %s3310 = scalar_lea.vmem %s11, %s3309
      $region76: #{dilated_window_attention.1} parent=71 // pred_fallthru
        _
    $region72: #{dilated_window_attention.1} parent=5 // pred_fallthru
      _
  $region6: #{dilated_window_attention.1} parent=0 // loop_footer
    %s21 = sadd.s32 1, %s17
  $region7: #{dilated_window_attention.1} parent=0 // loop_footer_branch
    %16 = sbr.rel target = $region3
  $region8: #{dilated_window_attention.1} parent=0 // loop_exit
    _

</llo_original>
